<compile_context>
chip_gen: v7x
topology: tpu7x:2x2x1
jax: 0.10.0
libtpu: 0.0.40
codegen_flags: <defaults>
</compile_context>

<pallas_src>
import functools

import jax
import jax.numpy as jnp
from jax.experimental import pallas as pl
from jax.experimental.pallas import tpu as pltpu

# ----------------------------- module hyperparams ---------------------------
INP, EXP, OUP = 4, 32, 4
K, S = 3, 1
USE_SE, NL = True, "HS"
REDUCTION = 4
BN_EPS = 1e-5
PAD = K // 2
CR = EXP // REDUCTION


def _hswish(y):
    return y * (jnp.clip(y + 3.0, 0.0, 6.0) / 6.0)


def _act(y, act):
    if act == "hswish":
        return _hswish(y)
    if act == "relu":
        return jnp.maximum(y, 0.0)
    return y


# ------------------------------ fused Pallas kernel --------------------------
def _fused_ir_kernel(x_ref, w_exp_ref, b_e_ref, w_dw_ref, b_d_ref,
                     w_se1_ref, b_se1_ref, w_se2_ref, b_se2_ref,
                     w_proj_ref, b_p_ref, o_ref, xp_ref,
                     *, k, act, use_se, use_res):
    """One batch element of the inverted-residual block, fully in VMEM.

    x_ref:  (1, H, W, INP)   input block (also the residual)
    o_ref:  (1, H, W, OUP)   output block
    xp_ref: (H+2p, W+2p, EXP) VMEM scratch for the 'same'-padded expanded act.
    BN scales are pre-folded into w_exp / w_dw / w_proj; only biases remain.
    """
    x = x_ref[0]                                        # (H, W, INP)
    H, W, _ = x.shape

    # ---- expand: 1x1 conv (+folded BN) + activation, as VPU broadcast-FMAs --
    xe = x[:, :, 0:1] * w_exp_ref[0, :]
    for c in range(1, INP):
        xe = xe + x[:, :, c:c + 1] * w_exp_ref[c, :]
    xe = _act(xe + b_e_ref[...], act)                   # (H, W, EXP)

    # ---- depthwise kxk, stride 1, 'same' padding done in VMEM scratch -------
    xp_ref[...] = jnp.zeros_like(xp_ref)
    xp_ref[PAD:PAD + H, PAD:PAD + W, :] = xe
    acc = jnp.zeros((H, W, EXP), jnp.float32)
    for dy in range(k):
        for dx in range(k):
            acc = acc + xp_ref[dy:dy + H, dx:dx + W, :] * w_dw_ref[dy * k + dx, :]
    yd = _act(acc + b_d_ref[...], act)                  # (H, W, EXP)

    # ---- squeeze-and-excite --------------------------------------------------
    if use_se:
        s = jnp.mean(yd, axis=(0, 1)).reshape(1, EXP)
        h1 = jnp.dot(s, w_se1_ref[...], preferred_element_type=jnp.float32)
        h1 = jnp.maximum(h1 + b_se1_ref[...], 0.0)
        g = jnp.dot(h1, w_se2_ref[...], preferred_element_type=jnp.float32)
        g = jnp.clip(g + b_se2_ref[...] + 3.0, 0.0, 6.0) / 6.0   # HSigmoid
        yd = yd * g.reshape(1, 1, EXP)

    # ---- project: 1x1 conv (+folded BN) + residual ---------------------------
    yp = jnp.dot(yd.reshape(H * W, EXP), w_proj_ref[...],
                 preferred_element_type=jnp.float32) + b_p_ref[...]
    out = yp.reshape(H, W, OUP)
    if use_res:
        out = out + x                                   # residual still in VMEM
    o_ref[0] = out.astype(o_ref.dtype)


# ------------------------------- full forward --------------------------------
def inverted_residual_forward(x_nchw, p):
    use_res = (S == 1) and (INP == OUP)
    act = "hswish" if NL == "HS" else "relu"

    x = jnp.transpose(x_nchw, (0, 2, 3, 1)).astype(jnp.float32)   # NHWC
    b, h, w_, _ = x.shape

    # Fold BN scales into conv weights (inference form); reshape biases once.
    w_exp_f = p["w_exp"] * p["scale_e"][None, :]
    w_dw_f = p["w_dw"] * p["scale_d"][None, :]
    w_proj_f = p["w_proj"] * p["scale_p"][None, :]
    b_e = p["bias_e"].reshape(1, EXP)
    b_d = p["bias_d"].reshape(1, EXP)
    b_se1 = p["b_se1"].reshape(1, CR)
    b_se2 = p["b_se2"].reshape(1, EXP)
    b_p = p["bias_p"].reshape(1, OUP)

    flops = (b * h * w_ * 2 * (INP * EXP + K * K * EXP + EXP * OUP)
             + b * 2 * 2 * EXP * CR)
    bytes_accessed = 4 * (x.size + b * h * w_ * OUP
                          + w_exp_f.size + b_e.size + w_dw_f.size + b_d.size
                          + p["w_se1"].size + b_se1.size
                          + p["w_se2"].size + b_se2.size
                          + w_proj_f.size + b_p.size)

    kern = functools.partial(_fused_ir_kernel, k=K, act=act,
                             use_se=USE_SE, use_res=use_res)
    const2d = lambda i: (0, 0)

    out_nhwc = pl.pallas_call(
        kern,
        out_shape=jax.ShapeDtypeStruct((b, h, w_, OUP), jnp.float32),
        grid=(b,),
        in_specs=[
            pl.BlockSpec((1, h, w_, INP), lambda i: (i, 0, 0, 0)),
            pl.BlockSpec((INP, EXP), const2d),
            pl.BlockSpec((1, EXP), const2d),
            pl.BlockSpec((K * K, EXP), const2d),
            pl.BlockSpec((1, EXP), const2d),
            pl.BlockSpec((EXP, CR), const2d),
            pl.BlockSpec((1, CR), const2d),
            pl.BlockSpec((CR, EXP), const2d),
            pl.BlockSpec((1, EXP), const2d),
            pl.BlockSpec((EXP, OUP), const2d),
            pl.BlockSpec((1, OUP), const2d),
        ],
        out_specs=pl.BlockSpec((1, h, w_, OUP), lambda i: (i, 0, 0, 0)),
        scratch_shapes=[pltpu.VMEM((h + 2 * PAD, w_ + 2 * PAD, EXP), jnp.float32)],
        compiler_params=pltpu.CompilerParams(
            dimension_semantics=("parallel",)),
        cost_estimate=pl.CostEstimate(flops=flops, transcendentals=0,
                                      bytes_accessed=bytes_accessed),
    )(x, w_exp_f, b_e, w_dw_f, b_d,
      p["w_se1"], b_se1, p["w_se2"], b_se2, w_proj_f, b_p)

    return jnp.transpose(out_nhwc, (0, 3, 1, 2))                   # back to NCHW


# ------------------------------ pure-JAX reference ---------------------------
def reference_forward(x_nchw, p):
    x = jnp.transpose(x_nchw, (0, 2, 3, 1)).astype(jnp.float32)
    y = jnp.einsum("bhwc,co->bhwo", x, p["w_exp"]) * p["scale_e"] + p["bias_e"]
    y = _hswish(y)
    w_dw = p["w_dw"].reshape(K, K, 1, EXP)  # HWIO, groups=EXP
    y = jax.lax.conv_general_dilated(
        y, w_dw, window_strides=(S, S), padding="SAME",
        dimension_numbers=("NHWC", "HWIO", "NHWC"), feature_group_count=EXP)
    y = _hswish(y * p["scale_d"] + p["bias_d"])
    s = jnp.mean(y, axis=(1, 2))
    hdn = jnp.maximum(s @ p["w_se1"] + p["b_se1"], 0.0)
    g = jnp.clip(hdn @ p["w_se2"] + p["b_se2"] + 3.0, 0.0, 6.0) / 6.0
    y = y * g[:, None, None, :]
    out = jnp.einsum("bhwc,co->bhwo", y, p["w_proj"]) * p["scale_p"] + p["bias_p"]
    out = out + x
    return jnp.transpose(out, (0, 3, 1, 2))


# ------------------------------ param initialization -------------------------
def make_params(key):
    ks = jax.random.split(key, 16)

    def bn_fold(kg, kb, km, kv, c):
        gamma = 1.0 + 0.1 * jax.random.normal(kg, (c,), jnp.float32)
        beta = 0.1 * jax.random.normal(kb, (c,), jnp.float32)
        mean = 0.1 * jax.random.normal(km, (c,), jnp.float32)
        var = 0.5 + jnp.abs(jax.random.normal(kv, (c,), jnp.float32))
        scale = gamma / jnp.sqrt(var + BN_EPS)
        bias = beta - mean * scale
        return scale, bias

    p = {}
    p["w_exp"] = 0.2 * jax.random.normal(ks[0], (INP, EXP), jnp.float32)
    p["scale_e"], p["bias_e"] = bn_fold(ks[1], ks[2], ks[3], ks[4], EXP)

    p["w_dw"] = 0.2 * jax.random.normal(ks[5], (K * K, EXP), jnp.float32)
    p["scale_d"], p["bias_d"] = bn_fold(ks[6], ks[7], ks[8], ks[9], EXP)

    p["w_se1"] = 0.2 * jax.random.normal(ks[10], (EXP, CR), jnp.float32)
    p["b_se1"] = 0.05 * jax.random.normal(ks[11], (CR,), jnp.float32)
    p["w_se2"] = 0.2 * jax.random.normal(ks[12], (CR, EXP), jnp.float32)
    p["b_se2"] = 0.05 * jax.random.normal(ks[13], (EXP,), jnp.float32)

    p["w_proj"] = 0.2 * jax.random.normal(ks[14], (EXP, OUP), jnp.float32)
    kp = jax.random.split(ks[15], 4)
    p["scale_p"], p["bias_p"] = bn_fold(kp[0], kp[1], kp[2], kp[3], OUP)
    return p


# ------------------------------------ main ------------------------------------
if __name__ == "__main__":
    key = jax.random.PRNGKey(0)
    k_x, k_p = jax.random.split(key)
    x = jax.random.normal(k_x, (2, INP, 16, 16), jnp.float32)   # NCHW like PyTorch
    params = make_params(k_p)

    fwd = jax.jit(inverted_residual_forward)
    out = jax.block_until_ready(fwd(x, params))
    ref = jax.block_until_ready(reference_forward(x, params))

    assert out.shape == (2, OUP, 16, 16), out.shape
    max_err = float(jnp.max(jnp.abs(out - ref)))
    assert jnp.allclose(out, ref, atol=1e-3, rtol=1e-3), max_err
    print("KERNEL_OK")
</pallas_src>

<mosaic_0001>
module attributes {stable_mosaic.version = 11 : i64} {
  func.func @_fused_ir_kernel(%arg0: i32, %arg1: memref<1x16x16x4xf32, #tpu.memory_space<vmem>>, %arg2: memref<4x32xf32, #tpu.memory_space<vmem>>, %arg3: memref<1x32xf32, #tpu.memory_space<vmem>>, %arg4: memref<9x32xf32, #tpu.memory_space<vmem>>, %arg5: memref<1x32xf32, #tpu.memory_space<vmem>>, %arg6: memref<32x8xf32, #tpu.memory_space<vmem>>, %arg7: memref<1x8xf32, #tpu.memory_space<vmem>>, %arg8: memref<8x32xf32, #tpu.memory_space<vmem>>, %arg9: memref<1x32xf32, #tpu.memory_space<vmem>>, %arg10: memref<32x4xf32, #tpu.memory_space<vmem>>, %arg11: memref<1x4xf32, #tpu.memory_space<vmem>>, %arg12: memref<1x16x16x4xf32, #tpu.memory_space<vmem>>, %arg13: memref<18x18x32xf32, #tpu.memory_space<vmem>>) attributes {dimension_semantics = [#tpu.dimension_semantics<parallel>], iteration_bounds = array<i64: 2>, scalar_prefetch = 0 : i64, scratch_operands = 1 : i64, tpu.core_type = #tpu.core_type<tc>, window_params = [{transform_indices = @transform_0, window_bounds = array<i64: 1, 16, 16, 4>}, {pipeline_mode = #tpu.pipeline_mode<synchronous>, transform_indices = @transform_1, window_bounds = array<i64: 4, 32>}, {pipeline_mode = #tpu.pipeline_mode<synchronous>, transform_indices = @transform_2, window_bounds = array<i64: 1, 32>}, {pipeline_mode = #tpu.pipeline_mode<synchronous>, transform_indices = @transform_3, window_bounds = array<i64: 9, 32>}, {pipeline_mode = #tpu.pipeline_mode<synchronous>, transform_indices = @transform_4, window_bounds = array<i64: 1, 32>}, {pipeline_mode = #tpu.pipeline_mode<synchronous>, transform_indices = @transform_5, window_bounds = array<i64: 32, 8>}, {pipeline_mode = #tpu.pipeline_mode<synchronous>, transform_indices = @transform_6, window_bounds = array<i64: 1, 8>}, {pipeline_mode = #tpu.pipeline_mode<synchronous>, transform_indices = @transform_7, window_bounds = array<i64: 8, 32>}, {pipeline_mode = #tpu.pipeline_mode<synchronous>, transform_indices = @transform_8, window_bounds = array<i64: 1, 32>}, {pipeline_mode = #tpu.pipeline_mode<synchronous>, transform_indices = @transform_9, window_bounds = array<i64: 32, 4>}, {pipeline_mode = #tpu.pipeline_mode<synchronous>, transform_indices = @transform_10, window_bounds = array<i64: 1, 4>}, {transform_indices = @transform_11, window_bounds = array<i64: 1, 16, 16, 4>}]} {
    %c0 = arith.constant 0 : index
    %c0_0 = arith.constant 0 : index
    %c0_1 = arith.constant 0 : index
    %c0_2 = arith.constant 0 : index
    %0 = vector.load %arg1[%c0, %c0_0, %c0_1, %c0_2] : memref<1x16x16x4xf32, #tpu.memory_space<vmem>>, vector<1x16x16x4xf32>
    %1 = vector.shape_cast %0 : vector<1x16x16x4xf32> to vector<16x16x4xf32>
    %2 = vector.extract_strided_slice %1 {offsets = [0, 0, 0], sizes = [16, 16, 1], strides = [1, 1, 1]} : vector<16x16x4xf32> to vector<16x16x1xf32>
    %c0_3 = arith.constant 0 : index
    %c0_4 = arith.constant 0 : index
    %3 = vector.load %arg2[%c0_3, %c0_4] : memref<4x32xf32, #tpu.memory_space<vmem>>, vector<1x32xf32>
    %4 = vector.shape_cast %3 : vector<1x32xf32> to vector<32xf32>
    %5 = vector.shape_cast %4 : vector<32xf32> to vector<1x1x32xf32>
    %6 = vector.broadcast %2 : vector<16x16x1xf32> to vector<16x16x32xf32>
    %7 = vector.broadcast %5 : vector<1x1x32xf32> to vector<16x16x32xf32>
    %8 = arith.mulf %6, %7 : vector<16x16x32xf32>
    %9 = vector.extract_strided_slice %1 {offsets = [0, 0, 1], sizes = [16, 16, 1], strides = [1, 1, 1]} : vector<16x16x4xf32> to vector<16x16x1xf32>
    %c1 = arith.constant 1 : index
    %c0_5 = arith.constant 0 : index
    %10 = vector.load %arg2[%c1, %c0_5] : memref<4x32xf32, #tpu.memory_space<vmem>>, vector<1x32xf32>
    %11 = vector.shape_cast %10 : vector<1x32xf32> to vector<32xf32>
    %12 = vector.shape_cast %11 : vector<32xf32> to vector<1x1x32xf32>
    %13 = vector.broadcast %9 : vector<16x16x1xf32> to vector<16x16x32xf32>
    %14 = vector.broadcast %12 : vector<1x1x32xf32> to vector<16x16x32xf32>
    %15 = arith.mulf %13, %14 : vector<16x16x32xf32>
    %16 = arith.addf %8, %15 : vector<16x16x32xf32>
    %17 = vector.extract_strided_slice %1 {offsets = [0, 0, 2], sizes = [16, 16, 1], strides = [1, 1, 1]} : vector<16x16x4xf32> to vector<16x16x1xf32>
    %c2 = arith.constant 2 : index
    %c0_6 = arith.constant 0 : index
    %18 = vector.load %arg2[%c2, %c0_6] : memref<4x32xf32, #tpu.memory_space<vmem>>, vector<1x32xf32>
    %19 = vector.shape_cast %18 : vector<1x32xf32> to vector<32xf32>
    %20 = vector.shape_cast %19 : vector<32xf32> to vector<1x1x32xf32>
    %21 = vector.broadcast %17 : vector<16x16x1xf32> to vector<16x16x32xf32>
    %22 = vector.broadcast %20 : vector<1x1x32xf32> to vector<16x16x32xf32>
    %23 = arith.mulf %21, %22 : vector<16x16x32xf32>
    %24 = arith.addf %16, %23 : vector<16x16x32xf32>
    %25 = vector.extract_strided_slice %1 {offsets = [0, 0, 3], sizes = [16, 16, 1], strides = [1, 1, 1]} : vector<16x16x4xf32> to vector<16x16x1xf32>
    %c3 = arith.constant 3 : index
    %c0_7 = arith.constant 0 : index
    %26 = vector.load %arg2[%c3, %c0_7] : memref<4x32xf32, #tpu.memory_space<vmem>>, vector<1x32xf32>
    %27 = vector.shape_cast %26 : vector<1x32xf32> to vector<32xf32>
    %28 = vector.shape_cast %27 : vector<32xf32> to vector<1x1x32xf32>
    %29 = vector.broadcast %25 : vector<16x16x1xf32> to vector<16x16x32xf32>
    %30 = vector.broadcast %28 : vector<1x1x32xf32> to vector<16x16x32xf32>
    %31 = arith.mulf %29, %30 : vector<16x16x32xf32>
    %32 = arith.addf %24, %31 : vector<16x16x32xf32>
    %c0_8 = arith.constant 0 : index
    %c0_9 = arith.constant 0 : index
    %33 = vector.load %arg3[%c0_8, %c0_9] : memref<1x32xf32, #tpu.memory_space<vmem>>, vector<1x32xf32>
    %34 = vector.shape_cast %33 : vector<1x32xf32> to vector<1x1x32xf32>
    %35 = vector.broadcast %34 : vector<1x1x32xf32> to vector<16x16x32xf32>
    %36 = arith.addf %32, %35 : vector<16x16x32xf32>
    %cst = arith.constant 3.000000e+00 : f32
    %37 = vector.broadcast %cst : f32 to vector<16x16x32xf32>
    %38 = arith.addf %36, %37 : vector<16x16x32xf32>
    %cst_10 = arith.constant 0.000000e+00 : f32
    %cst_11 = arith.constant 6.000000e+00 : f32
    %39 = vector.broadcast %cst_10 : f32 to vector<16x16x32xf32>
    %40 = arith.maximumf %39, %38 : vector<16x16x32xf32>
    %41 = vector.broadcast %cst_11 : f32 to vector<16x16x32xf32>
    %42 = arith.minimumf %41, %40 : vector<16x16x32xf32>
    %cst_12 = arith.constant 6.000000e+00 : f32
    %43 = vector.broadcast %cst_12 : f32 to vector<16x16x32xf32>
    %44 = arith.divf %42, %43 : vector<16x16x32xf32>
    %45 = arith.mulf %36, %44 : vector<16x16x32xf32>
    %cst_13 = arith.constant 0.000000e+00 : f32
    %46 = vector.broadcast %cst_13 : f32 to vector<18x18x32xf32>
    %c0_14 = arith.constant 0 : index
    %c0_15 = arith.constant 0 : index
    %c0_16 = arith.constant 0 : index
    %47 = vector.load %arg13[%c0_14, %c0_15, %c0_16] : memref<18x18x32xf32, #tpu.memory_space<vmem>>, vector<18x18x32xf32>
    tpu.vector_store %arg13[%c0_14, %c0_15, %c0_16], %46 {strides = array<i32>} : memref<18x18x32xf32, #tpu.memory_space<vmem>>, vector<18x18x32xf32>,
    %c1_17 = arith.constant 1 : index
    %c1_18 = arith.constant 1 : index
    %c0_19 = arith.constant 0 : index
    %48 = vector.load %arg13[%c1_17, %c1_18, %c0_19] : memref<18x18x32xf32, #tpu.memory_space<vmem>>, vector<16x16x32xf32>
    tpu.vector_store %arg13[%c1_17, %c1_18, %c0_19], %45 {strides = array<i32>} : memref<18x18x32xf32, #tpu.memory_space<vmem>>, vector<16x16x32xf32>,
    %cst_20 = arith.constant 0.000000e+00 : f32
    %49 = vector.broadcast %cst_20 : f32 to vector<16x16x32xf32>
    %c0_21 = arith.constant 0 : index
    %c0_22 = arith.constant 0 : index
    %c0_23 = arith.constant 0 : index
    %50 = vector.load %arg13[%c0_21, %c0_22, %c0_23] : memref<18x18x32xf32, #tpu.memory_space<vmem>>, vector<16x16x32xf32>
    %c0_24 = arith.constant 0 : index
    %c0_25 = arith.constant 0 : index
    %51 = vector.load %arg4[%c0_24, %c0_25] : memref<9x32xf32, #tpu.memory_space<vmem>>, vector<1x32xf32>
    %52 = vector.shape_cast %51 : vector<1x32xf32> to vector<32xf32>
    %53 = vector.shape_cast %52 : vector<32xf32> to vector<1x1x32xf32>
    %54 = vector.broadcast %53 : vector<1x1x32xf32> to vector<16x16x32xf32>
    %55 = arith.mulf %50, %54 : vector<16x16x32xf32>
    %56 = arith.addf %49, %55 : vector<16x16x32xf32>
    %c0_26 = arith.constant 0 : index
    %c1_27 = arith.constant 1 : index
    %c0_28 = arith.constant 0 : index
    %57 = vector.load %arg13[%c0_26, %c1_27, %c0_28] : memref<18x18x32xf32, #tpu.memory_space<vmem>>, vector<16x16x32xf32>
    %c1_29 = arith.constant 1 : index
    %c0_30 = arith.constant 0 : index
    %58 = vector.load %arg4[%c1_29, %c0_30] : memref<9x32xf32, #tpu.memory_space<vmem>>, vector<1x32xf32>
    %59 = vector.shape_cast %58 : vector<1x32xf32> to vector<32xf32>
    %60 = vector.shape_cast %59 : vector<32xf32> to vector<1x1x32xf32>
    %61 = vector.broadcast %60 : vector<1x1x32xf32> to vector<16x16x32xf32>
    %62 = arith.mulf %57, %61 : vector<16x16x32xf32>
    %63 = arith.addf %56, %62 : vector<16x16x32xf32>
    %c0_31 = arith.constant 0 : index
    %c2_32 = arith.constant 2 : index
    %c0_33 = arith.constant 0 : index
    %64 = vector.load %arg13[%c0_31, %c2_32, %c0_33] : memref<18x18x32xf32, #tpu.memory_space<vmem>>, vector<16x16x32xf32>
    %c2_34 = arith.constant 2 : index
    %c0_35 = arith.constant 0 : index
    %65 = vector.load %arg4[%c2_34, %c0_35] : memref<9x32xf32, #tpu.memory_space<vmem>>, vector<1x32xf32>
    %66 = vector.shape_cast %65 : vector<1x32xf32> to vector<32xf32>
    %67 = vector.shape_cast %66 : vector<32xf32> to vector<1x1x32xf32>
    %68 = vector.broadcast %67 : vector<1x1x32xf32> to vector<16x16x32xf32>
    %69 = arith.mulf %64, %68 : vector<16x16x32xf32>
    %70 = arith.addf %63, %69 : vector<16x16x32xf32>
    %c1_36 = arith.constant 1 : index
    %c0_37 = arith.constant 0 : index
    %c0_38 = arith.constant 0 : index
    %71 = vector.load %arg13[%c1_36, %c0_37, %c0_38] : memref<18x18x32xf32, #tpu.memory_space<vmem>>, vector<16x16x32xf32>
    %c3_39 = arith.constant 3 : index
    %c0_40 = arith.constant 0 : index
    %72 = vector.load %arg4[%c3_39, %c0_40] : memref<9x32xf32, #tpu.memory_space<vmem>>, vector<1x32xf32>
    %73 = vector.shape_cast %72 : vector<1x32xf32> to vector<32xf32>
    %74 = vector.shape_cast %73 : vector<32xf32> to vector<1x1x32xf32>
    %75 = vector.broadcast %74 : vector<1x1x32xf32> to vector<16x16x32xf32>
    %76 = arith.mulf %71, %75 : vector<16x16x32xf32>
    %77 = arith.addf %70, %76 : vector<16x16x32xf32>
    %c1_41 = arith.constant 1 : index
    %c1_42 = arith.constant 1 : index
    %c0_43 = arith.constant 0 : index
    %78 = vector.load %arg13[%c1_41, %c1_42, %c0_43] : memref<18x18x32xf32, #tpu.memory_space<vmem>>, vector<16x16x32xf32>
    %c4 = arith.constant 4 : index
    %c0_44 = arith.constant 0 : index
    %79 = vector.load %arg4[%c4, %c0_44] : memref<9x32xf32, #tpu.memory_space<vmem>>, vector<1x32xf32>
    %80 = vector.shape_cast %79 : vector<1x32xf32> to vector<32xf32>
    %81 = vector.shape_cast %80 : vector<32xf32> to vector<1x1x32xf32>
    %82 = vector.broadcast %81 : vector<1x1x32xf32> to vector<16x16x32xf32>
    %83 = arith.mulf %78, %82 : vector<16x16x32xf32>
    %84 = arith.addf %77, %83 : vector<16x16x32xf32>
    %c1_45 = arith.constant 1 : index
    %c2_46 = arith.constant 2 : index
    %c0_47 = arith.constant 0 : index
    %85 = vector.load %arg13[%c1_45, %c2_46, %c0_47] : memref<18x18x32xf32, #tpu.memory_space<vmem>>, vector<16x16x32xf32>
    %c5 = arith.constant 5 : index
    %c0_48 = arith.constant 0 : index
    %86 = vector.load %arg4[%c5, %c0_48] : memref<9x32xf32, #tpu.memory_space<vmem>>, vector<1x32xf32>
    %87 = vector.shape_cast %86 : vector<1x32xf32> to vector<32xf32>
    %88 = vector.shape_cast %87 : vector<32xf32> to vector<1x1x32xf32>
    %89 = vector.broadcast %88 : vector<1x1x32xf32> to vector<16x16x32xf32>
    %90 = arith.mulf %85, %89 : vector<16x16x32xf32>
    %91 = arith.addf %84, %90 : vector<16x16x32xf32>
    %c2_49 = arith.constant 2 : index
    %c0_50 = arith.constant 0 : index
    %c0_51 = arith.constant 0 : index
    %92 = vector.load %arg13[%c2_49, %c0_50, %c0_51] : memref<18x18x32xf32, #tpu.memory_space<vmem>>, vector<16x16x32xf32>
    %c6 = arith.constant 6 : index
    %c0_52 = arith.constant 0 : index
    %93 = vector.load %arg4[%c6, %c0_52] : memref<9x32xf32, #tpu.memory_space<vmem>>, vector<1x32xf32>
    %94 = vector.shape_cast %93 : vector<1x32xf32> to vector<32xf32>
    %95 = vector.shape_cast %94 : vector<32xf32> to vector<1x1x32xf32>
    %96 = vector.broadcast %95 : vector<1x1x32xf32> to vector<16x16x32xf32>
    %97 = arith.mulf %92, %96 : vector<16x16x32xf32>
    %98 = arith.addf %91, %97 : vector<16x16x32xf32>
    %c2_53 = arith.constant 2 : index
    %c1_54 = arith.constant 1 : index
    %c0_55 = arith.constant 0 : index
    %99 = vector.load %arg13[%c2_53, %c1_54, %c0_55] : memref<18x18x32xf32, #tpu.memory_space<vmem>>, vector<16x16x32xf32>
    %c7 = arith.constant 7 : index
    %c0_56 = arith.constant 0 : index
    %100 = vector.load %arg4[%c7, %c0_56] : memref<9x32xf32, #tpu.memory_space<vmem>>, vector<1x32xf32>
    %101 = vector.shape_cast %100 : vector<1x32xf32> to vector<32xf32>
    %102 = vector.shape_cast %101 : vector<32xf32> to vector<1x1x32xf32>
    %103 = vector.broadcast %102 : vector<1x1x32xf32> to vector<16x16x32xf32>
    %104 = arith.mulf %99, %103 : vector<16x16x32xf32>
    %105 = arith.addf %98, %104 : vector<16x16x32xf32>
    %c2_57 = arith.constant 2 : index
    %c2_58 = arith.constant 2 : index
    %c0_59 = arith.constant 0 : index
    %106 = vector.load %arg13[%c2_57, %c2_58, %c0_59] : memref<18x18x32xf32, #tpu.memory_space<vmem>>, vector<16x16x32xf32>
    %c8 = arith.constant 8 : index
    %c0_60 = arith.constant 0 : index
    %107 = vector.load %arg4[%c8, %c0_60] : memref<9x32xf32, #tpu.memory_space<vmem>>, vector<1x32xf32>
    %108 = vector.shape_cast %107 : vector<1x32xf32> to vector<32xf32>
    %109 = vector.shape_cast %108 : vector<32xf32> to vector<1x1x32xf32>
    %110 = vector.broadcast %109 : vector<1x1x32xf32> to vector<16x16x32xf32>
    %111 = arith.mulf %106, %110 : vector<16x16x32xf32>
    %112 = arith.addf %105, %111 : vector<16x16x32xf32>
    %c0_61 = arith.constant 0 : index
    %c0_62 = arith.constant 0 : index
    %113 = vector.load %arg5[%c0_61, %c0_62] : memref<1x32xf32, #tpu.memory_space<vmem>>, vector<1x32xf32>
    %114 = vector.shape_cast %113 : vector<1x32xf32> to vector<1x1x32xf32>
    %115 = vector.broadcast %114 : vector<1x1x32xf32> to vector<16x16x32xf32>
    %116 = arith.addf %112, %115 : vector<16x16x32xf32>
    %cst_63 = arith.constant 3.000000e+00 : f32
    %117 = vector.broadcast %cst_63 : f32 to vector<16x16x32xf32>
    %118 = arith.addf %116, %117 : vector<16x16x32xf32>
    %cst_64 = arith.constant 0.000000e+00 : f32
    %cst_65 = arith.constant 6.000000e+00 : f32
    %119 = vector.broadcast %cst_64 : f32 to vector<16x16x32xf32>
    %120 = arith.maximumf %119, %118 : vector<16x16x32xf32>
    %121 = vector.broadcast %cst_65 : f32 to vector<16x16x32xf32>
    %122 = arith.minimumf %121, %120 : vector<16x16x32xf32>
    %cst_66 = arith.constant 6.000000e+00 : f32
    %123 = vector.broadcast %cst_66 : f32 to vector<16x16x32xf32>
    %124 = arith.divf %122, %123 : vector<16x16x32xf32>
    %125 = arith.mulf %116, %124 : vector<16x16x32xf32>
    %cst_67 = arith.constant dense<0.000000e+00> : vector<32xf32>
    %126 = vector.multi_reduction <add>, %125, %cst_67 [0, 1] : vector<16x16x32xf32> to vector<32xf32>
    %cst_68 = arith.constant 2.560000e+02 : f32
    %127 = vector.broadcast %cst_68 : f32 to vector<32xf32>
    %128 = arith.divf %126, %127 : vector<32xf32>
    %129 = vector.shape_cast %128 : vector<32xf32> to vector<1x32xf32>
    %c0_69 = arith.constant 0 : index
    %c0_70 = arith.constant 0 : index
    %130 = vector.load %arg6[%c0_69, %c0_70] : memref<32x8xf32, #tpu.memory_space<vmem>>, vector<32x8xf32>
    %cst_71 = arith.constant dense<0.000000e+00> : vector<1x8xf32>
    %131 = tpu.matmul %129, %130, %cst_71 {dimension_numbers = #tpu.dot_dimension_numbers<[1], [0], [0], [1], [0, 0, 1, 1], [], []>} : vector<1x32xf32>, vector<32x8xf32>, vector<1x8xf32> -> vector<1x8xf32>
    %c0_72 = arith.constant 0 : index
    %c0_73 = arith.constant 0 : index
    %132 = vector.load %arg7[%c0_72, %c0_73] : memref<1x8xf32, #tpu.memory_space<vmem>>, vector<1x8xf32>
    %133 = arith.addf %131, %132 : vector<1x8xf32>
    %cst_74 = arith.constant 0.000000e+00 : f32
    %134 = vector.broadcast %cst_74 : f32 to vector<1x8xf32>
    %135 = arith.maximumf %133, %134 : vector<1x8xf32>
    %c0_75 = arith.constant 0 : index
    %c0_76 = arith.constant 0 : index
    %136 = vector.load %arg8[%c0_75, %c0_76] : memref<8x32xf32, #tpu.memory_space<vmem>>, vector<8x32xf32>
    %cst_77 = arith.constant dense<0.000000e+00> : vector<1x32xf32>
    %137 = tpu.matmul %135, %136, %cst_77 {dimension_numbers = #tpu.dot_dimension_numbers<[1], [0], [0], [1], [0, 0, 1, 1], [], []>} : vector<1x8xf32>, vector<8x32xf32>, vector<1x32xf32> -> vector<1x32xf32>
    %c0_78 = arith.constant 0 : index
    %c0_79 = arith.constant 0 : index
    %138 = vector.load %arg9[%c0_78, %c0_79] : memref<1x32xf32, #tpu.memory_space<vmem>>, vector<1x32xf32>
    %139 = arith.addf %137, %138 : vector<1x32xf32>
    %cst_80 = arith.constant 3.000000e+00 : f32
    %140 = vector.broadcast %cst_80 : f32 to vector<1x32xf32>
    %141 = arith.addf %139, %140 : vector<1x32xf32>
    %cst_81 = arith.constant 0.000000e+00 : f32
    %cst_82 = arith.constant 6.000000e+00 : f32
    %142 = vector.broadcast %cst_81 : f32 to vector<1x32xf32>
    %143 = arith.maximumf %142, %141 : vector<1x32xf32>
    %144 = vector.broadcast %cst_82 : f32 to vector<1x32xf32>
    %145 = arith.minimumf %144, %143 : vector<1x32xf32>
    %cst_83 = arith.constant 6.000000e+00 : f32
    %146 = vector.broadcast %cst_83 : f32 to vector<1x32xf32>
    %147 = arith.divf %145, %146 : vector<1x32xf32>
    %148 = vector.shape_cast %147 : vector<1x32xf32> to vector<1x1x32xf32>
    %149 = vector.broadcast %148 : vector<1x1x32xf32> to vector<16x16x32xf32>
    %150 = arith.mulf %125, %149 : vector<16x16x32xf32>
    %151 = vector.shape_cast %150 : vector<16x16x32xf32> to vector<256x32xf32>
    %c0_84 = arith.constant 0 : index
    %c0_85 = arith.constant 0 : index
    %152 = vector.load %arg10[%c0_84, %c0_85] : memref<32x4xf32, #tpu.memory_space<vmem>>, vector<32x4xf32>
    %cst_86 = arith.constant dense<0.000000e+00> : vector<256x4xf32>
    %153 = tpu.matmul %151, %152, %cst_86 {dimension_numbers = #tpu.dot_dimension_numbers<[1], [0], [0], [1], [0, 0, 1, 1], [], []>} : vector<256x32xf32>, vector<32x4xf32>, vector<256x4xf32> -> vector<256x4xf32>
    %c0_87 = arith.constant 0 : index
    %c0_88 = arith.constant 0 : index
    %154 = vector.load %arg11[%c0_87, %c0_88] : memref<1x4xf32, #tpu.memory_space<vmem>>, vector<1x4xf32>
    %155 = vector.broadcast %154 : vector<1x4xf32> to vector<256x4xf32>
    %156 = arith.addf %153, %155 : vector<256x4xf32>
    %157 = vector.shape_cast %156 : vector<256x4xf32> to vector<16x16x4xf32>
    %158 = arith.addf %157, %1 : vector<16x16x4xf32>
    %c0_89 = arith.constant 0 : index
    %c0_90 = arith.constant 0 : index
    %c0_91 = arith.constant 0 : index
    %c0_92 = arith.constant 0 : index
    %159 = vector.load %arg12[%c0_89, %c0_90, %c0_91, %c0_92] : memref<1x16x16x4xf32, #tpu.memory_space<vmem>>, vector<1x16x16x4xf32>
    %160 = vector.shape_cast %159 : vector<1x16x16x4xf32> to vector<16x16x4xf32>
    %161 = vector.shape_cast %158 : vector<16x16x4xf32> to vector<1x16x16x4xf32>
    tpu.vector_store %arg12[%c0_89, %c0_90, %c0_91, %c0_92], %161 {strides = array<i32>} : memref<1x16x16x4xf32, #tpu.memory_space<vmem>>, vector<1x16x16x4xf32>,
    return
  }
  func.func @transform_0(%arg0: i32) -> (i32, i32, i32, i32) {
    %c0_i32 = arith.constant 0 : i32
    %c0_i32_0 = arith.constant 0 : i32
    %c0_i32_1 = arith.constant 0 : i32
    %c0_i32_2 = arith.constant 0 : i32
    return %arg0, %c0_i32, %c0_i32_0, %c0_i32_1 : i32, i32, i32, i32
  }
  func.func @transform_1(%arg0: i32) -> (i32, i32) {
    %c0_i32 = arith.constant 0 : i32
    %c0_i32_0 = arith.constant 0 : i32
    %c0_i32_1 = arith.constant 0 : i32
    return %c0_i32, %c0_i32_0 : i32, i32
  }
  func.func @transform_2(%arg0: i32) -> (i32, i32) {
    %c0_i32 = arith.constant 0 : i32
    %c0_i32_0 = arith.constant 0 : i32
    %c0_i32_1 = arith.constant 0 : i32
    return %c0_i32, %c0_i32_0 : i32, i32
  }
  func.func @transform_3(%arg0: i32) -> (i32, i32) {
    %c0_i32 = arith.constant 0 : i32
    %c0_i32_0 = arith.constant 0 : i32
    %c0_i32_1 = arith.constant 0 : i32
    return %c0_i32, %c0_i32_0 : i32, i32
  }
  func.func @transform_4(%arg0: i32) -> (i32, i32) {
    %c0_i32 = arith.constant 0 : i32
    %c0_i32_0 = arith.constant 0 : i32
    %c0_i32_1 = arith.constant 0 : i32
    return %c0_i32, %c0_i32_0 : i32, i32
  }
  func.func @transform_5(%arg0: i32) -> (i32, i32) {
    %c0_i32 = arith.constant 0 : i32
    %c0_i32_0 = arith.constant 0 : i32
    %c0_i32_1 = arith.constant 0 : i32
    return %c0_i32, %c0_i32_0 : i32, i32
  }
  func.func @transform_6(%arg0: i32) -> (i32, i32) {
    %c0_i32 = arith.constant 0 : i32
    %c0_i32_0 = arith.constant 0 : i32
    %c0_i32_1 = arith.constant 0 : i32
    return %c0_i32, %c0_i32_0 : i32, i32
  }
  func.func @transform_7(%arg0: i32) -> (i32, i32) {
    %c0_i32 = arith.constant 0 : i32
    %c0_i32_0 = arith.constant 0 : i32
    %c0_i32_1 = arith.constant 0 : i32
    return %c0_i32, %c0_i32_0 : i32, i32
  }
  func.func @transform_8(%arg0: i32) -> (i32, i32) {
    %c0_i32 = arith.constant 0 : i32
    %c0_i32_0 = arith.constant 0 : i32
    %c0_i32_1 = arith.constant 0 : i32
    return %c0_i32, %c0_i32_0 : i32, i32
  }
  func.func @transform_9(%arg0: i32) -> (i32, i32) {
    %c0_i32 = arith.constant 0 : i32
    %c0_i32_0 = arith.constant 0 : i32
    %c0_i32_1 = arith.constant 0 : i32
    return %c0_i32, %c0_i32_0 : i32, i32
  }
  func.func @transform_10(%arg0: i32) -> (i32, i32) {
    %c0_i32 = arith.constant 0 : i32
    %c0_i32_0 = arith.constant 0 : i32
    %c0_i32_1 = arith.constant 0 : i32
    return %c0_i32, %c0_i32_0 : i32, i32
  }
  func.func @transform_11(%arg0: i32) -> (i32, i32, i32, i32) {
    %c0_i32 = arith.constant 0 : i32
    %c0_i32_0 = arith.constant 0 : i32
    %c0_i32_1 = arith.constant 0 : i32
    %c0_i32_2 = arith.constant 0 : i32
    return %arg0, %c0_i32, %c0_i32_0, %c0_i32_1 : i32, i32, i32, i32
  }
}

</mosaic_0001>

<llo_original>
// kernel: inverted_residual_forward.1
$region0: #{inverted_residual_forward.1}
  #allocation0 [shape = 'u32[]', space=smem, size = 0x4, offset = 0x4, fixed_abs, tag = 'smem constant byte address 0x4 - core index']
  #allocation1 [shape = 'u32[144,128]{1,0:T(1,128)}', space=vmem, size = 0x12000, scoped, tag = 'internal scratch']
  #allocation2 [shape = 'f32[18,18,32]{2,1,0:T(8,128)}', space=vmem, size = 0x36000, scoped, tag = 'scratch operand']
  %s0 = inlined_call_operand.vmem [shape: f32[2,16,16,4], index: 0, kind: input, shape index: {}]
  %s1 = inlined_call_operand.vmem [shape: f32[4,32], index: 1, kind: input, shape index: {}]
  %s2 = inlined_call_operand.vmem [shape: f32[1,32], index: 2, kind: input, shape index: {}]
  %s3 = inlined_call_operand.vmem [shape: f32[9,32], index: 3, kind: input, shape index: {}]
  %s4 = inlined_call_operand.vmem [shape: f32[1,32], index: 4, kind: input, shape index: {}]
  %s5 = inlined_call_operand.vmem [shape: f32[32,8], index: 5, kind: input, shape index: {}]
  %s6 = inlined_call_operand.vmem [shape: f32[1,8], index: 6, kind: input, shape index: {}]
  %s7 = inlined_call_operand.vmem [shape: f32[8,32], index: 7, kind: input, shape index: {}]
  %s8 = inlined_call_operand.vmem [shape: f32[1,32], index: 8, kind: input, shape index: {}]
  %s9 = inlined_call_operand.vmem [shape: f32[32,4], index: 9, kind: input, shape index: {}]
  %s10 = inlined_call_operand.vmem [shape: f32[1,4], index: 10, kind: input, shape index: {}]
  %s11 = inlined_call_operand.vmem [shape: f32[2,16,16,4], index: 11, kind: output, shape index: {}]
  %s12 = sld [smem:[#allocation0]]
  $region77: #{inverted_residual_forward.1} parent=0
    _
  %s14 = ssub.s32 1, %s12
  %s15 = scalar_select 0, %s14, %s12
  loop: start=0, step=1, limit=4
  $region2: #{inverted_residual_forward.1} parent=0 // loop_pre_header
    _
  $region3: #{inverted_residual_forward.1} parent=0 // loop_header
    %s17 = sphi 0, %s21
    %p18 = scmp.ge.s32.totalorder %s17, 4
    %s27 = sphi 0, %s29
    %s30 = sphi 0, %s27
    %s31 = sphi 0, %s30
    %s47 = sphi 0, %s31
    %s51 = sphi 0, %s51
    %s53 = sphi 0, %s51
    %s54 = sphi 0, %s53
    %s68 = sphi 0, %s54
    %s72 = sphi 0, %s72
    %s74 = sphi 0, %s72
    %s75 = sphi 0, %s74
    %s89 = sphi 0, %s75
    %s93 = sphi 0, %s93
    %s95 = sphi 0, %s93
    %s96 = sphi 0, %s95
    %s110 = sphi 0, %s96
    %s114 = sphi 0, %s114
    %s116 = sphi 0, %s114
    %s117 = sphi 0, %s116
    %s131 = sphi 0, %s117
    %s135 = sphi 0, %s135
    %s137 = sphi 0, %s135
    %s138 = sphi 0, %s137
    %s152 = sphi 0, %s138
    %s156 = sphi 0, %s156
    %s158 = sphi 0, %s156
    %s159 = sphi 0, %s158
    %s173 = sphi 0, %s159
    %s177 = sphi 0, %s177
    %s179 = sphi 0, %s177
    %s180 = sphi 0, %s179
    %s194 = sphi 0, %s180
    %s198 = sphi 0, %s198
    %s200 = sphi 0, %s198
    %s201 = sphi 0, %s200
    %s215 = sphi 0, %s201
    %s219 = sphi 0, %s219
    %s221 = sphi 0, %s219
    %s222 = sphi 0, %s221
    %s236 = sphi 0, %s222
    %s240 = sphi 0, %s240
    %s242 = sphi 0, %s240
    %s243 = sphi 0, %s242
    %s257 = sphi 0, %s243
    %s263 = sphi 0, %s265
    %s266 = sphi 0, %s263
    %s267 = sphi 0, %s266
    %s283 = sphi 0, %s267
  $region4: #{inverted_residual_forward.1} parent=0 // loop_header_branch
    %20 = sbr.rel (%p18) target = $region8
  $region5: #{inverted_residual_forward.1} parent=0 // loop_body
    %s22 = ssub.s32 %s17, 1
    %s23 = ssub.s32 %s17, 2
    %s24 = sadd.s32 %s17, 1
    %s25 = ssub.s32 %s17, %s24
    %p26 = scmp.eq.s32.totalorder %s25, 0
    %s28 = sadd.s32 %s27, 1
    %s29 = scalar_select %p26, %s27, %s28
    %p32 = pneg %p26
    %p33 = scmp.eq.s32.totalorder %s17, 1
    %p34 = por %p32, %p33
    %p35 = scmp.ne.s32.totalorder %s27, %s30
    %p36 = scmp.eq.s32.totalorder %s17, 0
    %p37 = por %p35, %p36
    %p38 = scmp.ne.s32.totalorder %s27, %s30
    %p39 = scmp.eq.s32.totalorder %s22, 1
    %p40 = por %p38, %p39
    %p41 = scmp.ne.s32.totalorder %s30, %s31
    %p42 = scmp.eq.s32.totalorder %s22, 0
    %p43 = por %p41, %p42
    %p44 = scmp.ne.s32.totalorder %s30, %s31
    %p45 = scmp.eq.s32.totalorder %s23, 1
    %p46 = por %p44, %p45
    %p48 = scmp.ne.s32.totalorder %s31, %s47
    %p49 = scmp.eq.s32.totalorder %s23, 0
    %p50 = por %p48, %p49
    %s52 = sadd.s32 %s51, 1
    %p55 = scmp.eq.s32.totalorder %s17, 1
    %p56 = scmp.ne.s32.totalorder %s51, %s53
    %p57 = scmp.eq.s32.totalorder %s17, 0
    %p58 = por %p56, %p57
    %p59 = scmp.ne.s32.totalorder %s51, %s53
    %p60 = scmp.eq.s32.totalorder %s22, 1
    %p61 = por %p59, %p60
    %p62 = scmp.ne.s32.totalorder %s53, %s54
    %p63 = scmp.eq.s32.totalorder %s22, 0
    %p64 = por %p62, %p63
    %p65 = scmp.ne.s32.totalorder %s53, %s54
    %p66 = scmp.eq.s32.totalorder %s23, 1
    %p67 = por %p65, %p66
    %p69 = scmp.ne.s32.totalorder %s54, %s68
    %p70 = scmp.eq.s32.totalorder %s23, 0
    %p71 = por %p69, %p70
    %s73 = sadd.s32 %s72, 1
    %p76 = scmp.eq.s32.totalorder %s17, 1
    %p77 = scmp.ne.s32.totalorder %s72, %s74
    %p78 = scmp.eq.s32.totalorder %s17, 0
    %p79 = por %p77, %p78
    %p80 = scmp.ne.s32.totalorder %s72, %s74
    %p81 = scmp.eq.s32.totalorder %s22, 1
    %p82 = por %p80, %p81
    %p83 = scmp.ne.s32.totalorder %s74, %s75
    %p84 = scmp.eq.s32.totalorder %s22, 0
    %p85 = por %p83, %p84
    %p86 = scmp.ne.s32.totalorder %s74, %s75
    %p87 = scmp.eq.s32.totalorder %s23, 1
    %p88 = por %p86, %p87
    %p90 = scmp.ne.s32.totalorder %s75, %s89
    %p91 = scmp.eq.s32.totalorder %s23, 0
    %p92 = por %p90, %p91
    %s94 = sadd.s32 %s93, 1
    %p97 = scmp.eq.s32.totalorder %s17, 1
    %p98 = scmp.ne.s32.totalorder %s93, %s95
    %p99 = scmp.eq.s32.totalorder %s17, 0
    %p100 = por %p98, %p99
    %p101 = scmp.ne.s32.totalorder %s93, %s95
    %p102 = scmp.eq.s32.totalorder %s22, 1
    %p103 = por %p101, %p102
    %p104 = scmp.ne.s32.totalorder %s95, %s96
    %p105 = scmp.eq.s32.totalorder %s22, 0
    %p106 = por %p104, %p105
    %p107 = scmp.ne.s32.totalorder %s95, %s96
    %p108 = scmp.eq.s32.totalorder %s23, 1
    %p109 = por %p107, %p108
    %p111 = scmp.ne.s32.totalorder %s96, %s110
    %p112 = scmp.eq.s32.totalorder %s23, 0
    %p113 = por %p111, %p112
    %s115 = sadd.s32 %s114, 1
    %p118 = scmp.eq.s32.totalorder %s17, 1
    %p119 = scmp.ne.s32.totalorder %s114, %s116
    %p120 = scmp.eq.s32.totalorder %s17, 0
    %p121 = por %p119, %p120
    %p122 = scmp.ne.s32.totalorder %s114, %s116
    %p123 = scmp.eq.s32.totalorder %s22, 1
    %p124 = por %p122, %p123
    %p125 = scmp.ne.s32.totalorder %s116, %s117
    %p126 = scmp.eq.s32.totalorder %s22, 0
    %p127 = por %p125, %p126
    %p128 = scmp.ne.s32.totalorder %s116, %s117
    %p129 = scmp.eq.s32.totalorder %s23, 1
    %p130 = por %p128, %p129
    %p132 = scmp.ne.s32.totalorder %s117, %s131
    %p133 = scmp.eq.s32.totalorder %s23, 0
    %p134 = por %p132, %p133
    %s136 = sadd.s32 %s135, 1
    %p139 = scmp.eq.s32.totalorder %s17, 1
    %p140 = scmp.ne.s32.totalorder %s135, %s137
    %p141 = scmp.eq.s32.totalorder %s17, 0
    %p142 = por %p140, %p141
    %p143 = scmp.ne.s32.totalorder %s135, %s137
    %p144 = scmp.eq.s32.totalorder %s22, 1
    %p145 = por %p143, %p144
    %p146 = scmp.ne.s32.totalorder %s137, %s138
    %p147 = scmp.eq.s32.totalorder %s22, 0
    %p148 = por %p146, %p147
    %p149 = scmp.ne.s32.totalorder %s137, %s138
    %p150 = scmp.eq.s32.totalorder %s23, 1
    %p151 = por %p149, %p150
    %p153 = scmp.ne.s32.totalorder %s138, %s152
    %p154 = scmp.eq.s32.totalorder %s23, 0
    %p155 = por %p153, %p154
    %s157 = sadd.s32 %s156, 1
    %p160 = scmp.eq.s32.totalorder %s17, 1
    %p161 = scmp.ne.s32.totalorder %s156, %s158
    %p162 = scmp.eq.s32.totalorder %s17, 0
    %p163 = por %p161, %p162
    %p164 = scmp.ne.s32.totalorder %s156, %s158
    %p165 = scmp.eq.s32.totalorder %s22, 1
    %p166 = por %p164, %p165
    %p167 = scmp.ne.s32.totalorder %s158, %s159
    %p168 = scmp.eq.s32.totalorder %s22, 0
    %p169 = por %p167, %p168
    %p170 = scmp.ne.s32.totalorder %s158, %s159
    %p171 = scmp.eq.s32.totalorder %s23, 1
    %p172 = por %p170, %p171
    %p174 = scmp.ne.s32.totalorder %s159, %s173
    %p175 = scmp.eq.s32.totalorder %s23, 0
    %p176 = por %p174, %p175
    %s178 = sadd.s32 %s177, 1
    %p181 = scmp.eq.s32.totalorder %s17, 1
    %p182 = scmp.ne.s32.totalorder %s177, %s179
    %p183 = scmp.eq.s32.totalorder %s17, 0
    %p184 = por %p182, %p183
    %p185 = scmp.ne.s32.totalorder %s177, %s179
    %p186 = scmp.eq.s32.totalorder %s22, 1
    %p187 = por %p185, %p186
    %p188 = scmp.ne.s32.totalorder %s179, %s180
    %p189 = scmp.eq.s32.totalorder %s22, 0
    %p190 = por %p188, %p189
    %p191 = scmp.ne.s32.totalorder %s179, %s180
    %p192 = scmp.eq.s32.totalorder %s23, 1
    %p193 = por %p191, %p192
    %p195 = scmp.ne.s32.totalorder %s180, %s194
    %p196 = scmp.eq.s32.totalorder %s23, 0
    %p197 = por %p195, %p196
    %s199 = sadd.s32 %s198, 1
    %p202 = scmp.eq.s32.totalorder %s17, 1
    %p203 = scmp.ne.s32.totalorder %s198, %s200
    %p204 = scmp.eq.s32.totalorder %s17, 0
    %p205 = por %p203, %p204
    %p206 = scmp.ne.s32.totalorder %s198, %s200
    %p207 = scmp.eq.s32.totalorder %s22, 1
    %p208 = por %p206, %p207
    %p209 = scmp.ne.s32.totalorder %s200, %s201
    %p210 = scmp.eq.s32.totalorder %s22, 0
    %p211 = por %p209, %p210
    %p212 = scmp.ne.s32.totalorder %s200, %s201
    %p213 = scmp.eq.s32.totalorder %s23, 1
    %p214 = por %p212, %p213
    %p216 = scmp.ne.s32.totalorder %s201, %s215
    %p217 = scmp.eq.s32.totalorder %s23, 0
    %p218 = por %p216, %p217
    %s220 = sadd.s32 %s219, 1
    %p223 = scmp.eq.s32.totalorder %s17, 1
    %p224 = scmp.ne.s32.totalorder %s219, %s221
    %p225 = scmp.eq.s32.totalorder %s17, 0
    %p226 = por %p224, %p225
    %p227 = scmp.ne.s32.totalorder %s219, %s221
    %p228 = scmp.eq.s32.totalorder %s22, 1
    %p229 = por %p227, %p228
    %p230 = scmp.ne.s32.totalorder %s221, %s222
    %p231 = scmp.eq.s32.totalorder %s22, 0
    %p232 = por %p230, %p231
    %p233 = scmp.ne.s32.totalorder %s221, %s222
    %p234 = scmp.eq.s32.totalorder %s23, 1
    %p235 = por %p233, %p234
    %p237 = scmp.ne.s32.totalorder %s222, %s236
    %p238 = scmp.eq.s32.totalorder %s23, 0
    %p239 = por %p237, %p238
    %s241 = sadd.s32 %s240, 1
    %p244 = scmp.eq.s32.totalorder %s17, 1
    %p245 = scmp.ne.s32.totalorder %s240, %s242
    %p246 = scmp.eq.s32.totalorder %s17, 0
    %p247 = por %p245, %p246
    %p248 = scmp.ne.s32.totalorder %s240, %s242
    %p249 = scmp.eq.s32.totalorder %s22, 1
    %p250 = por %p248, %p249
    %p251 = scmp.ne.s32.totalorder %s242, %s243
    %p252 = scmp.eq.s32.totalorder %s22, 0
    %p253 = por %p251, %p252
    %p254 = scmp.ne.s32.totalorder %s242, %s243
    %p255 = scmp.eq.s32.totalorder %s23, 1
    %p256 = por %p254, %p255
    %p258 = scmp.ne.s32.totalorder %s243, %s257
    %p259 = scmp.eq.s32.totalorder %s23, 0
    %p260 = por %p258, %p259
    %s261 = ssub.s32 %s17, %s24
    %p262 = scmp.eq.s32.totalorder %s261, 0
    %s264 = sadd.s32 %s263, 1
    %s265 = scalar_select %p262, %s263, %s264
    %p268 = pneg %p262
    %p269 = scmp.eq.s32.totalorder %s17, 1
    %p270 = por %p268, %p269
    %p271 = scmp.ne.s32.totalorder %s263, %s266
    %p272 = scmp.eq.s32.totalorder %s17, 0
    %p273 = por %p271, %p272
    %p274 = scmp.ne.s32.totalorder %s263, %s266
    %p275 = scmp.eq.s32.totalorder %s22, 1
    %p276 = por %p274, %p275
    %p277 = scmp.ne.s32.totalorder %s266, %s267
    %p278 = scmp.eq.s32.totalorder %s22, 0
    %p279 = por %p277, %p278
    %p280 = scmp.ne.s32.totalorder %s266, %s267
    %p281 = scmp.eq.s32.totalorder %s23, 1
    %p282 = por %p280, %p281
    %p284 = scmp.ne.s32.totalorder %s267, %s283
    %p285 = scmp.eq.s32.totalorder %s23, 0
    %p286 = por %p284, %p285
    %p287 = scmp.le.s32.totalorder 1, %s17
    %p288 = scmp.lt.s32.totalorder %s17, 3
    %p289 = pnand %p287, %p288
    %p290 = pneg %p289
    // Predicated region
    $region9: #{inverted_residual_forward.1} parent=5 // pred_check
      _
    $region10: #{inverted_residual_forward.1} parent=5 // pred_check_branch
      %292 = sbr.rel (%p289) target = $region12
    $region11: #{inverted_residual_forward.1} parent=5 // pred_region
      %s293 = ssub.s32 %s17, 1
      // Predicated region
      $region13: #{inverted_residual_forward.1} parent=11 // pred_check
        %p294 = pneg %p64
      $region14: #{inverted_residual_forward.1} parent=11 // pred_check_branch
        %296 = sbr.rel (%p294) target = $region16
      $region15: #{inverted_residual_forward.1} parent=11 // pred_region
        _
      $region16: #{inverted_residual_forward.1} parent=11 // pred_fallthru
        _
      // Predicated region
      $region17: #{inverted_residual_forward.1} parent=11 // pred_check
        %p297 = pneg %p85
      $region18: #{inverted_residual_forward.1} parent=11 // pred_check_branch
        %299 = sbr.rel (%p297) target = $region20
      $region19: #{inverted_residual_forward.1} parent=11 // pred_region
        _
      $region20: #{inverted_residual_forward.1} parent=11 // pred_fallthru
        _
      // Predicated region
      $region21: #{inverted_residual_forward.1} parent=11 // pred_check
        %p300 = pneg %p106
      $region22: #{inverted_residual_forward.1} parent=11 // pred_check_branch
        %302 = sbr.rel (%p300) target = $region24
      $region23: #{inverted_residual_forward.1} parent=11 // pred_region
        _
      $region24: #{inverted_residual_forward.1} parent=11 // pred_fallthru
        _
      // Predicated region
      $region25: #{inverted_residual_forward.1} parent=11 // pred_check
        %p303 = pneg %p127
      $region26: #{inverted_residual_forward.1} parent=11 // pred_check_branch
        %305 = sbr.rel (%p303) target = $region28
      $region27: #{inverted_residual_forward.1} parent=11 // pred_region
        _
      $region28: #{inverted_residual_forward.1} parent=11 // pred_fallthru
        _
      // Predicated region
      $region29: #{inverted_residual_forward.1} parent=11 // pred_check
        %p306 = pneg %p148
      $region30: #{inverted_residual_forward.1} parent=11 // pred_check_branch
        %308 = sbr.rel (%p306) target = $region32
      $region31: #{inverted_residual_forward.1} parent=11 // pred_region
        _
      $region32: #{inverted_residual_forward.1} parent=11 // pred_fallthru
        _
      // Predicated region
      $region33: #{inverted_residual_forward.1} parent=11 // pred_check
        %p309 = pneg %p169
      $region34: #{inverted_residual_forward.1} parent=11 // pred_check_branch
        %311 = sbr.rel (%p309) target = $region36
      $region35: #{inverted_residual_forward.1} parent=11 // pred_region
        _
      $region36: #{inverted_residual_forward.1} parent=11 // pred_fallthru
        _
      // Predicated region
      $region37: #{inverted_residual_forward.1} parent=11 // pred_check
        %p312 = pneg %p190
      $region38: #{inverted_residual_forward.1} parent=11 // pred_check_branch
        %314 = sbr.rel (%p312) target = $region40
      $region39: #{inverted_residual_forward.1} parent=11 // pred_region
        _
      $region40: #{inverted_residual_forward.1} parent=11 // pred_fallthru
        _
      // Predicated region
      $region41: #{inverted_residual_forward.1} parent=11 // pred_check
        %p315 = pneg %p211
      $region42: #{inverted_residual_forward.1} parent=11 // pred_check_branch
        %317 = sbr.rel (%p315) target = $region44
      $region43: #{inverted_residual_forward.1} parent=11 // pred_region
        _
      $region44: #{inverted_residual_forward.1} parent=11 // pred_fallthru
        _
      // Predicated region
      $region45: #{inverted_residual_forward.1} parent=11 // pred_check
        %p318 = pneg %p232
      $region46: #{inverted_residual_forward.1} parent=11 // pred_check_branch
        %320 = sbr.rel (%p318) target = $region48
      $region47: #{inverted_residual_forward.1} parent=11 // pred_region
        _
      $region48: #{inverted_residual_forward.1} parent=11 // pred_fallthru
        _
      // Predicated region
      $region49: #{inverted_residual_forward.1} parent=11 // pred_check
        %p321 = pneg %p253
      $region50: #{inverted_residual_forward.1} parent=11 // pred_check_branch
        %323 = sbr.rel (%p321) target = $region52
      $region51: #{inverted_residual_forward.1} parent=11 // pred_region
        _
      $region52: #{inverted_residual_forward.1} parent=11 // pred_fallthru
        _
    $region12: #{inverted_residual_forward.1} parent=5 // pred_fallthru
      _
    %p324 = scmp.lt.s32.totalorder %s17, 2
    // Predicated region
    $region53: #{inverted_residual_forward.1} parent=5 // pred_check
      %p325 = pneg %p324
    $region54: #{inverted_residual_forward.1} parent=5 // pred_check_branch
      %327 = sbr.rel (%p325) target = $region56
    $region55: #{inverted_residual_forward.1} parent=5 // pred_region
      // Predicated region
      $region57: #{inverted_residual_forward.1} parent=55 // pred_check
        %p328 = pneg %p37
      $region58: #{inverted_residual_forward.1} parent=55 // pred_check_branch
        %330 = sbr.rel (%p328) target = $region60
      $region59: #{inverted_residual_forward.1} parent=55 // pred_region
        %p331 = scmp.lt.s32.totalorder %s17, 1
        %s332 = scalar_select %p331, %s17, 1
        %s333 = smul.addr %s332, 32
        %s334 = smul.addr %s333, 8
        %s335 = scalar_lea.vmem %s0, %s334
      $region60: #{inverted_residual_forward.1} parent=55 // pred_fallthru
        _
    $region56: #{inverted_residual_forward.1} parent=5 // pred_fallthru
      _
    %p336 = scmp.le.s32.totalorder 1, %s17
    %p337 = scmp.lt.s32.totalorder %s17, 3
    %p338 = pnand %p336, %p337
    %p339 = pneg %p338
    // Predicated region
    $region61: #{inverted_residual_forward.1} parent=5 // pred_check
      _
    $region62: #{inverted_residual_forward.1} parent=5 // pred_check_branch
      %341 = sbr.rel (%p338) target = $region64
    $region63: #{inverted_residual_forward.1} parent=5 // pred_region
      %s342 = ssub.s32 %s17, 1
      %p343 = scmp.lt.s32.totalorder %s22, 1
      %s344 = scalar_select %p343, %s22, 1
      %s345 = smul.addr %s344, 32
      %s346 = smul.addr %s345, 8
      %s347 = scalar_lea.vmem %s0, %s346
      %p348 = pneg %p43
      %p349 = pneg %p40
      %p350 = pneg %p64
      %p351 = pneg %p61
      %p352 = pneg %p85
      %p353 = pneg %p82
      %p354 = pneg %p106
      %p355 = pneg %p103
      %p356 = pneg %p127
      %p357 = pneg %p124
      %p358 = pneg %p148
      %p359 = pneg %p145
      %p360 = pneg %p169
      %p361 = pneg %p166
      %p362 = pneg %p190
      %p363 = pneg %p187
      %p364 = pneg %p211
      %p365 = pneg %p208
      %p366 = pneg %p232
      %p367 = pneg %p229
      %p368 = pneg %p253
      %p369 = pneg %p250
      %p370 = pneg %p279
      %p371 = pneg %p276
      %p372 = scmp.lt.s32.totalorder %s22, 1
      %s373 = scalar_select %p372, %s22, 1
      %s374 = smul.addr %s373, 32
      %s375 = smul.addr %s374, 8
      %s376 = scalar_lea.vmem %s11, %s375
      %p377 = scmp.lt.s32.totalorder %s22, 1
      %s378 = scalar_select %p377, %s22, 1
      %s379 = smul.addr %s378, 32
      %s380 = smul.addr %s379, 8
      %s381 = scalar_lea.vmem %s0, %s380
      %p382 = scmp.lt.s32.totalorder %s22, 1
      %s383 = scalar_select %p382, %s22, 1
      %s384 = smul.addr %s383, 32
      %s385 = smul.addr %s384, 8
      %s386 = scalar_lea.vmem %s11, %s385
      %v387 = vld [vmem:[%s381] sm:$0xff]
      %v388 = vld [vmem:[%s381 + $0x8] sm:$0xff]
      %v389 = vld [vmem:[%s381 + $0x10] sm:$0xff]
      %v390 = vld [vmem:[%s381 + $0x18] sm:$0xff]
      %v391 = vld [vmem:[%s381 + $0x20] sm:$0xff]
      %v392 = vld [vmem:[%s381 + $0x28] sm:$0xff]
      %v393 = vld [vmem:[%s381 + $0x30] sm:$0xff]
      %v394 = vld [vmem:[%s381 + $0x38] sm:$0xff]
      %v395 = vld [vmem:[%s381 + $0x40] sm:$0xff]
      %v396 = vld [vmem:[%s381 + $0x48] sm:$0xff]
      %v397 = vld [vmem:[%s381 + $0x50] sm:$0xff]
      %v398 = vld [vmem:[%s381 + $0x58] sm:$0xff]
      %v399 = vld [vmem:[%s381 + $0x60] sm:$0xff]
      %v400 = vld [vmem:[%s381 + $0x68] sm:$0xff]
      %v401 = vld [vmem:[%s381 + $0x70] sm:$0xff]
      %v402 = vld [vmem:[%s381 + $0x78] sm:$0xff]
      %v403 = vld [vmem:[%s381 + $0x80] sm:$0xff]
      %v404 = vld [vmem:[%s381 + $0x88] sm:$0xff]
      %v405 = vld [vmem:[%s381 + $0x90] sm:$0xff]
      %v406 = vld [vmem:[%s381 + $0x98] sm:$0xff]
      %v407 = vld [vmem:[%s381 + $0xa0] sm:$0xff]
      %v408 = vld [vmem:[%s381 + $0xa8] sm:$0xff]
      %v409 = vld [vmem:[%s381 + $0xb0] sm:$0xff]
      %v410 = vld [vmem:[%s381 + $0xb8] sm:$0xff]
      %v411 = vld [vmem:[%s381 + $0xc0] sm:$0xff]
      %v412 = vld [vmem:[%s381 + $0xc8] sm:$0xff]
      %v413 = vld [vmem:[%s381 + $0xd0] sm:$0xff]
      %v414 = vld [vmem:[%s381 + $0xd8] sm:$0xff]
      %v415 = vld [vmem:[%s381 + $0xe0] sm:$0xff]
      %v416 = vld [vmem:[%s381 + $0xe8] sm:$0xff]
      %v417 = vld [vmem:[%s381 + $0xf0] sm:$0xff]
      %v418 = vld [vmem:[%s381 + $0xf8] sm:$0xff]
      %v419 = vld [vmem:[%s1] sm:$0x1]
      %421 = vset.pattern.permute.xlu0 0
      %422 = vperm.xlu0 %421, %v387
      %v423 = vpop.permute.xlu0 %422
      %426 = vset.pattern.permute.xlu0 0
      %427 = vperm.xlu0 %426, %v388
      %v428 = vpop.permute.xlu0 %427
      %431 = vset.pattern.permute.xlu0 0
      %432 = vperm.xlu0 %431, %v389
      %v433 = vpop.permute.xlu0 %432
      %436 = vset.pattern.permute.xlu0 0
      %437 = vperm.xlu0 %436, %v390
      %v438 = vpop.permute.xlu0 %437
      %441 = vset.pattern.permute.xlu0 0
      %442 = vperm.xlu0 %441, %v391
      %v443 = vpop.permute.xlu0 %442
      %446 = vset.pattern.permute.xlu0 0
      %447 = vperm.xlu0 %446, %v392
      %v448 = vpop.permute.xlu0 %447
      %451 = vset.pattern.permute.xlu0 0
      %452 = vperm.xlu0 %451, %v393
      %v453 = vpop.permute.xlu0 %452
      %456 = vset.pattern.permute.xlu0 0
      %457 = vperm.xlu0 %456, %v394
      %v458 = vpop.permute.xlu0 %457
      %461 = vset.pattern.permute.xlu0 0
      %462 = vperm.xlu0 %461, %v395
      %v463 = vpop.permute.xlu0 %462
      %466 = vset.pattern.permute.xlu0 0
      %467 = vperm.xlu0 %466, %v396
      %v468 = vpop.permute.xlu0 %467
      %471 = vset.pattern.permute.xlu0 0
      %472 = vperm.xlu0 %471, %v397
      %v473 = vpop.permute.xlu0 %472
      %476 = vset.pattern.permute.xlu0 0
      %477 = vperm.xlu0 %476, %v398
      %v478 = vpop.permute.xlu0 %477
      %481 = vset.pattern.permute.xlu0 0
      %482 = vperm.xlu0 %481, %v399
      %v483 = vpop.permute.xlu0 %482
      %486 = vset.pattern.permute.xlu0 0
      %487 = vperm.xlu0 %486, %v400
      %v488 = vpop.permute.xlu0 %487
      %491 = vset.pattern.permute.xlu0 0
      %492 = vperm.xlu0 %491, %v401
      %v493 = vpop.permute.xlu0 %492
      %496 = vset.pattern.permute.xlu0 0
      %497 = vperm.xlu0 %496, %v402
      %v498 = vpop.permute.xlu0 %497
      %501 = vset.pattern.permute.xlu0 0
      %502 = vperm.xlu0 %501, %v403
      %v503 = vpop.permute.xlu0 %502
      %506 = vset.pattern.permute.xlu0 0
      %507 = vperm.xlu0 %506, %v404
      %v508 = vpop.permute.xlu0 %507
      %511 = vset.pattern.permute.xlu0 0
      %512 = vperm.xlu0 %511, %v405
      %v513 = vpop.permute.xlu0 %512
      %516 = vset.pattern.permute.xlu0 0
      %517 = vperm.xlu0 %516, %v406
      %v518 = vpop.permute.xlu0 %517
      %521 = vset.pattern.permute.xlu0 0
      %522 = vperm.xlu0 %521, %v407
      %v523 = vpop.permute.xlu0 %522
      %526 = vset.pattern.permute.xlu0 0
      %527 = vperm.xlu0 %526, %v408
      %v528 = vpop.permute.xlu0 %527
      %531 = vset.pattern.permute.xlu0 0
      %532 = vperm.xlu0 %531, %v409
      %v533 = vpop.permute.xlu0 %532
      %536 = vset.pattern.permute.xlu0 0
      %537 = vperm.xlu0 %536, %v410
      %v538 = vpop.permute.xlu0 %537
      %541 = vset.pattern.permute.xlu0 0
      %542 = vperm.xlu0 %541, %v411
      %v543 = vpop.permute.xlu0 %542
      %546 = vset.pattern.permute.xlu0 0
      %547 = vperm.xlu0 %546, %v412
      %v548 = vpop.permute.xlu0 %547
      %551 = vset.pattern.permute.xlu0 0
      %552 = vperm.xlu0 %551, %v413
      %v553 = vpop.permute.xlu0 %552
      %556 = vset.pattern.permute.xlu0 0
      %557 = vperm.xlu0 %556, %v414
      %v558 = vpop.permute.xlu0 %557
      %561 = vset.pattern.permute.xlu0 0
      %562 = vperm.xlu0 %561, %v415
      %v563 = vpop.permute.xlu0 %562
      %566 = vset.pattern.permute.xlu0 0
      %567 = vperm.xlu0 %566, %v416
      %v568 = vpop.permute.xlu0 %567
      %571 = vset.pattern.permute.xlu0 0
      %572 = vperm.xlu0 %571, %v417
      %v573 = vpop.permute.xlu0 %572
      %576 = vset.pattern.permute.xlu0 0
      %577 = vperm.xlu0 %576, %v418
      %v578 = vpop.permute.xlu0 %577
      %v580 = vlaneseq
      %v581 = vshrl.u32 %v580, 7
      %v582 = vsub.s32 0, %v581
      %v583 = vrot.slane %v419, %v582
      %v584 = vmul.f32 %v423, %v583
      %v585 = vmul.f32 %v428, %v583
      %v586 = vmul.f32 %v433, %v583
      %v587 = vmul.f32 %v438, %v583
      %v588 = vmul.f32 %v443, %v583
      %v589 = vmul.f32 %v448, %v583
      %v590 = vmul.f32 %v453, %v583
      %v591 = vmul.f32 %v458, %v583
      %v592 = vmul.f32 %v463, %v583
      %v593 = vmul.f32 %v468, %v583
      %v594 = vmul.f32 %v473, %v583
      %v595 = vmul.f32 %v478, %v583
      %v596 = vmul.f32 %v483, %v583
      %v597 = vmul.f32 %v488, %v583
      %v598 = vmul.f32 %v493, %v583
      %v599 = vmul.f32 %v498, %v583
      %v600 = vmul.f32 %v503, %v583
      %v601 = vmul.f32 %v508, %v583
      %v602 = vmul.f32 %v513, %v583
      %v603 = vmul.f32 %v518, %v583
      %v604 = vmul.f32 %v523, %v583
      %v605 = vmul.f32 %v528, %v583
      %v606 = vmul.f32 %v533, %v583
      %v607 = vmul.f32 %v538, %v583
      %v608 = vmul.f32 %v543, %v583
      %v609 = vmul.f32 %v548, %v583
      %v610 = vmul.f32 %v553, %v583
      %v611 = vmul.f32 %v558, %v583
      %v612 = vmul.f32 %v563, %v583
      %v613 = vmul.f32 %v568, %v583
      %v614 = vmul.f32 %v573, %v583
      %v615 = vmul.f32 %v578, %v583
      %v616 = vld [vmem:[%s1 + $0x1] sm:$0x1]
      %617 = vset.pattern.permute.xlu0 1
      %618 = vperm.xlu0 %617, %v387
      %v619 = vpop.permute.xlu0 %618
      %621 = vset.pattern.permute.xlu0 1
      %622 = vperm.xlu0 %621, %v388
      %v623 = vpop.permute.xlu0 %622
      %625 = vset.pattern.permute.xlu0 1
      %626 = vperm.xlu0 %625, %v389
      %v627 = vpop.permute.xlu0 %626
      %629 = vset.pattern.permute.xlu0 1
      %630 = vperm.xlu0 %629, %v390
      %v631 = vpop.permute.xlu0 %630
      %633 = vset.pattern.permute.xlu0 1
      %634 = vperm.xlu0 %633, %v391
      %v635 = vpop.permute.xlu0 %634
      %637 = vset.pattern.permute.xlu0 1
      %638 = vperm.xlu0 %637, %v392
      %v639 = vpop.permute.xlu0 %638
      %641 = vset.pattern.permute.xlu0 1
      %642 = vperm.xlu0 %641, %v393
      %v643 = vpop.permute.xlu0 %642
      %645 = vset.pattern.permute.xlu0 1
      %646 = vperm.xlu0 %645, %v394
      %v647 = vpop.permute.xlu0 %646
      %649 = vset.pattern.permute.xlu0 1
      %650 = vperm.xlu0 %649, %v395
      %v651 = vpop.permute.xlu0 %650
      %653 = vset.pattern.permute.xlu0 1
      %654 = vperm.xlu0 %653, %v396
      %v655 = vpop.permute.xlu0 %654
      %657 = vset.pattern.permute.xlu0 1
      %658 = vperm.xlu0 %657, %v397
      %v659 = vpop.permute.xlu0 %658
      %661 = vset.pattern.permute.xlu0 1
      %662 = vperm.xlu0 %661, %v398
      %v663 = vpop.permute.xlu0 %662
      %665 = vset.pattern.permute.xlu0 1
      %666 = vperm.xlu0 %665, %v399
      %v667 = vpop.permute.xlu0 %666
      %669 = vset.pattern.permute.xlu0 1
      %670 = vperm.xlu0 %669, %v400
      %v671 = vpop.permute.xlu0 %670
      %673 = vset.pattern.permute.xlu0 1
      %674 = vperm.xlu0 %673, %v401
      %v675 = vpop.permute.xlu0 %674
      %677 = vset.pattern.permute.xlu0 1
      %678 = vperm.xlu0 %677, %v402
      %v679 = vpop.permute.xlu0 %678
      %681 = vset.pattern.permute.xlu0 1
      %682 = vperm.xlu0 %681, %v403
      %v683 = vpop.permute.xlu0 %682
      %685 = vset.pattern.permute.xlu0 1
      %686 = vperm.xlu0 %685, %v404
      %v687 = vpop.permute.xlu0 %686
      %689 = vset.pattern.permute.xlu0 1
      %690 = vperm.xlu0 %689, %v405
      %v691 = vpop.permute.xlu0 %690
      %693 = vset.pattern.permute.xlu0 1
      %694 = vperm.xlu0 %693, %v406
      %v695 = vpop.permute.xlu0 %694
      %697 = vset.pattern.permute.xlu0 1
      %698 = vperm.xlu0 %697, %v407
      %v699 = vpop.permute.xlu0 %698
      %701 = vset.pattern.permute.xlu0 1
      %702 = vperm.xlu0 %701, %v408
      %v703 = vpop.permute.xlu0 %702
      %705 = vset.pattern.permute.xlu0 1
      %706 = vperm.xlu0 %705, %v409
      %v707 = vpop.permute.xlu0 %706
      %709 = vset.pattern.permute.xlu0 1
      %710 = vperm.xlu0 %709, %v410
      %v711 = vpop.permute.xlu0 %710
      %713 = vset.pattern.permute.xlu0 1
      %714 = vperm.xlu0 %713, %v411
      %v715 = vpop.permute.xlu0 %714
      %717 = vset.pattern.permute.xlu0 1
      %718 = vperm.xlu0 %717, %v412
      %v719 = vpop.permute.xlu0 %718
      %721 = vset.pattern.permute.xlu0 1
      %722 = vperm.xlu0 %721, %v413
      %v723 = vpop.permute.xlu0 %722
      %725 = vset.pattern.permute.xlu0 1
      %726 = vperm.xlu0 %725, %v414
      %v727 = vpop.permute.xlu0 %726
      %729 = vset.pattern.permute.xlu0 1
      %730 = vperm.xlu0 %729, %v415
      %v731 = vpop.permute.xlu0 %730
      %733 = vset.pattern.permute.xlu0 1
      %734 = vperm.xlu0 %733, %v416
      %v735 = vpop.permute.xlu0 %734
      %737 = vset.pattern.permute.xlu0 1
      %738 = vperm.xlu0 %737, %v417
      %v739 = vpop.permute.xlu0 %738
      %741 = vset.pattern.permute.xlu0 1
      %742 = vperm.xlu0 %741, %v418
      %v743 = vpop.permute.xlu0 %742
      %v745 = vlaneseq
      %v746 = vshrl.u32 %v745, 7
      %v747 = vsub.s32 0, %v746
      %v748 = vrot.slane %v616, %v747
      %v749 = vmul.f32 %v619, %v748
      %v750 = vmul.f32 %v623, %v748
      %v751 = vmul.f32 %v627, %v748
      %v752 = vmul.f32 %v631, %v748
      %v753 = vmul.f32 %v635, %v748
      %v754 = vmul.f32 %v639, %v748
      %v755 = vmul.f32 %v643, %v748
      %v756 = vmul.f32 %v647, %v748
      %v757 = vmul.f32 %v651, %v748
      %v758 = vmul.f32 %v655, %v748
      %v759 = vmul.f32 %v659, %v748
      %v760 = vmul.f32 %v663, %v748
      %v761 = vmul.f32 %v667, %v748
      %v762 = vmul.f32 %v671, %v748
      %v763 = vmul.f32 %v675, %v748
      %v764 = vmul.f32 %v679, %v748
      %v765 = vmul.f32 %v683, %v748
      %v766 = vmul.f32 %v687, %v748
      %v767 = vmul.f32 %v691, %v748
      %v768 = vmul.f32 %v695, %v748
      %v769 = vmul.f32 %v699, %v748
      %v770 = vmul.f32 %v703, %v748
      %v771 = vmul.f32 %v707, %v748
      %v772 = vmul.f32 %v711, %v748
      %v773 = vmul.f32 %v715, %v748
      %v774 = vmul.f32 %v719, %v748
      %v775 = vmul.f32 %v723, %v748
      %v776 = vmul.f32 %v727, %v748
      %v777 = vmul.f32 %v731, %v748
      %v778 = vmul.f32 %v735, %v748
      %v779 = vmul.f32 %v739, %v748
      %v780 = vmul.f32 %v743, %v748
      %v781 = vadd.f32 %v584, %v749
      %v782 = vadd.f32 %v585, %v750
      %v783 = vadd.f32 %v586, %v751
      %v784 = vadd.f32 %v587, %v752
      %v785 = vadd.f32 %v588, %v753
      %v786 = vadd.f32 %v589, %v754
      %v787 = vadd.f32 %v590, %v755
      %v788 = vadd.f32 %v591, %v756
      %v789 = vadd.f32 %v592, %v757
      %v790 = vadd.f32 %v593, %v758
      %v791 = vadd.f32 %v594, %v759
      %v792 = vadd.f32 %v595, %v760
      %v793 = vadd.f32 %v596, %v761
      %v794 = vadd.f32 %v597, %v762
      %v795 = vadd.f32 %v598, %v763
      %v796 = vadd.f32 %v599, %v764
      %v797 = vadd.f32 %v600, %v765
      %v798 = vadd.f32 %v601, %v766
      %v799 = vadd.f32 %v602, %v767
      %v800 = vadd.f32 %v603, %v768
      %v801 = vadd.f32 %v604, %v769
      %v802 = vadd.f32 %v605, %v770
      %v803 = vadd.f32 %v606, %v771
      %v804 = vadd.f32 %v607, %v772
      %v805 = vadd.f32 %v608, %v773
      %v806 = vadd.f32 %v609, %v774
      %v807 = vadd.f32 %v610, %v775
      %v808 = vadd.f32 %v611, %v776
      %v809 = vadd.f32 %v612, %v777
      %v810 = vadd.f32 %v613, %v778
      %v811 = vadd.f32 %v614, %v779
      %v812 = vadd.f32 %v615, %v780
      %v813 = vld [vmem:[%s1 + $0x2] sm:$0x1]
      %814 = vset.pattern.permute.xlu0 2
      %815 = vperm.xlu0 %814, %v387
      %v816 = vpop.permute.xlu0 %815
      %818 = vset.pattern.permute.xlu0 2
      %819 = vperm.xlu0 %818, %v388
      %v820 = vpop.permute.xlu0 %819
      %822 = vset.pattern.permute.xlu0 2
      %823 = vperm.xlu0 %822, %v389
      %v824 = vpop.permute.xlu0 %823
      %826 = vset.pattern.permute.xlu0 2
      %827 = vperm.xlu0 %826, %v390
      %v828 = vpop.permute.xlu0 %827
      %830 = vset.pattern.permute.xlu0 2
      %831 = vperm.xlu0 %830, %v391
      %v832 = vpop.permute.xlu0 %831
      %834 = vset.pattern.permute.xlu0 2
      %835 = vperm.xlu0 %834, %v392
      %v836 = vpop.permute.xlu0 %835
      %838 = vset.pattern.permute.xlu0 2
      %839 = vperm.xlu0 %838, %v393
      %v840 = vpop.permute.xlu0 %839
      %842 = vset.pattern.permute.xlu0 2
      %843 = vperm.xlu0 %842, %v394
      %v844 = vpop.permute.xlu0 %843
      %846 = vset.pattern.permute.xlu0 2
      %847 = vperm.xlu0 %846, %v395
      %v848 = vpop.permute.xlu0 %847
      %850 = vset.pattern.permute.xlu0 2
      %851 = vperm.xlu0 %850, %v396
      %v852 = vpop.permute.xlu0 %851
      %854 = vset.pattern.permute.xlu0 2
      %855 = vperm.xlu0 %854, %v397
      %v856 = vpop.permute.xlu0 %855
      %858 = vset.pattern.permute.xlu0 2
      %859 = vperm.xlu0 %858, %v398
      %v860 = vpop.permute.xlu0 %859
      %862 = vset.pattern.permute.xlu0 2
      %863 = vperm.xlu0 %862, %v399
      %v864 = vpop.permute.xlu0 %863
      %866 = vset.pattern.permute.xlu0 2
      %867 = vperm.xlu0 %866, %v400
      %v868 = vpop.permute.xlu0 %867
      %870 = vset.pattern.permute.xlu0 2
      %871 = vperm.xlu0 %870, %v401
      %v872 = vpop.permute.xlu0 %871
      %874 = vset.pattern.permute.xlu0 2
      %875 = vperm.xlu0 %874, %v402
      %v876 = vpop.permute.xlu0 %875
      %878 = vset.pattern.permute.xlu0 2
      %879 = vperm.xlu0 %878, %v403
      %v880 = vpop.permute.xlu0 %879
      %882 = vset.pattern.permute.xlu0 2
      %883 = vperm.xlu0 %882, %v404
      %v884 = vpop.permute.xlu0 %883
      %886 = vset.pattern.permute.xlu0 2
      %887 = vperm.xlu0 %886, %v405
      %v888 = vpop.permute.xlu0 %887
      %890 = vset.pattern.permute.xlu0 2
      %891 = vperm.xlu0 %890, %v406
      %v892 = vpop.permute.xlu0 %891
      %894 = vset.pattern.permute.xlu0 2
      %895 = vperm.xlu0 %894, %v407
      %v896 = vpop.permute.xlu0 %895
      %898 = vset.pattern.permute.xlu0 2
      %899 = vperm.xlu0 %898, %v408
      %v900 = vpop.permute.xlu0 %899
      %902 = vset.pattern.permute.xlu0 2
      %903 = vperm.xlu0 %902, %v409
      %v904 = vpop.permute.xlu0 %903
      %906 = vset.pattern.permute.xlu0 2
      %907 = vperm.xlu0 %906, %v410
      %v908 = vpop.permute.xlu0 %907
      %910 = vset.pattern.permute.xlu0 2
      %911 = vperm.xlu0 %910, %v411
      %v912 = vpop.permute.xlu0 %911
      %914 = vset.pattern.permute.xlu0 2
      %915 = vperm.xlu0 %914, %v412
      %v916 = vpop.permute.xlu0 %915
      %918 = vset.pattern.permute.xlu0 2
      %919 = vperm.xlu0 %918, %v413
      %v920 = vpop.permute.xlu0 %919
      %922 = vset.pattern.permute.xlu0 2
      %923 = vperm.xlu0 %922, %v414
      %v924 = vpop.permute.xlu0 %923
      %926 = vset.pattern.permute.xlu0 2
      %927 = vperm.xlu0 %926, %v415
      %v928 = vpop.permute.xlu0 %927
      %930 = vset.pattern.permute.xlu0 2
      %931 = vperm.xlu0 %930, %v416
      %v932 = vpop.permute.xlu0 %931
      %934 = vset.pattern.permute.xlu0 2
      %935 = vperm.xlu0 %934, %v417
      %v936 = vpop.permute.xlu0 %935
      %938 = vset.pattern.permute.xlu0 2
      %939 = vperm.xlu0 %938, %v418
      %v940 = vpop.permute.xlu0 %939
      %v942 = vlaneseq
      %v943 = vshrl.u32 %v942, 7
      %v944 = vsub.s32 0, %v943
      %v945 = vrot.slane %v813, %v944
      %v946 = vmul.f32 %v816, %v945
      %v947 = vmul.f32 %v820, %v945
      %v948 = vmul.f32 %v824, %v945
      %v949 = vmul.f32 %v828, %v945
      %v950 = vmul.f32 %v832, %v945
      %v951 = vmul.f32 %v836, %v945
      %v952 = vmul.f32 %v840, %v945
      %v953 = vmul.f32 %v844, %v945
      %v954 = vmul.f32 %v848, %v945
      %v955 = vmul.f32 %v852, %v945
      %v956 = vmul.f32 %v856, %v945
      %v957 = vmul.f32 %v860, %v945
      %v958 = vmul.f32 %v864, %v945
      %v959 = vmul.f32 %v868, %v945
      %v960 = vmul.f32 %v872, %v945
      %v961 = vmul.f32 %v876, %v945
      %v962 = vmul.f32 %v880, %v945
      %v963 = vmul.f32 %v884, %v945
      %v964 = vmul.f32 %v888, %v945
      %v965 = vmul.f32 %v892, %v945
      %v966 = vmul.f32 %v896, %v945
      %v967 = vmul.f32 %v900, %v945
      %v968 = vmul.f32 %v904, %v945
      %v969 = vmul.f32 %v908, %v945
      %v970 = vmul.f32 %v912, %v945
      %v971 = vmul.f32 %v916, %v945
      %v972 = vmul.f32 %v920, %v945
      %v973 = vmul.f32 %v924, %v945
      %v974 = vmul.f32 %v928, %v945
      %v975 = vmul.f32 %v932, %v945
      %v976 = vmul.f32 %v936, %v945
      %v977 = vmul.f32 %v940, %v945
      %v978 = vadd.f32 %v781, %v946
      %v979 = vadd.f32 %v782, %v947
      %v980 = vadd.f32 %v783, %v948
      %v981 = vadd.f32 %v784, %v949
      %v982 = vadd.f32 %v785, %v950
      %v983 = vadd.f32 %v786, %v951
      %v984 = vadd.f32 %v787, %v952
      %v985 = vadd.f32 %v788, %v953
      %v986 = vadd.f32 %v789, %v954
      %v987 = vadd.f32 %v790, %v955
      %v988 = vadd.f32 %v791, %v956
      %v989 = vadd.f32 %v792, %v957
      %v990 = vadd.f32 %v793, %v958
      %v991 = vadd.f32 %v794, %v959
      %v992 = vadd.f32 %v795, %v960
      %v993 = vadd.f32 %v796, %v961
      %v994 = vadd.f32 %v797, %v962
      %v995 = vadd.f32 %v798, %v963
      %v996 = vadd.f32 %v799, %v964
      %v997 = vadd.f32 %v800, %v965
      %v998 = vadd.f32 %v801, %v966
      %v999 = vadd.f32 %v802, %v967
      %v1000 = vadd.f32 %v803, %v968
      %v1001 = vadd.f32 %v804, %v969
      %v1002 = vadd.f32 %v805, %v970
      %v1003 = vadd.f32 %v806, %v971
      %v1004 = vadd.f32 %v807, %v972
      %v1005 = vadd.f32 %v808, %v973
      %v1006 = vadd.f32 %v809, %v974
      %v1007 = vadd.f32 %v810, %v975
      %v1008 = vadd.f32 %v811, %v976
      %v1009 = vadd.f32 %v812, %v977
      %v1010 = vld [vmem:[%s1 + $0x3] sm:$0x1]
      %1011 = vset.pattern.permute.xlu0 3
      %1012 = vperm.xlu0 %1011, %v387
      %v1013 = vpop.permute.xlu0 %1012
      %1015 = vset.pattern.permute.xlu0 3
      %1016 = vperm.xlu0 %1015, %v388
      %v1017 = vpop.permute.xlu0 %1016
      %1019 = vset.pattern.permute.xlu0 3
      %1020 = vperm.xlu0 %1019, %v389
      %v1021 = vpop.permute.xlu0 %1020
      %1023 = vset.pattern.permute.xlu0 3
      %1024 = vperm.xlu0 %1023, %v390
      %v1025 = vpop.permute.xlu0 %1024
      %1027 = vset.pattern.permute.xlu0 3
      %1028 = vperm.xlu0 %1027, %v391
      %v1029 = vpop.permute.xlu0 %1028
      %1031 = vset.pattern.permute.xlu0 3
      %1032 = vperm.xlu0 %1031, %v392
      %v1033 = vpop.permute.xlu0 %1032
      %1035 = vset.pattern.permute.xlu0 3
      %1036 = vperm.xlu0 %1035, %v393
      %v1037 = vpop.permute.xlu0 %1036
      %1039 = vset.pattern.permute.xlu0 3
      %1040 = vperm.xlu0 %1039, %v394
      %v1041 = vpop.permute.xlu0 %1040
      %1043 = vset.pattern.permute.xlu0 3
      %1044 = vperm.xlu0 %1043, %v395
      %v1045 = vpop.permute.xlu0 %1044
      %1047 = vset.pattern.permute.xlu0 3
      %1048 = vperm.xlu0 %1047, %v396
      %v1049 = vpop.permute.xlu0 %1048
      %1051 = vset.pattern.permute.xlu0 3
      %1052 = vperm.xlu0 %1051, %v397
      %v1053 = vpop.permute.xlu0 %1052
      %1055 = vset.pattern.permute.xlu0 3
      %1056 = vperm.xlu0 %1055, %v398
      %v1057 = vpop.permute.xlu0 %1056
      %1059 = vset.pattern.permute.xlu0 3
      %1060 = vperm.xlu0 %1059, %v399
      %v1061 = vpop.permute.xlu0 %1060
      %1063 = vset.pattern.permute.xlu0 3
      %1064 = vperm.xlu0 %1063, %v400
      %v1065 = vpop.permute.xlu0 %1064
      %1067 = vset.pattern.permute.xlu0 3
      %1068 = vperm.xlu0 %1067, %v401
      %v1069 = vpop.permute.xlu0 %1068
      %1071 = vset.pattern.permute.xlu0 3
      %1072 = vperm.xlu0 %1071, %v402
      %v1073 = vpop.permute.xlu0 %1072
      %1075 = vset.pattern.permute.xlu0 3
      %1076 = vperm.xlu0 %1075, %v403
      %v1077 = vpop.permute.xlu0 %1076
      %1079 = vset.pattern.permute.xlu0 3
      %1080 = vperm.xlu0 %1079, %v404
      %v1081 = vpop.permute.xlu0 %1080
      %1083 = vset.pattern.permute.xlu0 3
      %1084 = vperm.xlu0 %1083, %v405
      %v1085 = vpop.permute.xlu0 %1084
      %1087 = vset.pattern.permute.xlu0 3
      %1088 = vperm.xlu0 %1087, %v406
      %v1089 = vpop.permute.xlu0 %1088
      %1091 = vset.pattern.permute.xlu0 3
      %1092 = vperm.xlu0 %1091, %v407
      %v1093 = vpop.permute.xlu0 %1092
      %1095 = vset.pattern.permute.xlu0 3
      %1096 = vperm.xlu0 %1095, %v408
      %v1097 = vpop.permute.xlu0 %1096
      %1099 = vset.pattern.permute.xlu0 3
      %1100 = vperm.xlu0 %1099, %v409
      %v1101 = vpop.permute.xlu0 %1100
      %1103 = vset.pattern.permute.xlu0 3
      %1104 = vperm.xlu0 %1103, %v410
      %v1105 = vpop.permute.xlu0 %1104
      %1107 = vset.pattern.permute.xlu0 3
      %1108 = vperm.xlu0 %1107, %v411
      %v1109 = vpop.permute.xlu0 %1108
      %1111 = vset.pattern.permute.xlu0 3
      %1112 = vperm.xlu0 %1111, %v412
      %v1113 = vpop.permute.xlu0 %1112
      %1115 = vset.pattern.permute.xlu0 3
      %1116 = vperm.xlu0 %1115, %v413
      %v1117 = vpop.permute.xlu0 %1116
      %1119 = vset.pattern.permute.xlu0 3
      %1120 = vperm.xlu0 %1119, %v414
      %v1121 = vpop.permute.xlu0 %1120
      %1123 = vset.pattern.permute.xlu0 3
      %1124 = vperm.xlu0 %1123, %v415
      %v1125 = vpop.permute.xlu0 %1124
      %1127 = vset.pattern.permute.xlu0 3
      %1128 = vperm.xlu0 %1127, %v416
      %v1129 = vpop.permute.xlu0 %1128
      %1131 = vset.pattern.permute.xlu0 3
      %1132 = vperm.xlu0 %1131, %v417
      %v1133 = vpop.permute.xlu0 %1132
      %1135 = vset.pattern.permute.xlu0 3
      %1136 = vperm.xlu0 %1135, %v418
      %v1137 = vpop.permute.xlu0 %1136
      %v1139 = vlaneseq
      %v1140 = vshrl.u32 %v1139, 7
      %v1141 = vsub.s32 0, %v1140
      %v1142 = vrot.slane %v1010, %v1141
      %v1143 = vmul.f32 %v1013, %v1142
      %v1144 = vmul.f32 %v1017, %v1142
      %v1145 = vmul.f32 %v1021, %v1142
      %v1146 = vmul.f32 %v1025, %v1142
      %v1147 = vmul.f32 %v1029, %v1142
      %v1148 = vmul.f32 %v1033, %v1142
      %v1149 = vmul.f32 %v1037, %v1142
      %v1150 = vmul.f32 %v1041, %v1142
      %v1151 = vmul.f32 %v1045, %v1142
      %v1152 = vmul.f32 %v1049, %v1142
      %v1153 = vmul.f32 %v1053, %v1142
      %v1154 = vmul.f32 %v1057, %v1142
      %v1155 = vmul.f32 %v1061, %v1142
      %v1156 = vmul.f32 %v1065, %v1142
      %v1157 = vmul.f32 %v1069, %v1142
      %v1158 = vmul.f32 %v1073, %v1142
      %v1159 = vmul.f32 %v1077, %v1142
      %v1160 = vmul.f32 %v1081, %v1142
      %v1161 = vmul.f32 %v1085, %v1142
      %v1162 = vmul.f32 %v1089, %v1142
      %v1163 = vmul.f32 %v1093, %v1142
      %v1164 = vmul.f32 %v1097, %v1142
      %v1165 = vmul.f32 %v1101, %v1142
      %v1166 = vmul.f32 %v1105, %v1142
      %v1167 = vmul.f32 %v1109, %v1142
      %v1168 = vmul.f32 %v1113, %v1142
      %v1169 = vmul.f32 %v1117, %v1142
      %v1170 = vmul.f32 %v1121, %v1142
      %v1171 = vmul.f32 %v1125, %v1142
      %v1172 = vmul.f32 %v1129, %v1142
      %v1173 = vmul.f32 %v1133, %v1142
      %v1174 = vmul.f32 %v1137, %v1142
      %v1175 = vadd.f32 %v978, %v1143
      %v1176 = vadd.f32 %v979, %v1144
      %v1177 = vadd.f32 %v980, %v1145
      %v1178 = vadd.f32 %v981, %v1146
      %v1179 = vadd.f32 %v982, %v1147
      %v1180 = vadd.f32 %v983, %v1148
      %v1181 = vadd.f32 %v984, %v1149
      %v1182 = vadd.f32 %v985, %v1150
      %v1183 = vadd.f32 %v986, %v1151
      %v1184 = vadd.f32 %v987, %v1152
      %v1185 = vadd.f32 %v988, %v1153
      %v1186 = vadd.f32 %v989, %v1154
      %v1187 = vadd.f32 %v990, %v1155
      %v1188 = vadd.f32 %v991, %v1156
      %v1189 = vadd.f32 %v992, %v1157
      %v1190 = vadd.f32 %v993, %v1158
      %v1191 = vadd.f32 %v994, %v1159
      %v1192 = vadd.f32 %v995, %v1160
      %v1193 = vadd.f32 %v996, %v1161
      %v1194 = vadd.f32 %v997, %v1162
      %v1195 = vadd.f32 %v998, %v1163
      %v1196 = vadd.f32 %v999, %v1164
      %v1197 = vadd.f32 %v1000, %v1165
      %v1198 = vadd.f32 %v1001, %v1166
      %v1199 = vadd.f32 %v1002, %v1167
      %v1200 = vadd.f32 %v1003, %v1168
      %v1201 = vadd.f32 %v1004, %v1169
      %v1202 = vadd.f32 %v1005, %v1170
      %v1203 = vadd.f32 %v1006, %v1171
      %v1204 = vadd.f32 %v1007, %v1172
      %v1205 = vadd.f32 %v1008, %v1173
      %v1206 = vadd.f32 %v1009, %v1174
      %v1207 = vld [vmem:[%s2] sm:$0x1]
      %v1209 = vlaneseq
      %v1210 = vshrl.u32 %v1209, 7
      %v1211 = vsub.s32 0, %v1210
      %v1212 = vrot.slane %v1207, %v1211
      %v1214 = vadd.f32 %v1175, %v1212
      %v1215 = vadd.f32 %v1176, %v1212
      %v1216 = vadd.f32 %v1177, %v1212
      %v1217 = vadd.f32 %v1178, %v1212
      %v1218 = vadd.f32 %v1179, %v1212
      %v1219 = vadd.f32 %v1180, %v1212
      %v1220 = vadd.f32 %v1181, %v1212
      %v1221 = vadd.f32 %v1182, %v1212
      %v1222 = vadd.f32 %v1183, %v1212
      %v1223 = vadd.f32 %v1184, %v1212
      %v1224 = vadd.f32 %v1185, %v1212
      %v1225 = vadd.f32 %v1186, %v1212
      %v1226 = vadd.f32 %v1187, %v1212
      %v1227 = vadd.f32 %v1188, %v1212
      %v1228 = vadd.f32 %v1189, %v1212
      %v1229 = vadd.f32 %v1190, %v1212
      %v1230 = vadd.f32 %v1191, %v1212
      %v1231 = vadd.f32 %v1192, %v1212
      %v1232 = vadd.f32 %v1193, %v1212
      %v1233 = vadd.f32 %v1194, %v1212
      %v1234 = vadd.f32 %v1195, %v1212
      %v1235 = vadd.f32 %v1196, %v1212
      %v1236 = vadd.f32 %v1197, %v1212
      %v1237 = vadd.f32 %v1198, %v1212
      %v1238 = vadd.f32 %v1199, %v1212
      %v1239 = vadd.f32 %v1200, %v1212
      %v1240 = vadd.f32 %v1201, %v1212
      %v1241 = vadd.f32 %v1202, %v1212
      %v1242 = vadd.f32 %v1203, %v1212
      %v1243 = vadd.f32 %v1204, %v1212
      %v1244 = vadd.f32 %v1205, %v1212
      %v1245 = vadd.f32 %v1206, %v1212
      %v1246 = vadd.f32 %v1214, 3.0
      %v1247 = vadd.f32 %v1215, 3.0
      %v1248 = vadd.f32 %v1216, 3.0
      %v1249 = vadd.f32 %v1217, 3.0
      %v1250 = vadd.f32 %v1218, 3.0
      %v1251 = vadd.f32 %v1219, 3.0
      %v1252 = vadd.f32 %v1220, 3.0
      %v1253 = vadd.f32 %v1221, 3.0
      %v1254 = vadd.f32 %v1222, 3.0
      %v1255 = vadd.f32 %v1223, 3.0
      %v1256 = vadd.f32 %v1224, 3.0
      %v1257 = vadd.f32 %v1225, 3.0
      %v1258 = vadd.f32 %v1226, 3.0
      %v1259 = vadd.f32 %v1227, 3.0
      %v1260 = vadd.f32 %v1228, 3.0
      %v1261 = vadd.f32 %v1229, 3.0
      %v1262 = vadd.f32 %v1230, 3.0
      %v1263 = vadd.f32 %v1231, 3.0
      %v1264 = vadd.f32 %v1232, 3.0
      %v1265 = vadd.f32 %v1233, 3.0
      %v1266 = vadd.f32 %v1234, 3.0
      %v1267 = vadd.f32 %v1235, 3.0
      %v1268 = vadd.f32 %v1236, 3.0
      %v1269 = vadd.f32 %v1237, 3.0
      %v1270 = vadd.f32 %v1238, 3.0
      %v1271 = vadd.f32 %v1239, 3.0
      %v1272 = vadd.f32 %v1240, 3.0
      %v1273 = vadd.f32 %v1241, 3.0
      %v1274 = vadd.f32 %v1242, 3.0
      %v1275 = vadd.f32 %v1243, 3.0
      %v1276 = vadd.f32 %v1244, 3.0
      %v1277 = vadd.f32 %v1245, 3.0
      %v1278 = vmax.f32 %v1246, 0.0
      %v1279 = vmax.f32 %v1247, 0.0
      %v1280 = vmax.f32 %v1248, 0.0
      %v1281 = vmax.f32 %v1249, 0.0
      %v1282 = vmax.f32 %v1250, 0.0
      %v1283 = vmax.f32 %v1251, 0.0
      %v1284 = vmax.f32 %v1252, 0.0
      %v1285 = vmax.f32 %v1253, 0.0
      %v1286 = vmax.f32 %v1254, 0.0
      %v1287 = vmax.f32 %v1255, 0.0
      %v1288 = vmax.f32 %v1256, 0.0
      %v1289 = vmax.f32 %v1257, 0.0
      %v1290 = vmax.f32 %v1258, 0.0
      %v1291 = vmax.f32 %v1259, 0.0
      %v1292 = vmax.f32 %v1260, 0.0
      %v1293 = vmax.f32 %v1261, 0.0
      %v1294 = vmax.f32 %v1262, 0.0
      %v1295 = vmax.f32 %v1263, 0.0
      %v1296 = vmax.f32 %v1264, 0.0
      %v1297 = vmax.f32 %v1265, 0.0
      %v1298 = vmax.f32 %v1266, 0.0
      %v1299 = vmax.f32 %v1267, 0.0
      %v1300 = vmax.f32 %v1268, 0.0
      %v1301 = vmax.f32 %v1269, 0.0
      %v1302 = vmax.f32 %v1270, 0.0
      %v1303 = vmax.f32 %v1271, 0.0
      %v1304 = vmax.f32 %v1272, 0.0
      %v1305 = vmax.f32 %v1273, 0.0
      %v1306 = vmax.f32 %v1274, 0.0
      %v1307 = vmax.f32 %v1275, 0.0
      %v1308 = vmax.f32 %v1276, 0.0
      %v1309 = vmax.f32 %v1277, 0.0
      %v1310 = vmin.f32 %v1278, 6.0
      %v1311 = vmin.f32 %v1279, 6.0
      %v1312 = vmin.f32 %v1280, 6.0
      %v1313 = vmin.f32 %v1281, 6.0
      %v1314 = vmin.f32 %v1282, 6.0
      %v1315 = vmin.f32 %v1283, 6.0
      %v1316 = vmin.f32 %v1284, 6.0
      %v1317 = vmin.f32 %v1285, 6.0
      %v1318 = vmin.f32 %v1286, 6.0
      %v1319 = vmin.f32 %v1287, 6.0
      %v1320 = vmin.f32 %v1288, 6.0
      %v1321 = vmin.f32 %v1289, 6.0
      %v1322 = vmin.f32 %v1290, 6.0
      %v1323 = vmin.f32 %v1291, 6.0
      %v1324 = vmin.f32 %v1292, 6.0
      %v1325 = vmin.f32 %v1293, 6.0
      %v1326 = vmin.f32 %v1294, 6.0
      %v1327 = vmin.f32 %v1295, 6.0
      %v1328 = vmin.f32 %v1296, 6.0
      %v1329 = vmin.f32 %v1297, 6.0
      %v1330 = vmin.f32 %v1298, 6.0
      %v1331 = vmin.f32 %v1299, 6.0
      %v1332 = vmin.f32 %v1300, 6.0
      %v1333 = vmin.f32 %v1301, 6.0
      %v1334 = vmin.f32 %v1302, 6.0
      %v1335 = vmin.f32 %v1303, 6.0
      %v1336 = vmin.f32 %v1304, 6.0
      %v1337 = vmin.f32 %v1305, 6.0
      %v1338 = vmin.f32 %v1306, 6.0
      %v1339 = vmin.f32 %v1307, 6.0
      %v1340 = vmin.f32 %v1308, 6.0
      %v1341 = vmin.f32 %v1309, 6.0
      %v1342 = vrcp.pop 6.0
      %v1343 = vmul.f32 %v1310, %v1342
      %v1344 = vmul.f32 %v1311, %v1342
      %v1345 = vmul.f32 %v1312, %v1342
      %v1346 = vmul.f32 %v1313, %v1342
      %v1347 = vmul.f32 %v1314, %v1342
      %v1348 = vmul.f32 %v1315, %v1342
      %v1349 = vmul.f32 %v1316, %v1342
      %v1350 = vmul.f32 %v1317, %v1342
      %v1351 = vmul.f32 %v1318, %v1342
      %v1352 = vmul.f32 %v1319, %v1342
      %v1353 = vmul.f32 %v1320, %v1342
      %v1354 = vmul.f32 %v1321, %v1342
      %v1355 = vmul.f32 %v1322, %v1342
      %v1356 = vmul.f32 %v1323, %v1342
      %v1357 = vmul.f32 %v1324, %v1342
      %v1358 = vmul.f32 %v1325, %v1342
      %v1359 = vmul.f32 %v1326, %v1342
      %v1360 = vmul.f32 %v1327, %v1342
      %v1361 = vmul.f32 %v1328, %v1342
      %v1362 = vmul.f32 %v1329, %v1342
      %v1363 = vmul.f32 %v1330, %v1342
      %v1364 = vmul.f32 %v1331, %v1342
      %v1365 = vmul.f32 %v1332, %v1342
      %v1366 = vmul.f32 %v1333, %v1342
      %v1367 = vmul.f32 %v1334, %v1342
      %v1368 = vmul.f32 %v1335, %v1342
      %v1369 = vmul.f32 %v1336, %v1342
      %v1370 = vmul.f32 %v1337, %v1342
      %v1371 = vmul.f32 %v1338, %v1342
      %v1372 = vmul.f32 %v1339, %v1342
      %v1373 = vmul.f32 %v1340, %v1342
      %v1374 = vmul.f32 %v1341, %v1342
      %v1375 = vmul.f32 %v1214, %v1343
      %v1376 = vmul.f32 %v1215, %v1344
      %v1377 = vmul.f32 %v1216, %v1345
      %v1378 = vmul.f32 %v1217, %v1346
      %v1379 = vmul.f32 %v1218, %v1347
      %v1380 = vmul.f32 %v1219, %v1348
      %v1381 = vmul.f32 %v1220, %v1349
      %v1382 = vmul.f32 %v1221, %v1350
      %v1383 = vmul.f32 %v1222, %v1351
      %v1384 = vmul.f32 %v1223, %v1352
      %v1385 = vmul.f32 %v1224, %v1353
      %v1386 = vmul.f32 %v1225, %v1354
      %v1387 = vmul.f32 %v1226, %v1355
      %v1388 = vmul.f32 %v1227, %v1356
      %v1389 = vmul.f32 %v1228, %v1357
      %v1390 = vmul.f32 %v1229, %v1358
      %v1391 = vmul.f32 %v1230, %v1359
      %v1392 = vmul.f32 %v1231, %v1360
      %v1393 = vmul.f32 %v1232, %v1361
      %v1394 = vmul.f32 %v1233, %v1362
      %v1395 = vmul.f32 %v1234, %v1363
      %v1396 = vmul.f32 %v1235, %v1364
      %v1397 = vmul.f32 %v1236, %v1365
      %v1398 = vmul.f32 %v1237, %v1366
      %v1399 = vmul.f32 %v1238, %v1367
      %v1400 = vmul.f32 %v1239, %v1368
      %v1401 = vmul.f32 %v1240, %v1369
      %v1402 = vmul.f32 %v1241, %v1370
      %v1403 = vmul.f32 %v1242, %v1371
      %v1404 = vmul.f32 %v1243, %v1372
      %v1405 = vmul.f32 %v1244, %v1373
      %v1406 = vmul.f32 %v1245, %v1374
      %vm1407 = vcmask 261120
      %1408 = vst.msk [vmem:[#allocation2] sm:$0xff] %vm1407, 0.0
      %1409 = vst.msk [vmem:[#allocation2 + $0x8] sm:$0xff] %vm1407, 0.0
      %vm1410 = vcmask 254976
      %1411 = vst.msk [vmem:[#allocation2 + $0x10] sm:$0x3] %vm1410, 0.0
      %1412 = vst.msk [vmem:[#allocation2 + $0x18] sm:$0xff] %vm1407, 0.0
      %1413 = vst.msk [vmem:[#allocation2 + $0x20] sm:$0xff] %vm1407, 0.0
      %1414 = vst.msk [vmem:[#allocation2 + $0x28] sm:$0x3] %vm1410, 0.0
      %1415 = vst.msk [vmem:[#allocation2 + $0x30] sm:$0xff] %vm1407, 0.0
      %1416 = vst.msk [vmem:[#allocation2 + $0x38] sm:$0xff] %vm1407, 0.0
      %1417 = vst.msk [vmem:[#allocation2 + $0x40] sm:$0x3] %vm1410, 0.0
      %1418 = vst.msk [vmem:[#allocation2 + $0x48] sm:$0xff] %vm1407, 0.0
      %1419 = vst.msk [vmem:[#allocation2 + $0x50] sm:$0xff] %vm1407, 0.0
      %1420 = vst.msk [vmem:[#allocation2 + $0x58] sm:$0x3] %vm1410, 0.0
      %1421 = vst.msk [vmem:[#allocation2 + $0x60] sm:$0xff] %vm1407, 0.0
      %1422 = vst.msk [vmem:[#allocation2 + $0x68] sm:$0xff] %vm1407, 0.0
      %1423 = vst.msk [vmem:[#allocation2 + $0x70] sm:$0x3] %vm1410, 0.0
      %1424 = vst.msk [vmem:[#allocation2 + $0x78] sm:$0xff] %vm1407, 0.0
      %1425 = vst.msk [vmem:[#allocation2 + $0x80] sm:$0xff] %vm1407, 0.0
      %1426 = vst.msk [vmem:[#allocation2 + $0x88] sm:$0x3] %vm1410, 0.0
      %1427 = vst.msk [vmem:[#allocation2 + $0x90] sm:$0xff] %vm1407, 0.0
      %1428 = vst.msk [vmem:[#allocation2 + $0x98] sm:$0xff] %vm1407, 0.0
      %1429 = vst.msk [vmem:[#allocation2 + $0xa0] sm:$0x3] %vm1410, 0.0
      %1430 = vst.msk [vmem:[#allocation2 + $0xa8] sm:$0xff] %vm1407, 0.0
      %1431 = vst.msk [vmem:[#allocation2 + $0xb0] sm:$0xff] %vm1407, 0.0
      %1432 = vst.msk [vmem:[#allocation2 + $0xb8] sm:$0x3] %vm1410, 0.0
      %1433 = vst.msk [vmem:[#allocation2 + $0xc0] sm:$0xff] %vm1407, 0.0
      %1434 = vst.msk [vmem:[#allocation2 + $0xc8] sm:$0xff] %vm1407, 0.0
      %1435 = vst.msk [vmem:[#allocation2 + $0xd0] sm:$0x3] %vm1410, 0.0
      %1436 = vst.msk [vmem:[#allocation2 + $0xd8] sm:$0xff] %vm1407, 0.0
      %1437 = vst.msk [vmem:[#allocation2 + $0xe0] sm:$0xff] %vm1407, 0.0
      %1438 = vst.msk [vmem:[#allocation2 + $0xe8] sm:$0x3] %vm1410, 0.0
      %1439 = vst.msk [vmem:[#allocation2 + $0xf0] sm:$0xff] %vm1407, 0.0
      %1440 = vst.msk [vmem:[#allocation2 + $0xf8] sm:$0xff] %vm1407, 0.0
      %1441 = vst.msk [vmem:[#allocation2 + $0x100] sm:$0x3] %vm1410, 0.0
      %1442 = vst.msk [vmem:[#allocation2 + $0x108] sm:$0xff] %vm1407, 0.0
      %1443 = vst.msk [vmem:[#allocation2 + $0x110] sm:$0xff] %vm1407, 0.0
      %1444 = vst.msk [vmem:[#allocation2 + $0x118] sm:$0x3] %vm1410, 0.0
      %1445 = vst.msk [vmem:[#allocation2 + $0x120] sm:$0xff] %vm1407, 0.0
      %1446 = vst.msk [vmem:[#allocation2 + $0x128] sm:$0xff] %vm1407, 0.0
      %1447 = vst.msk [vmem:[#allocation2 + $0x130] sm:$0x3] %vm1410, 0.0
      %1448 = vst.msk [vmem:[#allocation2 + $0x138] sm:$0xff] %vm1407, 0.0
      %1449 = vst.msk [vmem:[#allocation2 + $0x140] sm:$0xff] %vm1407, 0.0
      %1450 = vst.msk [vmem:[#allocation2 + $0x148] sm:$0x3] %vm1410, 0.0
      %1451 = vst.msk [vmem:[#allocation2 + $0x150] sm:$0xff] %vm1407, 0.0
      %1452 = vst.msk [vmem:[#allocation2 + $0x158] sm:$0xff] %vm1407, 0.0
      %1453 = vst.msk [vmem:[#allocation2 + $0x160] sm:$0x3] %vm1410, 0.0
      %1454 = vst.msk [vmem:[#allocation2 + $0x168] sm:$0xff] %vm1407, 0.0
      %1455 = vst.msk [vmem:[#allocation2 + $0x170] sm:$0xff] %vm1407, 0.0
      %1456 = vst.msk [vmem:[#allocation2 + $0x178] sm:$0x3] %vm1410, 0.0
      %1457 = vst.msk [vmem:[#allocation2 + $0x180] sm:$0xff] %vm1407, 0.0
      %1458 = vst.msk [vmem:[#allocation2 + $0x188] sm:$0xff] %vm1407, 0.0
      %1459 = vst.msk [vmem:[#allocation2 + $0x190] sm:$0x3] %vm1410, 0.0
      %1460 = vst.msk [vmem:[#allocation2 + $0x198] sm:$0xff] %vm1407, 0.0
      %1461 = vst.msk [vmem:[#allocation2 + $0x1a0] sm:$0xff] %vm1407, 0.0
      %1462 = vst.msk [vmem:[#allocation2 + $0x1a8] sm:$0x3] %vm1410, 0.0
      %s1463 = scalar_lea.vmem [#allocation2], 24
      %1464 = vst.msk [vmem:[%s1463 + $0x1] sm:$0xff] %vm1407, %v1375
      %1465 = vst.msk [vmem:[%s1463 + $0x9] sm:$0xff] %vm1407, %v1376
      %1466 = vst.msk [vmem:[%s1463 + $0x19] sm:$0xff] %vm1407, %v1377
      %1467 = vst.msk [vmem:[%s1463 + $0x21] sm:$0xff] %vm1407, %v1378
      %1468 = vst.msk [vmem:[%s1463 + $0x31] sm:$0xff] %vm1407, %v1379
      %1469 = vst.msk [vmem:[%s1463 + $0x39] sm:$0xff] %vm1407, %v1380
      %1470 = vst.msk [vmem:[%s1463 + $0x49] sm:$0xff] %vm1407, %v1381
      %1471 = vst.msk [vmem:[%s1463 + $0x51] sm:$0xff] %vm1407, %v1382
      %1472 = vst.msk [vmem:[%s1463 + $0x61] sm:$0xff] %vm1407, %v1383
      %1473 = vst.msk [vmem:[%s1463 + $0x69] sm:$0xff] %vm1407, %v1384
      %1474 = vst.msk [vmem:[%s1463 + $0x79] sm:$0xff] %vm1407, %v1385
      %1475 = vst.msk [vmem:[%s1463 + $0x81] sm:$0xff] %vm1407, %v1386
      %1476 = vst.msk [vmem:[%s1463 + $0x91] sm:$0xff] %vm1407, %v1387
      %1477 = vst.msk [vmem:[%s1463 + $0x99] sm:$0xff] %vm1407, %v1388
      %1478 = vst.msk [vmem:[%s1463 + $0xa9] sm:$0xff] %vm1407, %v1389
      %1479 = vst.msk [vmem:[%s1463 + $0xb1] sm:$0xff] %vm1407, %v1390
      %1480 = vst.msk [vmem:[%s1463 + $0xc1] sm:$0xff] %vm1407, %v1391
      %1481 = vst.msk [vmem:[%s1463 + $0xc9] sm:$0xff] %vm1407, %v1392
      %1482 = vst.msk [vmem:[%s1463 + $0xd9] sm:$0xff] %vm1407, %v1393
      %1483 = vst.msk [vmem:[%s1463 + $0xe1] sm:$0xff] %vm1407, %v1394
      %1484 = vst.msk [vmem:[%s1463 + $0xf1] sm:$0xff] %vm1407, %v1395
      %1485 = vst.msk [vmem:[%s1463 + $0xf9] sm:$0xff] %vm1407, %v1396
      %1486 = vst.msk [vmem:[%s1463 + $0x109] sm:$0xff] %vm1407, %v1397
      %1487 = vst.msk [vmem:[%s1463 + $0x111] sm:$0xff] %vm1407, %v1398
      %1488 = vst.msk [vmem:[%s1463 + $0x121] sm:$0xff] %vm1407, %v1399
      %1489 = vst.msk [vmem:[%s1463 + $0x129] sm:$0xff] %vm1407, %v1400
      %1490 = vst.msk [vmem:[%s1463 + $0x139] sm:$0xff] %vm1407, %v1401
      %1491 = vst.msk [vmem:[%s1463 + $0x141] sm:$0xff] %vm1407, %v1402
      %1492 = vst.msk [vmem:[%s1463 + $0x151] sm:$0xff] %vm1407, %v1403
      %1493 = vst.msk [vmem:[%s1463 + $0x159] sm:$0xff] %vm1407, %v1404
      %1494 = vst.msk [vmem:[%s1463 + $0x169] sm:$0xff] %vm1407, %v1405
      %1495 = vst.msk [vmem:[%s1463 + $0x171] sm:$0xff] %vm1407, %v1406
      %v1496 = vld [vmem:[#allocation2] sm:$0xff]
      %v1497 = vld [vmem:[#allocation2 + $0x8] sm:$0xff]
      %v1498 = vld [vmem:[#allocation2 + $0x18] sm:$0xff]
      %v1499 = vld [vmem:[#allocation2 + $0x20] sm:$0xff]
      %v1500 = vld [vmem:[#allocation2 + $0x30] sm:$0xff]
      %v1501 = vld [vmem:[#allocation2 + $0x38] sm:$0xff]
      %v1502 = vld [vmem:[#allocation2 + $0x48] sm:$0xff]
      %v1503 = vld [vmem:[#allocation2 + $0x50] sm:$0xff]
      %v1504 = vld [vmem:[#allocation2 + $0x60] sm:$0xff]
      %v1505 = vld [vmem:[#allocation2 + $0x68] sm:$0xff]
      %v1506 = vld [vmem:[#allocation2 + $0x78] sm:$0xff]
      %v1507 = vld [vmem:[#allocation2 + $0x80] sm:$0xff]
      %v1508 = vld [vmem:[#allocation2 + $0x90] sm:$0xff]
      %v1509 = vld [vmem:[#allocation2 + $0x98] sm:$0xff]
      %v1510 = vld [vmem:[#allocation2 + $0xa8] sm:$0xff]
      %v1511 = vld [vmem:[#allocation2 + $0xb0] sm:$0xff]
      %v1512 = vld [vmem:[#allocation2 + $0xc0] sm:$0xff]
      %v1513 = vld [vmem:[#allocation2 + $0xc8] sm:$0xff]
      %v1514 = vld [vmem:[#allocation2 + $0xd8] sm:$0xff]
      %v1515 = vld [vmem:[#allocation2 + $0xe0] sm:$0xff]
      %v1516 = vld [vmem:[#allocation2 + $0xf0] sm:$0xff]
      %v1517 = vld [vmem:[#allocation2 + $0xf8] sm:$0xff]
      %v1518 = vld [vmem:[#allocation2 + $0x108] sm:$0xff]
      %v1519 = vld [vmem:[#allocation2 + $0x110] sm:$0xff]
      %v1520 = vld [vmem:[#allocation2 + $0x120] sm:$0xff]
      %v1521 = vld [vmem:[#allocation2 + $0x128] sm:$0xff]
      %v1522 = vld [vmem:[#allocation2 + $0x138] sm:$0xff]
      %v1523 = vld [vmem:[#allocation2 + $0x140] sm:$0xff]
      %v1524 = vld [vmem:[#allocation2 + $0x150] sm:$0xff]
      %v1525 = vld [vmem:[#allocation2 + $0x158] sm:$0xff]
      %v1526 = vld [vmem:[#allocation2 + $0x168] sm:$0xff]
      %v1527 = vld [vmem:[#allocation2 + $0x170] sm:$0xff]
      %v1528 = vld [vmem:[%s3] sm:$0x1]
      %v1529 = vlaneseq
      %v1530 = vshrl.u32 %v1529, 7
      %v1531 = vsub.s32 0, %v1530
      %v1532 = vrot.slane %v1528, %v1531
      %v1533 = vmul.f32 %v1496, %v1532
      %v1534 = vmul.f32 %v1497, %v1532
      %v1535 = vmul.f32 %v1498, %v1532
      %v1536 = vmul.f32 %v1499, %v1532
      %v1537 = vmul.f32 %v1500, %v1532
      %v1538 = vmul.f32 %v1501, %v1532
      %v1539 = vmul.f32 %v1502, %v1532
      %v1540 = vmul.f32 %v1503, %v1532
      %v1541 = vmul.f32 %v1504, %v1532
      %v1542 = vmul.f32 %v1505, %v1532
      %v1543 = vmul.f32 %v1506, %v1532
      %v1544 = vmul.f32 %v1507, %v1532
      %v1545 = vmul.f32 %v1508, %v1532
      %v1546 = vmul.f32 %v1509, %v1532
      %v1547 = vmul.f32 %v1510, %v1532
      %v1548 = vmul.f32 %v1511, %v1532
      %v1549 = vmul.f32 %v1512, %v1532
      %v1550 = vmul.f32 %v1513, %v1532
      %v1551 = vmul.f32 %v1514, %v1532
      %v1552 = vmul.f32 %v1515, %v1532
      %v1553 = vmul.f32 %v1516, %v1532
      %v1554 = vmul.f32 %v1517, %v1532
      %v1555 = vmul.f32 %v1518, %v1532
      %v1556 = vmul.f32 %v1519, %v1532
      %v1557 = vmul.f32 %v1520, %v1532
      %v1558 = vmul.f32 %v1521, %v1532
      %v1559 = vmul.f32 %v1522, %v1532
      %v1560 = vmul.f32 %v1523, %v1532
      %v1561 = vmul.f32 %v1524, %v1532
      %v1562 = vmul.f32 %v1525, %v1532
      %v1563 = vmul.f32 %v1526, %v1532
      %v1564 = vmul.f32 %v1527, %v1532
      %v1565 = vadd.f32 %v1533, 0.0
      %v1566 = vadd.f32 %v1534, 0.0
      %v1567 = vadd.f32 %v1535, 0.0
      %v1568 = vadd.f32 %v1536, 0.0
      %v1569 = vadd.f32 %v1537, 0.0
      %v1570 = vadd.f32 %v1538, 0.0
      %v1571 = vadd.f32 %v1539, 0.0
      %v1572 = vadd.f32 %v1540, 0.0
      %v1573 = vadd.f32 %v1541, 0.0
      %v1574 = vadd.f32 %v1542, 0.0
      %v1575 = vadd.f32 %v1543, 0.0
      %v1576 = vadd.f32 %v1544, 0.0
      %v1577 = vadd.f32 %v1545, 0.0
      %v1578 = vadd.f32 %v1546, 0.0
      %v1579 = vadd.f32 %v1547, 0.0
      %v1580 = vadd.f32 %v1548, 0.0
      %v1581 = vadd.f32 %v1549, 0.0
      %v1582 = vadd.f32 %v1550, 0.0
      %v1583 = vadd.f32 %v1551, 0.0
      %v1584 = vadd.f32 %v1552, 0.0
      %v1585 = vadd.f32 %v1553, 0.0
      %v1586 = vadd.f32 %v1554, 0.0
      %v1587 = vadd.f32 %v1555, 0.0
      %v1588 = vadd.f32 %v1556, 0.0
      %v1589 = vadd.f32 %v1557, 0.0
      %v1590 = vadd.f32 %v1558, 0.0
      %v1591 = vadd.f32 %v1559, 0.0
      %v1592 = vadd.f32 %v1560, 0.0
      %v1593 = vadd.f32 %v1561, 0.0
      %v1594 = vadd.f32 %v1562, 0.0
      %v1595 = vadd.f32 %v1563, 0.0
      %v1596 = vadd.f32 %v1564, 0.0
      %v1597 = vld [vmem:[#allocation2 + $0x1] sm:$0xff]
      %v1598 = vld [vmem:[#allocation2 + $0x9] sm:$0xff]
      %v1599 = vld [vmem:[#allocation2 + $0x19] sm:$0xff]
      %v1600 = vld [vmem:[#allocation2 + $0x21] sm:$0xff]
      %v1601 = vld [vmem:[#allocation2 + $0x31] sm:$0xff]
      %v1602 = vld [vmem:[#allocation2 + $0x39] sm:$0xff]
      %v1603 = vld [vmem:[#allocation2 + $0x49] sm:$0xff]
      %v1604 = vld [vmem:[#allocation2 + $0x51] sm:$0xff]
      %v1605 = vld [vmem:[#allocation2 + $0x61] sm:$0xff]
      %v1606 = vld [vmem:[#allocation2 + $0x69] sm:$0xff]
      %v1607 = vld [vmem:[#allocation2 + $0x79] sm:$0xff]
      %v1608 = vld [vmem:[#allocation2 + $0x81] sm:$0xff]
      %v1609 = vld [vmem:[#allocation2 + $0x91] sm:$0xff]
      %v1610 = vld [vmem:[#allocation2 + $0x99] sm:$0xff]
      %v1611 = vld [vmem:[#allocation2 + $0xa9] sm:$0xff]
      %v1612 = vld [vmem:[#allocation2 + $0xb1] sm:$0xff]
      %v1613 = vld [vmem:[#allocation2 + $0xc1] sm:$0xff]
      %v1614 = vld [vmem:[#allocation2 + $0xc9] sm:$0xff]
      %v1615 = vld [vmem:[#allocation2 + $0xd9] sm:$0xff]
      %v1616 = vld [vmem:[#allocation2 + $0xe1] sm:$0xff]
      %v1617 = vld [vmem:[#allocation2 + $0xf1] sm:$0xff]
      %v1618 = vld [vmem:[#allocation2 + $0xf9] sm:$0xff]
      %v1619 = vld [vmem:[#allocation2 + $0x109] sm:$0xff]
      %v1620 = vld [vmem:[#allocation2 + $0x111] sm:$0xff]
      %v1621 = vld [vmem:[#allocation2 + $0x121] sm:$0xff]
      %v1622 = vld [vmem:[#allocation2 + $0x129] sm:$0xff]
      %v1623 = vld [vmem:[#allocation2 + $0x139] sm:$0xff]
      %v1624 = vld [vmem:[#allocation2 + $0x141] sm:$0xff]
      %v1625 = vld [vmem:[#allocation2 + $0x151] sm:$0xff]
      %v1626 = vld [vmem:[#allocation2 + $0x159] sm:$0xff]
      %v1627 = vld [vmem:[#allocation2 + $0x169] sm:$0xff]
      %v1628 = vld [vmem:[#allocation2 + $0x171] sm:$0xff]
      %v1629 = vld [vmem:[%s3 + $0x1] sm:$0x1]
      %v1630 = vlaneseq
      %v1631 = vshrl.u32 %v1630, 7
      %v1632 = vsub.s32 0, %v1631
      %v1633 = vrot.slane %v1629, %v1632
      %v1634 = vmul.f32 %v1597, %v1633
      %v1635 = vmul.f32 %v1598, %v1633
      %v1636 = vmul.f32 %v1599, %v1633
      %v1637 = vmul.f32 %v1600, %v1633
      %v1638 = vmul.f32 %v1601, %v1633
      %v1639 = vmul.f32 %v1602, %v1633
      %v1640 = vmul.f32 %v1603, %v1633
      %v1641 = vmul.f32 %v1604, %v1633
      %v1642 = vmul.f32 %v1605, %v1633
      %v1643 = vmul.f32 %v1606, %v1633
      %v1644 = vmul.f32 %v1607, %v1633
      %v1645 = vmul.f32 %v1608, %v1633
      %v1646 = vmul.f32 %v1609, %v1633
      %v1647 = vmul.f32 %v1610, %v1633
      %v1648 = vmul.f32 %v1611, %v1633
      %v1649 = vmul.f32 %v1612, %v1633
      %v1650 = vmul.f32 %v1613, %v1633
      %v1651 = vmul.f32 %v1614, %v1633
      %v1652 = vmul.f32 %v1615, %v1633
      %v1653 = vmul.f32 %v1616, %v1633
      %v1654 = vmul.f32 %v1617, %v1633
      %v1655 = vmul.f32 %v1618, %v1633
      %v1656 = vmul.f32 %v1619, %v1633
      %v1657 = vmul.f32 %v1620, %v1633
      %v1658 = vmul.f32 %v1621, %v1633
      %v1659 = vmul.f32 %v1622, %v1633
      %v1660 = vmul.f32 %v1623, %v1633
      %v1661 = vmul.f32 %v1624, %v1633
      %v1662 = vmul.f32 %v1625, %v1633
      %v1663 = vmul.f32 %v1626, %v1633
      %v1664 = vmul.f32 %v1627, %v1633
      %v1665 = vmul.f32 %v1628, %v1633
      %v1666 = vadd.f32 %v1565, %v1634
      %v1667 = vadd.f32 %v1566, %v1635
      %v1668 = vadd.f32 %v1567, %v1636
      %v1669 = vadd.f32 %v1568, %v1637
      %v1670 = vadd.f32 %v1569, %v1638
      %v1671 = vadd.f32 %v1570, %v1639
      %v1672 = vadd.f32 %v1571, %v1640
      %v1673 = vadd.f32 %v1572, %v1641
      %v1674 = vadd.f32 %v1573, %v1642
      %v1675 = vadd.f32 %v1574, %v1643
      %v1676 = vadd.f32 %v1575, %v1644
      %v1677 = vadd.f32 %v1576, %v1645
      %v1678 = vadd.f32 %v1577, %v1646
      %v1679 = vadd.f32 %v1578, %v1647
      %v1680 = vadd.f32 %v1579, %v1648
      %v1681 = vadd.f32 %v1580, %v1649
      %v1682 = vadd.f32 %v1581, %v1650
      %v1683 = vadd.f32 %v1582, %v1651
      %v1684 = vadd.f32 %v1583, %v1652
      %v1685 = vadd.f32 %v1584, %v1653
      %v1686 = vadd.f32 %v1585, %v1654
      %v1687 = vadd.f32 %v1586, %v1655
      %v1688 = vadd.f32 %v1587, %v1656
      %v1689 = vadd.f32 %v1588, %v1657
      %v1690 = vadd.f32 %v1589, %v1658
      %v1691 = vadd.f32 %v1590, %v1659
      %v1692 = vadd.f32 %v1591, %v1660
      %v1693 = vadd.f32 %v1592, %v1661
      %v1694 = vadd.f32 %v1593, %v1662
      %v1695 = vadd.f32 %v1594, %v1663
      %v1696 = vadd.f32 %v1595, %v1664
      %v1697 = vadd.f32 %v1596, %v1665
      %v1698 = vld [vmem:[#allocation2 + $0x2] sm:$0xff]
      %v1699 = vld [vmem:[#allocation2 + $0xa] sm:$0xff]
      %v1700 = vld [vmem:[#allocation2 + $0x1a] sm:$0xff]
      %v1701 = vld [vmem:[#allocation2 + $0x22] sm:$0xff]
      %v1702 = vld [vmem:[#allocation2 + $0x32] sm:$0xff]
      %v1703 = vld [vmem:[#allocation2 + $0x3a] sm:$0xff]
      %v1704 = vld [vmem:[#allocation2 + $0x4a] sm:$0xff]
      %v1705 = vld [vmem:[#allocation2 + $0x52] sm:$0xff]
      %v1706 = vld [vmem:[#allocation2 + $0x62] sm:$0xff]
      %v1707 = vld [vmem:[#allocation2 + $0x6a] sm:$0xff]
      %v1708 = vld [vmem:[#allocation2 + $0x7a] sm:$0xff]
      %v1709 = vld [vmem:[#allocation2 + $0x82] sm:$0xff]
      %v1710 = vld [vmem:[#allocation2 + $0x92] sm:$0xff]
      %v1711 = vld [vmem:[#allocation2 + $0x9a] sm:$0xff]
      %v1712 = vld [vmem:[#allocation2 + $0xaa] sm:$0xff]
      %v1713 = vld [vmem:[#allocation2 + $0xb2] sm:$0xff]
      %v1714 = vld [vmem:[#allocation2 + $0xc2] sm:$0xff]
      %v1715 = vld [vmem:[#allocation2 + $0xca] sm:$0xff]
      %v1716 = vld [vmem:[#allocation2 + $0xda] sm:$0xff]
      %v1717 = vld [vmem:[#allocation2 + $0xe2] sm:$0xff]
      %v1718 = vld [vmem:[#allocation2 + $0xf2] sm:$0xff]
      %v1719 = vld [vmem:[#allocation2 + $0xfa] sm:$0xff]
      %v1720 = vld [vmem:[#allocation2 + $0x10a] sm:$0xff]
      %v1721 = vld [vmem:[#allocation2 + $0x112] sm:$0xff]
      %v1722 = vld [vmem:[#allocation2 + $0x122] sm:$0xff]
      %v1723 = vld [vmem:[#allocation2 + $0x12a] sm:$0xff]
      %v1724 = vld [vmem:[#allocation2 + $0x13a] sm:$0xff]
      %v1725 = vld [vmem:[#allocation2 + $0x142] sm:$0xff]
      %v1726 = vld [vmem:[#allocation2 + $0x152] sm:$0xff]
      %v1727 = vld [vmem:[#allocation2 + $0x15a] sm:$0xff]
      %v1728 = vld [vmem:[#allocation2 + $0x16a] sm:$0xff]
      %v1729 = vld [vmem:[#allocation2 + $0x172] sm:$0xff]
      %v1730 = vld [vmem:[%s3 + $0x2] sm:$0x1]
      %v1731 = vlaneseq
      %v1732 = vshrl.u32 %v1731, 7
      %v1733 = vsub.s32 0, %v1732
      %v1734 = vrot.slane %v1730, %v1733
      %v1735 = vmul.f32 %v1698, %v1734
      %v1736 = vmul.f32 %v1699, %v1734
      %v1737 = vmul.f32 %v1700, %v1734
      %v1738 = vmul.f32 %v1701, %v1734
      %v1739 = vmul.f32 %v1702, %v1734
      %v1740 = vmul.f32 %v1703, %v1734
      %v1741 = vmul.f32 %v1704, %v1734
      %v1742 = vmul.f32 %v1705, %v1734
      %v1743 = vmul.f32 %v1706, %v1734
      %v1744 = vmul.f32 %v1707, %v1734
      %v1745 = vmul.f32 %v1708, %v1734
      %v1746 = vmul.f32 %v1709, %v1734
      %v1747 = vmul.f32 %v1710, %v1734
      %v1748 = vmul.f32 %v1711, %v1734
      %v1749 = vmul.f32 %v1712, %v1734
      %v1750 = vmul.f32 %v1713, %v1734
      %v1751 = vmul.f32 %v1714, %v1734
      %v1752 = vmul.f32 %v1715, %v1734
      %v1753 = vmul.f32 %v1716, %v1734
      %v1754 = vmul.f32 %v1717, %v1734
      %v1755 = vmul.f32 %v1718, %v1734
      %v1756 = vmul.f32 %v1719, %v1734
      %v1757 = vmul.f32 %v1720, %v1734
      %v1758 = vmul.f32 %v1721, %v1734
      %v1759 = vmul.f32 %v1722, %v1734
      %v1760 = vmul.f32 %v1723, %v1734
      %v1761 = vmul.f32 %v1724, %v1734
      %v1762 = vmul.f32 %v1725, %v1734
      %v1763 = vmul.f32 %v1726, %v1734
      %v1764 = vmul.f32 %v1727, %v1734
      %v1765 = vmul.f32 %v1728, %v1734
      %v1766 = vmul.f32 %v1729, %v1734
      %v1767 = vadd.f32 %v1666, %v1735
      %v1768 = vadd.f32 %v1667, %v1736
      %v1769 = vadd.f32 %v1668, %v1737
      %v1770 = vadd.f32 %v1669, %v1738
      %v1771 = vadd.f32 %v1670, %v1739
      %v1772 = vadd.f32 %v1671, %v1740
      %v1773 = vadd.f32 %v1672, %v1741
      %v1774 = vadd.f32 %v1673, %v1742
      %v1775 = vadd.f32 %v1674, %v1743
      %v1776 = vadd.f32 %v1675, %v1744
      %v1777 = vadd.f32 %v1676, %v1745
      %v1778 = vadd.f32 %v1677, %v1746
      %v1779 = vadd.f32 %v1678, %v1747
      %v1780 = vadd.f32 %v1679, %v1748
      %v1781 = vadd.f32 %v1680, %v1749
      %v1782 = vadd.f32 %v1681, %v1750
      %v1783 = vadd.f32 %v1682, %v1751
      %v1784 = vadd.f32 %v1683, %v1752
      %v1785 = vadd.f32 %v1684, %v1753
      %v1786 = vadd.f32 %v1685, %v1754
      %v1787 = vadd.f32 %v1686, %v1755
      %v1788 = vadd.f32 %v1687, %v1756
      %v1789 = vadd.f32 %v1688, %v1757
      %v1790 = vadd.f32 %v1689, %v1758
      %v1791 = vadd.f32 %v1690, %v1759
      %v1792 = vadd.f32 %v1691, %v1760
      %v1793 = vadd.f32 %v1692, %v1761
      %v1794 = vadd.f32 %v1693, %v1762
      %v1795 = vadd.f32 %v1694, %v1763
      %v1796 = vadd.f32 %v1695, %v1764
      %v1797 = vadd.f32 %v1696, %v1765
      %v1798 = vadd.f32 %v1697, %v1766
      %v1799 = vld [vmem:[%s1463] sm:$0xff]
      %v1800 = vld [vmem:[%s1463 + $0x8] sm:$0xff]
      %v1801 = vld [vmem:[%s1463 + $0x18] sm:$0xff]
      %v1802 = vld [vmem:[%s1463 + $0x20] sm:$0xff]
      %v1803 = vld [vmem:[%s1463 + $0x30] sm:$0xff]
      %v1804 = vld [vmem:[%s1463 + $0x38] sm:$0xff]
      %v1805 = vld [vmem:[%s1463 + $0x48] sm:$0xff]
      %v1806 = vld [vmem:[%s1463 + $0x50] sm:$0xff]
      %v1807 = vld [vmem:[%s1463 + $0x60] sm:$0xff]
      %v1808 = vld [vmem:[%s1463 + $0x68] sm:$0xff]
      %v1809 = vld [vmem:[%s1463 + $0x78] sm:$0xff]
      %v1810 = vld [vmem:[%s1463 + $0x80] sm:$0xff]
      %v1811 = vld [vmem:[%s1463 + $0x90] sm:$0xff]
      %v1812 = vld [vmem:[%s1463 + $0x98] sm:$0xff]
      %v1813 = vld [vmem:[%s1463 + $0xa8] sm:$0xff]
      %v1814 = vld [vmem:[%s1463 + $0xb0] sm:$0xff]
      %v1815 = vld [vmem:[%s1463 + $0xc0] sm:$0xff]
      %v1816 = vld [vmem:[%s1463 + $0xc8] sm:$0xff]
      %v1817 = vld [vmem:[%s1463 + $0xd8] sm:$0xff]
      %v1818 = vld [vmem:[%s1463 + $0xe0] sm:$0xff]
      %v1819 = vld [vmem:[%s1463 + $0xf0] sm:$0xff]
      %v1820 = vld [vmem:[%s1463 + $0xf8] sm:$0xff]
      %v1821 = vld [vmem:[%s1463 + $0x108] sm:$0xff]
      %v1822 = vld [vmem:[%s1463 + $0x110] sm:$0xff]
      %v1823 = vld [vmem:[%s1463 + $0x120] sm:$0xff]
      %v1824 = vld [vmem:[%s1463 + $0x128] sm:$0xff]
      %v1825 = vld [vmem:[%s1463 + $0x138] sm:$0xff]
      %v1826 = vld [vmem:[%s1463 + $0x140] sm:$0xff]
      %v1827 = vld [vmem:[%s1463 + $0x150] sm:$0xff]
      %v1828 = vld [vmem:[%s1463 + $0x158] sm:$0xff]
      %v1829 = vld [vmem:[%s1463 + $0x168] sm:$0xff]
      %v1830 = vld [vmem:[%s1463 + $0x170] sm:$0xff]
      %v1831 = vld [vmem:[%s3 + $0x3] sm:$0x1]
      %v1832 = vlaneseq
      %v1833 = vshrl.u32 %v1832, 7
      %v1834 = vsub.s32 0, %v1833
      %v1835 = vrot.slane %v1831, %v1834
      %v1836 = vmul.f32 %v1799, %v1835
      %v1837 = vmul.f32 %v1800, %v1835
      %v1838 = vmul.f32 %v1801, %v1835
      %v1839 = vmul.f32 %v1802, %v1835
      %v1840 = vmul.f32 %v1803, %v1835
      %v1841 = vmul.f32 %v1804, %v1835
      %v1842 = vmul.f32 %v1805, %v1835
      %v1843 = vmul.f32 %v1806, %v1835
      %v1844 = vmul.f32 %v1807, %v1835
      %v1845 = vmul.f32 %v1808, %v1835
      %v1846 = vmul.f32 %v1809, %v1835
      %v1847 = vmul.f32 %v1810, %v1835
      %v1848 = vmul.f32 %v1811, %v1835
      %v1849 = vmul.f32 %v1812, %v1835
      %v1850 = vmul.f32 %v1813, %v1835
      %v1851 = vmul.f32 %v1814, %v1835
      %v1852 = vmul.f32 %v1815, %v1835
      %v1853 = vmul.f32 %v1816, %v1835
      %v1854 = vmul.f32 %v1817, %v1835
      %v1855 = vmul.f32 %v1818, %v1835
      %v1856 = vmul.f32 %v1819, %v1835
      %v1857 = vmul.f32 %v1820, %v1835
      %v1858 = vmul.f32 %v1821, %v1835
      %v1859 = vmul.f32 %v1822, %v1835
      %v1860 = vmul.f32 %v1823, %v1835
      %v1861 = vmul.f32 %v1824, %v1835
      %v1862 = vmul.f32 %v1825, %v1835
      %v1863 = vmul.f32 %v1826, %v1835
      %v1864 = vmul.f32 %v1827, %v1835
      %v1865 = vmul.f32 %v1828, %v1835
      %v1866 = vmul.f32 %v1829, %v1835
      %v1867 = vmul.f32 %v1830, %v1835
      %v1868 = vadd.f32 %v1767, %v1836
      %v1869 = vadd.f32 %v1768, %v1837
      %v1870 = vadd.f32 %v1769, %v1838
      %v1871 = vadd.f32 %v1770, %v1839
      %v1872 = vadd.f32 %v1771, %v1840
      %v1873 = vadd.f32 %v1772, %v1841
      %v1874 = vadd.f32 %v1773, %v1842
      %v1875 = vadd.f32 %v1774, %v1843
      %v1876 = vadd.f32 %v1775, %v1844
      %v1877 = vadd.f32 %v1776, %v1845
      %v1878 = vadd.f32 %v1777, %v1846
      %v1879 = vadd.f32 %v1778, %v1847
      %v1880 = vadd.f32 %v1779, %v1848
      %v1881 = vadd.f32 %v1780, %v1849
      %v1882 = vadd.f32 %v1781, %v1850
      %v1883 = vadd.f32 %v1782, %v1851
      %v1884 = vadd.f32 %v1783, %v1852
      %v1885 = vadd.f32 %v1784, %v1853
      %v1886 = vadd.f32 %v1785, %v1854
      %v1887 = vadd.f32 %v1786, %v1855
      %v1888 = vadd.f32 %v1787, %v1856
      %v1889 = vadd.f32 %v1788, %v1857
      %v1890 = vadd.f32 %v1789, %v1858
      %v1891 = vadd.f32 %v1790, %v1859
      %v1892 = vadd.f32 %v1791, %v1860
      %v1893 = vadd.f32 %v1792, %v1861
      %v1894 = vadd.f32 %v1793, %v1862
      %v1895 = vadd.f32 %v1794, %v1863
      %v1896 = vadd.f32 %v1795, %v1864
      %v1897 = vadd.f32 %v1796, %v1865
      %v1898 = vadd.f32 %v1797, %v1866
      %v1899 = vadd.f32 %v1798, %v1867
      %v1900 = vld [vmem:[%s1463 + $0x1] sm:$0xff]
      %v1901 = vld [vmem:[%s1463 + $0x9] sm:$0xff]
      %v1902 = vld [vmem:[%s1463 + $0x19] sm:$0xff]
      %v1903 = vld [vmem:[%s1463 + $0x21] sm:$0xff]
      %v1904 = vld [vmem:[%s1463 + $0x31] sm:$0xff]
      %v1905 = vld [vmem:[%s1463 + $0x39] sm:$0xff]
      %v1906 = vld [vmem:[%s1463 + $0x49] sm:$0xff]
      %v1907 = vld [vmem:[%s1463 + $0x51] sm:$0xff]
      %v1908 = vld [vmem:[%s1463 + $0x61] sm:$0xff]
      %v1909 = vld [vmem:[%s1463 + $0x69] sm:$0xff]
      %v1910 = vld [vmem:[%s1463 + $0x79] sm:$0xff]
      %v1911 = vld [vmem:[%s1463 + $0x81] sm:$0xff]
      %v1912 = vld [vmem:[%s1463 + $0x91] sm:$0xff]
      %v1913 = vld [vmem:[%s1463 + $0x99] sm:$0xff]
      %v1914 = vld [vmem:[%s1463 + $0xa9] sm:$0xff]
      %v1915 = vld [vmem:[%s1463 + $0xb1] sm:$0xff]
      %v1916 = vld [vmem:[%s1463 + $0xc1] sm:$0xff]
      %v1917 = vld [vmem:[%s1463 + $0xc9] sm:$0xff]
      %v1918 = vld [vmem:[%s1463 + $0xd9] sm:$0xff]
      %v1919 = vld [vmem:[%s1463 + $0xe1] sm:$0xff]
      %v1920 = vld [vmem:[%s1463 + $0xf1] sm:$0xff]
      %v1921 = vld [vmem:[%s1463 + $0xf9] sm:$0xff]
      %v1922 = vld [vmem:[%s1463 + $0x109] sm:$0xff]
      %v1923 = vld [vmem:[%s1463 + $0x111] sm:$0xff]
      %v1924 = vld [vmem:[%s1463 + $0x121] sm:$0xff]
      %v1925 = vld [vmem:[%s1463 + $0x129] sm:$0xff]
      %v1926 = vld [vmem:[%s1463 + $0x139] sm:$0xff]
      %v1927 = vld [vmem:[%s1463 + $0x141] sm:$0xff]
      %v1928 = vld [vmem:[%s1463 + $0x151] sm:$0xff]
      %v1929 = vld [vmem:[%s1463 + $0x159] sm:$0xff]
      %v1930 = vld [vmem:[%s1463 + $0x169] sm:$0xff]
      %v1931 = vld [vmem:[%s1463 + $0x171] sm:$0xff]
      %v1932 = vld [vmem:[%s3 + $0x4] sm:$0x1]
      %v1933 = vlaneseq
      %v1934 = vshrl.u32 %v1933, 7
      %v1935 = vsub.s32 0, %v1934
      %v1936 = vrot.slane %v1932, %v1935
      %v1937 = vmul.f32 %v1900, %v1936
      %v1938 = vmul.f32 %v1901, %v1936
      %v1939 = vmul.f32 %v1902, %v1936
      %v1940 = vmul.f32 %v1903, %v1936
      %v1941 = vmul.f32 %v1904, %v1936
      %v1942 = vmul.f32 %v1905, %v1936
      %v1943 = vmul.f32 %v1906, %v1936
      %v1944 = vmul.f32 %v1907, %v1936
      %v1945 = vmul.f32 %v1908, %v1936
      %v1946 = vmul.f32 %v1909, %v1936
      %v1947 = vmul.f32 %v1910, %v1936
      %v1948 = vmul.f32 %v1911, %v1936
      %v1949 = vmul.f32 %v1912, %v1936
      %v1950 = vmul.f32 %v1913, %v1936
      %v1951 = vmul.f32 %v1914, %v1936
      %v1952 = vmul.f32 %v1915, %v1936
      %v1953 = vmul.f32 %v1916, %v1936
      %v1954 = vmul.f32 %v1917, %v1936
      %v1955 = vmul.f32 %v1918, %v1936
      %v1956 = vmul.f32 %v1919, %v1936
      %v1957 = vmul.f32 %v1920, %v1936
      %v1958 = vmul.f32 %v1921, %v1936
      %v1959 = vmul.f32 %v1922, %v1936
      %v1960 = vmul.f32 %v1923, %v1936
      %v1961 = vmul.f32 %v1924, %v1936
      %v1962 = vmul.f32 %v1925, %v1936
      %v1963 = vmul.f32 %v1926, %v1936
      %v1964 = vmul.f32 %v1927, %v1936
      %v1965 = vmul.f32 %v1928, %v1936
      %v1966 = vmul.f32 %v1929, %v1936
      %v1967 = vmul.f32 %v1930, %v1936
      %v1968 = vmul.f32 %v1931, %v1936
      %v1969 = vadd.f32 %v1868, %v1937
      %v1970 = vadd.f32 %v1869, %v1938
      %v1971 = vadd.f32 %v1870, %v1939
      %v1972 = vadd.f32 %v1871, %v1940
      %v1973 = vadd.f32 %v1872, %v1941
      %v1974 = vadd.f32 %v1873, %v1942
      %v1975 = vadd.f32 %v1874, %v1943
      %v1976 = vadd.f32 %v1875, %v1944
      %v1977 = vadd.f32 %v1876, %v1945
      %v1978 = vadd.f32 %v1877, %v1946
      %v1979 = vadd.f32 %v1878, %v1947
      %v1980 = vadd.f32 %v1879, %v1948
      %v1981 = vadd.f32 %v1880, %v1949
      %v1982 = vadd.f32 %v1881, %v1950
      %v1983 = vadd.f32 %v1882, %v1951
      %v1984 = vadd.f32 %v1883, %v1952
      %v1985 = vadd.f32 %v1884, %v1953
      %v1986 = vadd.f32 %v1885, %v1954
      %v1987 = vadd.f32 %v1886, %v1955
      %v1988 = vadd.f32 %v1887, %v1956
      %v1989 = vadd.f32 %v1888, %v1957
      %v1990 = vadd.f32 %v1889, %v1958
      %v1991 = vadd.f32 %v1890, %v1959
      %v1992 = vadd.f32 %v1891, %v1960
      %v1993 = vadd.f32 %v1892, %v1961
      %v1994 = vadd.f32 %v1893, %v1962
      %v1995 = vadd.f32 %v1894, %v1963
      %v1996 = vadd.f32 %v1895, %v1964
      %v1997 = vadd.f32 %v1896, %v1965
      %v1998 = vadd.f32 %v1897, %v1966
      %v1999 = vadd.f32 %v1898, %v1967
      %v2000 = vadd.f32 %v1899, %v1968
      %v2001 = vld [vmem:[%s1463 + $0x2] sm:$0xff]
      %v2002 = vld [vmem:[%s1463 + $0xa] sm:$0xff]
      %v2003 = vld [vmem:[%s1463 + $0x1a] sm:$0xff]
      %v2004 = vld [vmem:[%s1463 + $0x22] sm:$0xff]
      %v2005 = vld [vmem:[%s1463 + $0x32] sm:$0xff]
      %v2006 = vld [vmem:[%s1463 + $0x3a] sm:$0xff]
      %v2007 = vld [vmem:[%s1463 + $0x4a] sm:$0xff]
      %v2008 = vld [vmem:[%s1463 + $0x52] sm:$0xff]
      %v2009 = vld [vmem:[%s1463 + $0x62] sm:$0xff]
      %v2010 = vld [vmem:[%s1463 + $0x6a] sm:$0xff]
      %v2011 = vld [vmem:[%s1463 + $0x7a] sm:$0xff]
      %v2012 = vld [vmem:[%s1463 + $0x82] sm:$0xff]
      %v2013 = vld [vmem:[%s1463 + $0x92] sm:$0xff]
      %v2014 = vld [vmem:[%s1463 + $0x9a] sm:$0xff]
      %v2015 = vld [vmem:[%s1463 + $0xaa] sm:$0xff]
      %v2016 = vld [vmem:[%s1463 + $0xb2] sm:$0xff]
      %v2017 = vld [vmem:[%s1463 + $0xc2] sm:$0xff]
      %v2018 = vld [vmem:[%s1463 + $0xca] sm:$0xff]
      %v2019 = vld [vmem:[%s1463 + $0xda] sm:$0xff]
      %v2020 = vld [vmem:[%s1463 + $0xe2] sm:$0xff]
      %v2021 = vld [vmem:[%s1463 + $0xf2] sm:$0xff]
      %v2022 = vld [vmem:[%s1463 + $0xfa] sm:$0xff]
      %v2023 = vld [vmem:[%s1463 + $0x10a] sm:$0xff]
      %v2024 = vld [vmem:[%s1463 + $0x112] sm:$0xff]
      %v2025 = vld [vmem:[%s1463 + $0x122] sm:$0xff]
      %v2026 = vld [vmem:[%s1463 + $0x12a] sm:$0xff]
      %v2027 = vld [vmem:[%s1463 + $0x13a] sm:$0xff]
      %v2028 = vld [vmem:[%s1463 + $0x142] sm:$0xff]
      %v2029 = vld [vmem:[%s1463 + $0x152] sm:$0xff]
      %v2030 = vld [vmem:[%s1463 + $0x15a] sm:$0xff]
      %v2031 = vld [vmem:[%s1463 + $0x16a] sm:$0xff]
      %v2032 = vld [vmem:[%s1463 + $0x172] sm:$0xff]
      %v2033 = vld [vmem:[%s3 + $0x5] sm:$0x1]
      %v2034 = vlaneseq
      %v2035 = vshrl.u32 %v2034, 7
      %v2036 = vsub.s32 0, %v2035
      %v2037 = vrot.slane %v2033, %v2036
      %v2038 = vmul.f32 %v2001, %v2037
      %v2039 = vmul.f32 %v2002, %v2037
      %v2040 = vmul.f32 %v2003, %v2037
      %v2041 = vmul.f32 %v2004, %v2037
      %v2042 = vmul.f32 %v2005, %v2037
      %v2043 = vmul.f32 %v2006, %v2037
      %v2044 = vmul.f32 %v2007, %v2037
      %v2045 = vmul.f32 %v2008, %v2037
      %v2046 = vmul.f32 %v2009, %v2037
      %v2047 = vmul.f32 %v2010, %v2037
      %v2048 = vmul.f32 %v2011, %v2037
      %v2049 = vmul.f32 %v2012, %v2037
      %v2050 = vmul.f32 %v2013, %v2037
      %v2051 = vmul.f32 %v2014, %v2037
      %v2052 = vmul.f32 %v2015, %v2037
      %v2053 = vmul.f32 %v2016, %v2037
      %v2054 = vmul.f32 %v2017, %v2037
      %v2055 = vmul.f32 %v2018, %v2037
      %v2056 = vmul.f32 %v2019, %v2037
      %v2057 = vmul.f32 %v2020, %v2037
      %v2058 = vmul.f32 %v2021, %v2037
      %v2059 = vmul.f32 %v2022, %v2037
      %v2060 = vmul.f32 %v2023, %v2037
      %v2061 = vmul.f32 %v2024, %v2037
      %v2062 = vmul.f32 %v2025, %v2037
      %v2063 = vmul.f32 %v2026, %v2037
      %v2064 = vmul.f32 %v2027, %v2037
      %v2065 = vmul.f32 %v2028, %v2037
      %v2066 = vmul.f32 %v2029, %v2037
      %v2067 = vmul.f32 %v2030, %v2037
      %v2068 = vmul.f32 %v2031, %v2037
      %v2069 = vmul.f32 %v2032, %v2037
      %v2070 = vadd.f32 %v1969, %v2038
      %v2071 = vadd.f32 %v1970, %v2039
      %v2072 = vadd.f32 %v1971, %v2040
      %v2073 = vadd.f32 %v1972, %v2041
      %v2074 = vadd.f32 %v1973, %v2042
      %v2075 = vadd.f32 %v1974, %v2043
      %v2076 = vadd.f32 %v1975, %v2044
      %v2077 = vadd.f32 %v1976, %v2045
      %v2078 = vadd.f32 %v1977, %v2046
      %v2079 = vadd.f32 %v1978, %v2047
      %v2080 = vadd.f32 %v1979, %v2048
      %v2081 = vadd.f32 %v1980, %v2049
      %v2082 = vadd.f32 %v1981, %v2050
      %v2083 = vadd.f32 %v1982, %v2051
      %v2084 = vadd.f32 %v1983, %v2052
      %v2085 = vadd.f32 %v1984, %v2053
      %v2086 = vadd.f32 %v1985, %v2054
      %v2087 = vadd.f32 %v1986, %v2055
      %v2088 = vadd.f32 %v1987, %v2056
      %v2089 = vadd.f32 %v1988, %v2057
      %v2090 = vadd.f32 %v1989, %v2058
      %v2091 = vadd.f32 %v1990, %v2059
      %v2092 = vadd.f32 %v1991, %v2060
      %v2093 = vadd.f32 %v1992, %v2061
      %v2094 = vadd.f32 %v1993, %v2062
      %v2095 = vadd.f32 %v1994, %v2063
      %v2096 = vadd.f32 %v1995, %v2064
      %v2097 = vadd.f32 %v1996, %v2065
      %v2098 = vadd.f32 %v1997, %v2066
      %v2099 = vadd.f32 %v1998, %v2067
      %v2100 = vadd.f32 %v1999, %v2068
      %v2101 = vadd.f32 %v2000, %v2069
      %s2102 = scalar_lea.vmem [#allocation2], 48
      %v2103 = vld [vmem:[%s2102] sm:$0xff]
      %v2104 = vld [vmem:[%s2102 + $0x8] sm:$0xff]
      %v2105 = vld [vmem:[%s2102 + $0x18] sm:$0xff]
      %v2106 = vld [vmem:[%s2102 + $0x20] sm:$0xff]
      %v2107 = vld [vmem:[%s2102 + $0x30] sm:$0xff]
      %v2108 = vld [vmem:[%s2102 + $0x38] sm:$0xff]
      %v2109 = vld [vmem:[%s2102 + $0x48] sm:$0xff]
      %v2110 = vld [vmem:[%s2102 + $0x50] sm:$0xff]
      %v2111 = vld [vmem:[%s2102 + $0x60] sm:$0xff]
      %v2112 = vld [vmem:[%s2102 + $0x68] sm:$0xff]
      %v2113 = vld [vmem:[%s2102 + $0x78] sm:$0xff]
      %v2114 = vld [vmem:[%s2102 + $0x80] sm:$0xff]
      %v2115 = vld [vmem:[%s2102 + $0x90] sm:$0xff]
      %v2116 = vld [vmem:[%s2102 + $0x98] sm:$0xff]
      %v2117 = vld [vmem:[%s2102 + $0xa8] sm:$0xff]
      %v2118 = vld [vmem:[%s2102 + $0xb0] sm:$0xff]
      %v2119 = vld [vmem:[%s2102 + $0xc0] sm:$0xff]
      %v2120 = vld [vmem:[%s2102 + $0xc8] sm:$0xff]
      %v2121 = vld [vmem:[%s2102 + $0xd8] sm:$0xff]
      %v2122 = vld [vmem:[%s2102 + $0xe0] sm:$0xff]
      %v2123 = vld [vmem:[%s2102 + $0xf0] sm:$0xff]
      %v2124 = vld [vmem:[%s2102 + $0xf8] sm:$0xff]
      %v2125 = vld [vmem:[%s2102 + $0x108] sm:$0xff]
      %v2126 = vld [vmem:[%s2102 + $0x110] sm:$0xff]
      %v2127 = vld [vmem:[%s2102 + $0x120] sm:$0xff]
      %v2128 = vld [vmem:[%s2102 + $0x128] sm:$0xff]
      %v2129 = vld [vmem:[%s2102 + $0x138] sm:$0xff]
      %v2130 = vld [vmem:[%s2102 + $0x140] sm:$0xff]
      %v2131 = vld [vmem:[%s2102 + $0x150] sm:$0xff]
      %v2132 = vld [vmem:[%s2102 + $0x158] sm:$0xff]
      %v2133 = vld [vmem:[%s2102 + $0x168] sm:$0xff]
      %v2134 = vld [vmem:[%s2102 + $0x170] sm:$0xff]
      %v2135 = vld [vmem:[%s3 + $0x6] sm:$0x1]
      %v2136 = vlaneseq
      %v2137 = vshrl.u32 %v2136, 7
      %v2138 = vsub.s32 0, %v2137
      %v2139 = vrot.slane %v2135, %v2138
      %v2140 = vmul.f32 %v2103, %v2139
      %v2141 = vmul.f32 %v2104, %v2139
      %v2142 = vmul.f32 %v2105, %v2139
      %v2143 = vmul.f32 %v2106, %v2139
      %v2144 = vmul.f32 %v2107, %v2139
      %v2145 = vmul.f32 %v2108, %v2139
      %v2146 = vmul.f32 %v2109, %v2139
      %v2147 = vmul.f32 %v2110, %v2139
      %v2148 = vmul.f32 %v2111, %v2139
      %v2149 = vmul.f32 %v2112, %v2139
      %v2150 = vmul.f32 %v2113, %v2139
      %v2151 = vmul.f32 %v2114, %v2139
      %v2152 = vmul.f32 %v2115, %v2139
      %v2153 = vmul.f32 %v2116, %v2139
      %v2154 = vmul.f32 %v2117, %v2139
      %v2155 = vmul.f32 %v2118, %v2139
      %v2156 = vmul.f32 %v2119, %v2139
      %v2157 = vmul.f32 %v2120, %v2139
      %v2158 = vmul.f32 %v2121, %v2139
      %v2159 = vmul.f32 %v2122, %v2139
      %v2160 = vmul.f32 %v2123, %v2139
      %v2161 = vmul.f32 %v2124, %v2139
      %v2162 = vmul.f32 %v2125, %v2139
      %v2163 = vmul.f32 %v2126, %v2139
      %v2164 = vmul.f32 %v2127, %v2139
      %v2165 = vmul.f32 %v2128, %v2139
      %v2166 = vmul.f32 %v2129, %v2139
      %v2167 = vmul.f32 %v2130, %v2139
      %v2168 = vmul.f32 %v2131, %v2139
      %v2169 = vmul.f32 %v2132, %v2139
      %v2170 = vmul.f32 %v2133, %v2139
      %v2171 = vmul.f32 %v2134, %v2139
      %v2172 = vadd.f32 %v2070, %v2140
      %v2173 = vadd.f32 %v2071, %v2141
      %v2174 = vadd.f32 %v2072, %v2142
      %v2175 = vadd.f32 %v2073, %v2143
      %v2176 = vadd.f32 %v2074, %v2144
      %v2177 = vadd.f32 %v2075, %v2145
      %v2178 = vadd.f32 %v2076, %v2146
      %v2179 = vadd.f32 %v2077, %v2147
      %v2180 = vadd.f32 %v2078, %v2148
      %v2181 = vadd.f32 %v2079, %v2149
      %v2182 = vadd.f32 %v2080, %v2150
      %v2183 = vadd.f32 %v2081, %v2151
      %v2184 = vadd.f32 %v2082, %v2152
      %v2185 = vadd.f32 %v2083, %v2153
      %v2186 = vadd.f32 %v2084, %v2154
      %v2187 = vadd.f32 %v2085, %v2155
      %v2188 = vadd.f32 %v2086, %v2156
      %v2189 = vadd.f32 %v2087, %v2157
      %v2190 = vadd.f32 %v2088, %v2158
      %v2191 = vadd.f32 %v2089, %v2159
      %v2192 = vadd.f32 %v2090, %v2160
      %v2193 = vadd.f32 %v2091, %v2161
      %v2194 = vadd.f32 %v2092, %v2162
      %v2195 = vadd.f32 %v2093, %v2163
      %v2196 = vadd.f32 %v2094, %v2164
      %v2197 = vadd.f32 %v2095, %v2165
      %v2198 = vadd.f32 %v2096, %v2166
      %v2199 = vadd.f32 %v2097, %v2167
      %v2200 = vadd.f32 %v2098, %v2168
      %v2201 = vadd.f32 %v2099, %v2169
      %v2202 = vadd.f32 %v2100, %v2170
      %v2203 = vadd.f32 %v2101, %v2171
      %v2204 = vld [vmem:[%s2102 + $0x1] sm:$0xff]
      %v2205 = vld [vmem:[%s2102 + $0x9] sm:$0xff]
      %v2206 = vld [vmem:[%s2102 + $0x19] sm:$0xff]
      %v2207 = vld [vmem:[%s2102 + $0x21] sm:$0xff]
      %v2208 = vld [vmem:[%s2102 + $0x31] sm:$0xff]
      %v2209 = vld [vmem:[%s2102 + $0x39] sm:$0xff]
      %v2210 = vld [vmem:[%s2102 + $0x49] sm:$0xff]
      %v2211 = vld [vmem:[%s2102 + $0x51] sm:$0xff]
      %v2212 = vld [vmem:[%s2102 + $0x61] sm:$0xff]
      %v2213 = vld [vmem:[%s2102 + $0x69] sm:$0xff]
      %v2214 = vld [vmem:[%s2102 + $0x79] sm:$0xff]
      %v2215 = vld [vmem:[%s2102 + $0x81] sm:$0xff]
      %v2216 = vld [vmem:[%s2102 + $0x91] sm:$0xff]
      %v2217 = vld [vmem:[%s2102 + $0x99] sm:$0xff]
      %v2218 = vld [vmem:[%s2102 + $0xa9] sm:$0xff]
      %v2219 = vld [vmem:[%s2102 + $0xb1] sm:$0xff]
      %v2220 = vld [vmem:[%s2102 + $0xc1] sm:$0xff]
      %v2221 = vld [vmem:[%s2102 + $0xc9] sm:$0xff]
      %v2222 = vld [vmem:[%s2102 + $0xd9] sm:$0xff]
      %v2223 = vld [vmem:[%s2102 + $0xe1] sm:$0xff]
      %v2224 = vld [vmem:[%s2102 + $0xf1] sm:$0xff]
      %v2225 = vld [vmem:[%s2102 + $0xf9] sm:$0xff]
      %v2226 = vld [vmem:[%s2102 + $0x109] sm:$0xff]
      %v2227 = vld [vmem:[%s2102 + $0x111] sm:$0xff]
      %v2228 = vld [vmem:[%s2102 + $0x121] sm:$0xff]
      %v2229 = vld [vmem:[%s2102 + $0x129] sm:$0xff]
      %v2230 = vld [vmem:[%s2102 + $0x139] sm:$0xff]
      %v2231 = vld [vmem:[%s2102 + $0x141] sm:$0xff]
      %v2232 = vld [vmem:[%s2102 + $0x151] sm:$0xff]
      %v2233 = vld [vmem:[%s2102 + $0x159] sm:$0xff]
      %v2234 = vld [vmem:[%s2102 + $0x169] sm:$0xff]
      %v2235 = vld [vmem:[%s2102 + $0x171] sm:$0xff]
      %v2236 = vld [vmem:[%s3 + $0x7] sm:$0x1]
      %v2237 = vlaneseq
      %v2238 = vshrl.u32 %v2237, 7
      %v2239 = vsub.s32 0, %v2238
      %v2240 = vrot.slane %v2236, %v2239
      %v2241 = vmul.f32 %v2204, %v2240
      %v2242 = vmul.f32 %v2205, %v2240
      %v2243 = vmul.f32 %v2206, %v2240
      %v2244 = vmul.f32 %v2207, %v2240
      %v2245 = vmul.f32 %v2208, %v2240
      %v2246 = vmul.f32 %v2209, %v2240
      %v2247 = vmul.f32 %v2210, %v2240
      %v2248 = vmul.f32 %v2211, %v2240
      %v2249 = vmul.f32 %v2212, %v2240
      %v2250 = vmul.f32 %v2213, %v2240
      %v2251 = vmul.f32 %v2214, %v2240
      %v2252 = vmul.f32 %v2215, %v2240
      %v2253 = vmul.f32 %v2216, %v2240
      %v2254 = vmul.f32 %v2217, %v2240
      %v2255 = vmul.f32 %v2218, %v2240
      %v2256 = vmul.f32 %v2219, %v2240
      %v2257 = vmul.f32 %v2220, %v2240
      %v2258 = vmul.f32 %v2221, %v2240
      %v2259 = vmul.f32 %v2222, %v2240
      %v2260 = vmul.f32 %v2223, %v2240
      %v2261 = vmul.f32 %v2224, %v2240
      %v2262 = vmul.f32 %v2225, %v2240
      %v2263 = vmul.f32 %v2226, %v2240
      %v2264 = vmul.f32 %v2227, %v2240
      %v2265 = vmul.f32 %v2228, %v2240
      %v2266 = vmul.f32 %v2229, %v2240
      %v2267 = vmul.f32 %v2230, %v2240
      %v2268 = vmul.f32 %v2231, %v2240
      %v2269 = vmul.f32 %v2232, %v2240
      %v2270 = vmul.f32 %v2233, %v2240
      %v2271 = vmul.f32 %v2234, %v2240
      %v2272 = vmul.f32 %v2235, %v2240
      %v2273 = vadd.f32 %v2172, %v2241
      %v2274 = vadd.f32 %v2173, %v2242
      %v2275 = vadd.f32 %v2174, %v2243
      %v2276 = vadd.f32 %v2175, %v2244
      %v2277 = vadd.f32 %v2176, %v2245
      %v2278 = vadd.f32 %v2177, %v2246
      %v2279 = vadd.f32 %v2178, %v2247
      %v2280 = vadd.f32 %v2179, %v2248
      %v2281 = vadd.f32 %v2180, %v2249
      %v2282 = vadd.f32 %v2181, %v2250
      %v2283 = vadd.f32 %v2182, %v2251
      %v2284 = vadd.f32 %v2183, %v2252
      %v2285 = vadd.f32 %v2184, %v2253
      %v2286 = vadd.f32 %v2185, %v2254
      %v2287 = vadd.f32 %v2186, %v2255
      %v2288 = vadd.f32 %v2187, %v2256
      %v2289 = vadd.f32 %v2188, %v2257
      %v2290 = vadd.f32 %v2189, %v2258
      %v2291 = vadd.f32 %v2190, %v2259
      %v2292 = vadd.f32 %v2191, %v2260
      %v2293 = vadd.f32 %v2192, %v2261
      %v2294 = vadd.f32 %v2193, %v2262
      %v2295 = vadd.f32 %v2194, %v2263
      %v2296 = vadd.f32 %v2195, %v2264
      %v2297 = vadd.f32 %v2196, %v2265
      %v2298 = vadd.f32 %v2197, %v2266
      %v2299 = vadd.f32 %v2198, %v2267
      %v2300 = vadd.f32 %v2199, %v2268
      %v2301 = vadd.f32 %v2200, %v2269
      %v2302 = vadd.f32 %v2201, %v2270
      %v2303 = vadd.f32 %v2202, %v2271
      %v2304 = vadd.f32 %v2203, %v2272
      %v2305 = vld [vmem:[%s2102 + $0x2] sm:$0xff]
      %v2306 = vld [vmem:[%s2102 + $0xa] sm:$0xff]
      %v2307 = vld [vmem:[%s2102 + $0x1a] sm:$0xff]
      %v2308 = vld [vmem:[%s2102 + $0x22] sm:$0xff]
      %v2309 = vld [vmem:[%s2102 + $0x32] sm:$0xff]
      %v2310 = vld [vmem:[%s2102 + $0x3a] sm:$0xff]
      %v2311 = vld [vmem:[%s2102 + $0x4a] sm:$0xff]
      %v2312 = vld [vmem:[%s2102 + $0x52] sm:$0xff]
      %v2313 = vld [vmem:[%s2102 + $0x62] sm:$0xff]
      %v2314 = vld [vmem:[%s2102 + $0x6a] sm:$0xff]
      %v2315 = vld [vmem:[%s2102 + $0x7a] sm:$0xff]
      %v2316 = vld [vmem:[%s2102 + $0x82] sm:$0xff]
      %v2317 = vld [vmem:[%s2102 + $0x92] sm:$0xff]
      %v2318 = vld [vmem:[%s2102 + $0x9a] sm:$0xff]
      %v2319 = vld [vmem:[%s2102 + $0xaa] sm:$0xff]
      %v2320 = vld [vmem:[%s2102 + $0xb2] sm:$0xff]
      %v2321 = vld [vmem:[%s2102 + $0xc2] sm:$0xff]
      %v2322 = vld [vmem:[%s2102 + $0xca] sm:$0xff]
      %v2323 = vld [vmem:[%s2102 + $0xda] sm:$0xff]
      %v2324 = vld [vmem:[%s2102 + $0xe2] sm:$0xff]
      %v2325 = vld [vmem:[%s2102 + $0xf2] sm:$0xff]
      %v2326 = vld [vmem:[%s2102 + $0xfa] sm:$0xff]
      %v2327 = vld [vmem:[%s2102 + $0x10a] sm:$0xff]
      %v2328 = vld [vmem:[%s2102 + $0x112] sm:$0xff]
      %v2329 = vld [vmem:[%s2102 + $0x122] sm:$0xff]
      %v2330 = vld [vmem:[%s2102 + $0x12a] sm:$0xff]
      %v2331 = vld [vmem:[%s2102 + $0x13a] sm:$0xff]
      %v2332 = vld [vmem:[%s2102 + $0x142] sm:$0xff]
      %v2333 = vld [vmem:[%s2102 + $0x152] sm:$0xff]
      %v2334 = vld [vmem:[%s2102 + $0x15a] sm:$0xff]
      %v2335 = vld [vmem:[%s2102 + $0x16a] sm:$0xff]
      %v2336 = vld [vmem:[%s2102 + $0x172] sm:$0xff]
      %v2337 = vld [vmem:[%s3 + $0x8] sm:$0x1]
      %v2338 = vlaneseq
      %v2339 = vshrl.u32 %v2338, 7
      %v2340 = vsub.s32 0, %v2339
      %v2341 = vrot.slane %v2337, %v2340
      %v2342 = vmul.f32 %v2305, %v2341
      %v2343 = vmul.f32 %v2306, %v2341
      %v2344 = vmul.f32 %v2307, %v2341
      %v2345 = vmul.f32 %v2308, %v2341
      %v2346 = vmul.f32 %v2309, %v2341
      %v2347 = vmul.f32 %v2310, %v2341
      %v2348 = vmul.f32 %v2311, %v2341
      %v2349 = vmul.f32 %v2312, %v2341
      %v2350 = vmul.f32 %v2313, %v2341
      %v2351 = vmul.f32 %v2314, %v2341
      %v2352 = vmul.f32 %v2315, %v2341
      %v2353 = vmul.f32 %v2316, %v2341
      %v2354 = vmul.f32 %v2317, %v2341
      %v2355 = vmul.f32 %v2318, %v2341
      %v2356 = vmul.f32 %v2319, %v2341
      %v2357 = vmul.f32 %v2320, %v2341
      %v2358 = vmul.f32 %v2321, %v2341
      %v2359 = vmul.f32 %v2322, %v2341
      %v2360 = vmul.f32 %v2323, %v2341
      %v2361 = vmul.f32 %v2324, %v2341
      %v2362 = vmul.f32 %v2325, %v2341
      %v2363 = vmul.f32 %v2326, %v2341
      %v2364 = vmul.f32 %v2327, %v2341
      %v2365 = vmul.f32 %v2328, %v2341
      %v2366 = vmul.f32 %v2329, %v2341
      %v2367 = vmul.f32 %v2330, %v2341
      %v2368 = vmul.f32 %v2331, %v2341
      %v2369 = vmul.f32 %v2332, %v2341
      %v2370 = vmul.f32 %v2333, %v2341
      %v2371 = vmul.f32 %v2334, %v2341
      %v2372 = vmul.f32 %v2335, %v2341
      %v2373 = vmul.f32 %v2336, %v2341
      %v2374 = vadd.f32 %v2273, %v2342
      %v2375 = vadd.f32 %v2274, %v2343
      %v2376 = vadd.f32 %v2275, %v2344
      %v2377 = vadd.f32 %v2276, %v2345
      %v2378 = vadd.f32 %v2277, %v2346
      %v2379 = vadd.f32 %v2278, %v2347
      %v2380 = vadd.f32 %v2279, %v2348
      %v2381 = vadd.f32 %v2280, %v2349
      %v2382 = vadd.f32 %v2281, %v2350
      %v2383 = vadd.f32 %v2282, %v2351
      %v2384 = vadd.f32 %v2283, %v2352
      %v2385 = vadd.f32 %v2284, %v2353
      %v2386 = vadd.f32 %v2285, %v2354
      %v2387 = vadd.f32 %v2286, %v2355
      %v2388 = vadd.f32 %v2287, %v2356
      %v2389 = vadd.f32 %v2288, %v2357
      %v2390 = vadd.f32 %v2289, %v2358
      %v2391 = vadd.f32 %v2290, %v2359
      %v2392 = vadd.f32 %v2291, %v2360
      %v2393 = vadd.f32 %v2292, %v2361
      %v2394 = vadd.f32 %v2293, %v2362
      %v2395 = vadd.f32 %v2294, %v2363
      %v2396 = vadd.f32 %v2295, %v2364
      %v2397 = vadd.f32 %v2296, %v2365
      %v2398 = vadd.f32 %v2297, %v2366
      %v2399 = vadd.f32 %v2298, %v2367
      %v2400 = vadd.f32 %v2299, %v2368
      %v2401 = vadd.f32 %v2300, %v2369
      %v2402 = vadd.f32 %v2301, %v2370
      %v2403 = vadd.f32 %v2302, %v2371
      %v2404 = vadd.f32 %v2303, %v2372
      %v2405 = vadd.f32 %v2304, %v2373
      %v2406 = vld [vmem:[%s4] sm:$0x1]
      %v2408 = vlaneseq
      %v2409 = vshrl.u32 %v2408, 7
      %v2410 = vsub.s32 0, %v2409
      %v2411 = vrot.slane %v2406, %v2410
      %v2413 = vadd.f32 %v2374, %v2411
      %v2414 = vadd.f32 %v2375, %v2411
      %v2415 = vadd.f32 %v2376, %v2411
      %v2416 = vadd.f32 %v2377, %v2411
      %v2417 = vadd.f32 %v2378, %v2411
      %v2418 = vadd.f32 %v2379, %v2411
      %v2419 = vadd.f32 %v2380, %v2411
      %v2420 = vadd.f32 %v2381, %v2411
      %v2421 = vadd.f32 %v2382, %v2411
      %v2422 = vadd.f32 %v2383, %v2411
      %v2423 = vadd.f32 %v2384, %v2411
      %v2424 = vadd.f32 %v2385, %v2411
      %v2425 = vadd.f32 %v2386, %v2411
      %v2426 = vadd.f32 %v2387, %v2411
      %v2427 = vadd.f32 %v2388, %v2411
      %v2428 = vadd.f32 %v2389, %v2411
      %v2429 = vadd.f32 %v2390, %v2411
      %v2430 = vadd.f32 %v2391, %v2411
      %v2431 = vadd.f32 %v2392, %v2411
      %v2432 = vadd.f32 %v2393, %v2411
      %v2433 = vadd.f32 %v2394, %v2411
      %v2434 = vadd.f32 %v2395, %v2411
      %v2435 = vadd.f32 %v2396, %v2411
      %v2436 = vadd.f32 %v2397, %v2411
      %v2437 = vadd.f32 %v2398, %v2411
      %v2438 = vadd.f32 %v2399, %v2411
      %v2439 = vadd.f32 %v2400, %v2411
      %v2440 = vadd.f32 %v2401, %v2411
      %v2441 = vadd.f32 %v2402, %v2411
      %v2442 = vadd.f32 %v2403, %v2411
      %v2443 = vadd.f32 %v2404, %v2411
      %v2444 = vadd.f32 %v2405, %v2411
      %v2445 = vadd.f32 %v2413, 3.0
      %v2446 = vadd.f32 %v2414, 3.0
      %v2447 = vadd.f32 %v2415, 3.0
      %v2448 = vadd.f32 %v2416, 3.0
      %v2449 = vadd.f32 %v2417, 3.0
      %v2450 = vadd.f32 %v2418, 3.0
      %v2451 = vadd.f32 %v2419, 3.0
      %v2452 = vadd.f32 %v2420, 3.0
      %v2453 = vadd.f32 %v2421, 3.0
      %v2454 = vadd.f32 %v2422, 3.0
      %v2455 = vadd.f32 %v2423, 3.0
      %v2456 = vadd.f32 %v2424, 3.0
      %v2457 = vadd.f32 %v2425, 3.0
      %v2458 = vadd.f32 %v2426, 3.0
      %v2459 = vadd.f32 %v2427, 3.0
      %v2460 = vadd.f32 %v2428, 3.0
      %v2461 = vadd.f32 %v2429, 3.0
      %v2462 = vadd.f32 %v2430, 3.0
      %v2463 = vadd.f32 %v2431, 3.0
      %v2464 = vadd.f32 %v2432, 3.0
      %v2465 = vadd.f32 %v2433, 3.0
      %v2466 = vadd.f32 %v2434, 3.0
      %v2467 = vadd.f32 %v2435, 3.0
      %v2468 = vadd.f32 %v2436, 3.0
      %v2469 = vadd.f32 %v2437, 3.0
      %v2470 = vadd.f32 %v2438, 3.0
      %v2471 = vadd.f32 %v2439, 3.0
      %v2472 = vadd.f32 %v2440, 3.0
      %v2473 = vadd.f32 %v2441, 3.0
      %v2474 = vadd.f32 %v2442, 3.0
      %v2475 = vadd.f32 %v2443, 3.0
      %v2476 = vadd.f32 %v2444, 3.0
      %v2477 = vmax.f32 %v2445, 0.0
      %v2478 = vmax.f32 %v2446, 0.0
      %v2479 = vmax.f32 %v2447, 0.0
      %v2480 = vmax.f32 %v2448, 0.0
      %v2481 = vmax.f32 %v2449, 0.0
      %v2482 = vmax.f32 %v2450, 0.0
      %v2483 = vmax.f32 %v2451, 0.0
      %v2484 = vmax.f32 %v2452, 0.0
      %v2485 = vmax.f32 %v2453, 0.0
      %v2486 = vmax.f32 %v2454, 0.0
      %v2487 = vmax.f32 %v2455, 0.0
      %v2488 = vmax.f32 %v2456, 0.0
      %v2489 = vmax.f32 %v2457, 0.0
      %v2490 = vmax.f32 %v2458, 0.0
      %v2491 = vmax.f32 %v2459, 0.0
      %v2492 = vmax.f32 %v2460, 0.0
      %v2493 = vmax.f32 %v2461, 0.0
      %v2494 = vmax.f32 %v2462, 0.0
      %v2495 = vmax.f32 %v2463, 0.0
      %v2496 = vmax.f32 %v2464, 0.0
      %v2497 = vmax.f32 %v2465, 0.0
      %v2498 = vmax.f32 %v2466, 0.0
      %v2499 = vmax.f32 %v2467, 0.0
      %v2500 = vmax.f32 %v2468, 0.0
      %v2501 = vmax.f32 %v2469, 0.0
      %v2502 = vmax.f32 %v2470, 0.0
      %v2503 = vmax.f32 %v2471, 0.0
      %v2504 = vmax.f32 %v2472, 0.0
      %v2505 = vmax.f32 %v2473, 0.0
      %v2506 = vmax.f32 %v2474, 0.0
      %v2507 = vmax.f32 %v2475, 0.0
      %v2508 = vmax.f32 %v2476, 0.0
      %v2509 = vmin.f32 %v2477, 6.0
      %v2510 = vmin.f32 %v2478, 6.0
      %v2511 = vmin.f32 %v2479, 6.0
      %v2512 = vmin.f32 %v2480, 6.0
      %v2513 = vmin.f32 %v2481, 6.0
      %v2514 = vmin.f32 %v2482, 6.0
      %v2515 = vmin.f32 %v2483, 6.0
      %v2516 = vmin.f32 %v2484, 6.0
      %v2517 = vmin.f32 %v2485, 6.0
      %v2518 = vmin.f32 %v2486, 6.0
      %v2519 = vmin.f32 %v2487, 6.0
      %v2520 = vmin.f32 %v2488, 6.0
      %v2521 = vmin.f32 %v2489, 6.0
      %v2522 = vmin.f32 %v2490, 6.0
      %v2523 = vmin.f32 %v2491, 6.0
      %v2524 = vmin.f32 %v2492, 6.0
      %v2525 = vmin.f32 %v2493, 6.0
      %v2526 = vmin.f32 %v2494, 6.0
      %v2527 = vmin.f32 %v2495, 6.0
      %v2528 = vmin.f32 %v2496, 6.0
      %v2529 = vmin.f32 %v2497, 6.0
      %v2530 = vmin.f32 %v2498, 6.0
      %v2531 = vmin.f32 %v2499, 6.0
      %v2532 = vmin.f32 %v2500, 6.0
      %v2533 = vmin.f32 %v2501, 6.0
      %v2534 = vmin.f32 %v2502, 6.0
      %v2535 = vmin.f32 %v2503, 6.0
      %v2536 = vmin.f32 %v2504, 6.0
      %v2537 = vmin.f32 %v2505, 6.0
      %v2538 = vmin.f32 %v2506, 6.0
      %v2539 = vmin.f32 %v2507, 6.0
      %v2540 = vmin.f32 %v2508, 6.0
      %v2541 = vmul.f32 %v2509, %v1342
      %v2542 = vmul.f32 %v2510, %v1342
      %v2543 = vmul.f32 %v2511, %v1342
      %v2544 = vmul.f32 %v2512, %v1342
      %v2545 = vmul.f32 %v2513, %v1342
      %v2546 = vmul.f32 %v2514, %v1342
      %v2547 = vmul.f32 %v2515, %v1342
      %v2548 = vmul.f32 %v2516, %v1342
      %v2549 = vmul.f32 %v2517, %v1342
      %v2550 = vmul.f32 %v2518, %v1342
      %v2551 = vmul.f32 %v2519, %v1342
      %v2552 = vmul.f32 %v2520, %v1342
      %v2553 = vmul.f32 %v2521, %v1342
      %v2554 = vmul.f32 %v2522, %v1342
      %v2555 = vmul.f32 %v2523, %v1342
      %v2556 = vmul.f32 %v2524, %v1342
      %v2557 = vmul.f32 %v2525, %v1342
      %v2558 = vmul.f32 %v2526, %v1342
      %v2559 = vmul.f32 %v2527, %v1342
      %v2560 = vmul.f32 %v2528, %v1342
      %v2561 = vmul.f32 %v2529, %v1342
      %v2562 = vmul.f32 %v2530, %v1342
      %v2563 = vmul.f32 %v2531, %v1342
      %v2564 = vmul.f32 %v2532, %v1342
      %v2565 = vmul.f32 %v2533, %v1342
      %v2566 = vmul.f32 %v2534, %v1342
      %v2567 = vmul.f32 %v2535, %v1342
      %v2568 = vmul.f32 %v2536, %v1342
      %v2569 = vmul.f32 %v2537, %v1342
      %v2570 = vmul.f32 %v2538, %v1342
      %v2571 = vmul.f32 %v2539, %v1342
      %v2572 = vmul.f32 %v2540, %v1342
      %v2573 = vmul.f32 %v2413, %v2541
      %v2574 = vmul.f32 %v2414, %v2542
      %v2575 = vmul.f32 %v2415, %v2543
      %v2576 = vmul.f32 %v2416, %v2544
      %v2577 = vmul.f32 %v2417, %v2545
      %v2578 = vmul.f32 %v2418, %v2546
      %v2579 = vmul.f32 %v2419, %v2547
      %v2580 = vmul.f32 %v2420, %v2548
      %v2581 = vmul.f32 %v2421, %v2549
      %v2582 = vmul.f32 %v2422, %v2550
      %v2583 = vmul.f32 %v2423, %v2551
      %v2584 = vmul.f32 %v2424, %v2552
      %v2585 = vmul.f32 %v2425, %v2553
      %v2586 = vmul.f32 %v2426, %v2554
      %v2587 = vmul.f32 %v2427, %v2555
      %v2588 = vmul.f32 %v2428, %v2556
      %v2589 = vmul.f32 %v2429, %v2557
      %v2590 = vmul.f32 %v2430, %v2558
      %v2591 = vmul.f32 %v2431, %v2559
      %v2592 = vmul.f32 %v2432, %v2560
      %v2593 = vmul.f32 %v2433, %v2561
      %v2594 = vmul.f32 %v2434, %v2562
      %v2595 = vmul.f32 %v2435, %v2563
      %v2596 = vmul.f32 %v2436, %v2564
      %v2597 = vmul.f32 %v2437, %v2565
      %v2598 = vmul.f32 %v2438, %v2566
      %v2599 = vmul.f32 %v2439, %v2567
      %v2600 = vmul.f32 %v2440, %v2568
      %v2601 = vmul.f32 %v2441, %v2569
      %v2602 = vmul.f32 %v2442, %v2570
      %v2603 = vmul.f32 %v2443, %v2571
      %v2604 = vmul.f32 %v2444, %v2572
      %v2605 = vsel %vm1407, %v2573, 0.0
      %v2606 = vsel %vm1407, %v2574, 0.0
      %v2607 = vadd.f32 %v2605, %v2606
      %v2608 = vsel %vm1407, %v2575, 0.0
      %v2609 = vadd.f32 %v2607, %v2608
      %v2610 = vsel %vm1407, %v2576, 0.0
      %v2611 = vadd.f32 %v2609, %v2610
      %v2612 = vsel %vm1407, %v2577, 0.0
      %v2613 = vadd.f32 %v2611, %v2612
      %v2614 = vsel %vm1407, %v2578, 0.0
      %v2615 = vadd.f32 %v2613, %v2614
      %v2616 = vsel %vm1407, %v2579, 0.0
      %v2617 = vadd.f32 %v2615, %v2616
      %v2618 = vsel %vm1407, %v2580, 0.0
      %v2619 = vadd.f32 %v2617, %v2618
      %v2620 = vsel %vm1407, %v2581, 0.0
      %v2621 = vadd.f32 %v2619, %v2620
      %v2622 = vsel %vm1407, %v2582, 0.0
      %v2623 = vadd.f32 %v2621, %v2622
      %v2624 = vsel %vm1407, %v2583, 0.0
      %v2625 = vadd.f32 %v2623, %v2624
      %v2626 = vsel %vm1407, %v2584, 0.0
      %v2627 = vadd.f32 %v2625, %v2626
      %v2628 = vsel %vm1407, %v2585, 0.0
      %v2629 = vadd.f32 %v2627, %v2628
      %v2630 = vsel %vm1407, %v2586, 0.0
      %v2631 = vadd.f32 %v2629, %v2630
      %v2632 = vsel %vm1407, %v2587, 0.0
      %v2633 = vadd.f32 %v2631, %v2632
      %v2634 = vsel %vm1407, %v2588, 0.0
      %v2635 = vadd.f32 %v2633, %v2634
      %v2636 = vsel %vm1407, %v2589, 0.0
      %v2637 = vadd.f32 %v2635, %v2636
      %v2638 = vsel %vm1407, %v2590, 0.0
      %v2639 = vadd.f32 %v2637, %v2638
      %v2640 = vsel %vm1407, %v2591, 0.0
      %v2641 = vadd.f32 %v2639, %v2640
      %v2642 = vsel %vm1407, %v2592, 0.0
      %v2643 = vadd.f32 %v2641, %v2642
      %v2644 = vsel %vm1407, %v2593, 0.0
      %v2645 = vadd.f32 %v2643, %v2644
      %v2646 = vsel %vm1407, %v2594, 0.0
      %v2647 = vadd.f32 %v2645, %v2646
      %v2648 = vsel %vm1407, %v2595, 0.0
      %v2649 = vadd.f32 %v2647, %v2648
      %v2650 = vsel %vm1407, %v2596, 0.0
      %v2651 = vadd.f32 %v2649, %v2650
      %v2652 = vsel %vm1407, %v2597, 0.0
      %v2653 = vadd.f32 %v2651, %v2652
      %v2654 = vsel %vm1407, %v2598, 0.0
      %v2655 = vadd.f32 %v2653, %v2654
      %v2656 = vsel %vm1407, %v2599, 0.0
      %v2657 = vadd.f32 %v2655, %v2656
      %v2658 = vsel %vm1407, %v2600, 0.0
      %v2659 = vadd.f32 %v2657, %v2658
      %v2660 = vsel %vm1407, %v2601, 0.0
      %v2661 = vadd.f32 %v2659, %v2660
      %v2662 = vsel %vm1407, %v2602, 0.0
      %v2663 = vadd.f32 %v2661, %v2662
      %v2664 = vsel %vm1407, %v2603, 0.0
      %v2665 = vadd.f32 %v2663, %v2664
      %v2666 = vsel %vm1407, %v2604, 0.0
      %v2667 = vadd.f32 %v2665, %v2666
      %v2668 = vrot.slane %v2667, 4
      %v2669 = vadd.f32 %v2667, %v2668
      %v2670 = vrot.slane %v2669, 2
      %v2671 = vadd.f32 %v2669, %v2670
      %v2672 = vrot.slane %v2671, 1
      %v2673 = vadd.f32 %v2671, %v2672
      %v2674 = vrcp.pop 256.0
      %v2675 = vmul.f32 %v2673, %v2674
      %v2676 = vld [vmem:[%s5] sm:$0xff]
      %v2677 = vld [vmem:[%s5 + $0x8] sm:$0xff]
      %v2678 = vld [vmem:[%s5 + $0x10] sm:$0xff]
      %v2679 = vld [vmem:[%s5 + $0x18] sm:$0xff]
      %v2680 = vld [vmem:[%s6] sm:$0x1]
      %v2682 = vsel %vm1407, %v2675, 0
      %2684 = vmatprep.subr.mxu0 0.0
      %2685 = vmatpush1.msra.mxu0 %v2676
      %2686 = vmatprep.subr.mxu0 0.0
      %2687 = vmatpush1.msra.mxu0 %v2677
      %2688 = vmatprep.subr.mxu0 0.0
      %2689 = vmatpush1.msra.mxu0 %v2678
      %2690 = vmatprep.subr.mxu0 0.0
      %2691 = vmatpush1.msra.mxu0 %v2679
      %2692 = vmatprep.subr.mxu0 0.0
      %2693 = vmatpush1.msra.mxu0 0.0
      %2694 = vmatprep.subr.mxu0 0.0
      %2695 = vmatpush1.msra.mxu0 0.0
      %2696 = vmatprep.subr.mxu0 0.0
      %2697 = vmatpush1.msra.mxu0 0.0
      %2698 = vmatprep.subr.mxu0 0.0
      %2699 = vmatpush1.msra.mxu0 0.0
      %2700 = vmatprep.subr.mxu0 0.0
      %2701 = vmatpush1.msra.mxu0 0.0
      %2702 = vmatprep.subr.mxu0 0.0
      %2703 = vmatpush1.msra.mxu0 0.0
      %2704 = vmatprep.subr.mxu0 0.0
      %2705 = vmatpush1.msra.mxu0 0.0
      %2706 = vmatprep.subr.mxu0 0.0
      %2707 = vmatpush1.msra.mxu0 0.0
      %2708 = vmatprep.subr.mxu0 0.0
      %2709 = vmatpush1.msra.mxu0 0.0
      %2710 = vmatprep.subr.mxu0 0.0
      %2711 = vmatpush1.msra.mxu0 0.0
      %2712 = vmatprep.subr.mxu0 0.0
      %2713 = vmatpush1.msra.mxu0 0.0
      %2714 = vmatprep.subr.mxu0 0.0
      %2715 = vmatpush1.msra.mxu0 0.0
      %2716 = vmatprep.subr.mxu0 0.0
      %2717 = vmatpush1.msra.mxu0 0.0
      %2718 = vmatprep.subr.mxu0 0.0
      %2719 = vmatpush1.msra.mxu0 0.0
      %2720 = vmatprep.subr.mxu0 0.0
      %2721 = vmatpush1.msra.mxu0 0.0
      %2722 = vmatprep.subr.mxu0 0.0
      %2723 = vmatpush1.msra.mxu0 0.0
      %2724 = vmatprep.subr.mxu0 0.0
      %2725 = vmatpush1.msra.mxu0 0.0
      %2726 = vmatprep.subr.mxu0 0.0
      %2727 = vmatpush1.msra.mxu0 0.0
      %2728 = vmatprep.subr.mxu0 0.0
      %2729 = vmatpush1.msra.mxu0 0.0
      %2730 = vmatprep.subr.mxu0 0.0
      %2731 = vmatpush1.msra.mxu0 0.0
      %2732 = vmatprep.subr.mxu0 0.0
      %2733 = vmatpush1.msra.mxu0 0.0
      %2734 = vmatprep.subr.mxu0 0.0
      %2735 = vmatpush1.msra.mxu0 0.0
      %2736 = vmatprep.subr.mxu0 0.0
      %2737 = vmatpush1.msra.mxu0 0.0
      %2738 = vmatprep.subr.mxu0 0.0
      %2739 = vmatpush1.msra.mxu0 0.0
      %2740 = vmatprep.subr.mxu0 0.0
      %2741 = vmatpush1.msra.mxu0 0.0
      %2742 = vmatprep.subr.mxu0 0.0
      %2743 = vmatpush1.msra.mxu0 0.0
      %2744 = vmatprep.subr.mxu0 0.0
      %2745 = vmatpush1.msra.mxu0 0.0
      %2746 = vmatprep.subr.mxu0 0.0
      %2747 = vmatpush1.msra.mxu0 0.0
      %2748 = vmatprep.mubr.f32.mxu0 0.0
      %2749 = vmatmul.mubr.f32.gmra.mrb[0].mxu0 %v2682
      %v2750 = vpop.f32.mrb[0].mxu0
      %v2751 = vadd.f32 %v2680, %v2750
      %v2752 = vpop.f32.mrb[0].mxu0
      %2753 = vdwg.mxu0
      %v2754 = vmax.f32 %v2751, 0.0
      %v2755 = vld [vmem:[%s7] sm:$0xff]
      %v2756 = vld [vmem:[%s8] sm:$0x1]
      %vm2757 = vcmask 64512
      %v2759 = vsel %vm2757, %v2754, 0
      %2761 = vmatprep.subr.mxu0 0.0
      %2762 = vmatpush1.msra.mxu0 %v2755
      %2763 = vmatprep.subr.mxu0 0.0
      %2764 = vmatpush1.msra.mxu0 0.0
      %2765 = vmatprep.subr.mxu0 0.0
      %2766 = vmatpush1.msra.mxu0 0.0
      %2767 = vmatprep.subr.mxu0 0.0
      %2768 = vmatpush1.msra.mxu0 0.0
      %2769 = vmatprep.subr.mxu0 0.0
      %2770 = vmatpush1.msra.mxu0 0.0
      %2771 = vmatprep.subr.mxu0 0.0
      %2772 = vmatpush1.msra.mxu0 0.0
      %2773 = vmatprep.subr.mxu0 0.0
      %2774 = vmatpush1.msra.mxu0 0.0
      %2775 = vmatprep.subr.mxu0 0.0
      %2776 = vmatpush1.msra.mxu0 0.0
      %2777 = vmatprep.subr.mxu0 0.0
      %2778 = vmatpush1.msra.mxu0 0.0
      %2779 = vmatprep.subr.mxu0 0.0
      %2780 = vmatpush1.msra.mxu0 0.0
      %2781 = vmatprep.subr.mxu0 0.0
      %2782 = vmatpush1.msra.mxu0 0.0
      %2783 = vmatprep.subr.mxu0 0.0
      %2784 = vmatpush1.msra.mxu0 0.0
      %2785 = vmatprep.subr.mxu0 0.0
      %2786 = vmatpush1.msra.mxu0 0.0
      %2787 = vmatprep.subr.mxu0 0.0
      %2788 = vmatpush1.msra.mxu0 0.0
      %2789 = vmatprep.subr.mxu0 0.0
      %2790 = vmatpush1.msra.mxu0 0.0
      %2791 = vmatprep.subr.mxu0 0.0
      %2792 = vmatpush1.msra.mxu0 0.0
      %2793 = vmatprep.subr.mxu0 0.0
      %2794 = vmatpush1.msra.mxu0 0.0
      %2795 = vmatprep.subr.mxu0 0.0
      %2796 = vmatpush1.msra.mxu0 0.0
      %2797 = vmatprep.subr.mxu0 0.0
      %2798 = vmatpush1.msra.mxu0 0.0
      %2799 = vmatprep.subr.mxu0 0.0
      %2800 = vmatpush1.msra.mxu0 0.0
      %2801 = vmatprep.subr.mxu0 0.0
      %2802 = vmatpush1.msra.mxu0 0.0
      %2803 = vmatprep.subr.mxu0 0.0
      %2804 = vmatpush1.msra.mxu0 0.0
      %2805 = vmatprep.subr.mxu0 0.0
      %2806 = vmatpush1.msra.mxu0 0.0
      %2807 = vmatprep.subr.mxu0 0.0
      %2808 = vmatpush1.msra.mxu0 0.0
      %2809 = vmatprep.subr.mxu0 0.0
      %2810 = vmatpush1.msra.mxu0 0.0
      %2811 = vmatprep.subr.mxu0 0.0
      %2812 = vmatpush1.msra.mxu0 0.0
      %2813 = vmatprep.subr.mxu0 0.0
      %2814 = vmatpush1.msra.mxu0 0.0
      %2815 = vmatprep.subr.mxu0 0.0
      %2816 = vmatpush1.msra.mxu0 0.0
      %2817 = vmatprep.subr.mxu0 0.0
      %2818 = vmatpush1.msra.mxu0 0.0
      %2819 = vmatprep.subr.mxu0 0.0
      %2820 = vmatpush1.msra.mxu0 0.0
      %2821 = vmatprep.subr.mxu0 0.0
      %2822 = vmatpush1.msra.mxu0 0.0
      %2823 = vmatprep.subr.mxu0 0.0
      %2824 = vmatpush1.msra.mxu0 0.0
      %2825 = vmatprep.mubr.f32.mxu0 0.0
      %2826 = vmatmul.mubr.f32.gmra.mrb[0].mxu0 %v2759
      %v2827 = vpop.f32.mrb[0].mxu0
      %v2828 = vadd.f32 %v2756, %v2827
      %v2829 = vpop.f32.mrb[0].mxu0
      %2830 = vdwg.mxu0
      %v2831 = vadd.f32 %v2828, 3.0
      %v2832 = vmax.f32 %v2831, 0.0
      %v2833 = vmin.f32 %v2832, 6.0
      %v2834 = vmul.f32 %v2833, %v1342
      %v2835 = vlaneseq
      %v2836 = vshrl.u32 %v2835, 7
      %v2837 = vsub.s32 0, %v2836
      %v2838 = vrot.slane %v2834, %v2837
      %v2839 = vmul.f32 %v2573, %v2838
      %v2840 = vmul.f32 %v2574, %v2838
      %v2841 = vmul.f32 %v2575, %v2838
      %v2842 = vmul.f32 %v2576, %v2838
      %v2843 = vmul.f32 %v2577, %v2838
      %v2844 = vmul.f32 %v2578, %v2838
      %v2845 = vmul.f32 %v2579, %v2838
      %v2846 = vmul.f32 %v2580, %v2838
      %v2847 = vmul.f32 %v2581, %v2838
      %v2848 = vmul.f32 %v2582, %v2838
      %v2849 = vmul.f32 %v2583, %v2838
      %v2850 = vmul.f32 %v2584, %v2838
      %v2851 = vmul.f32 %v2585, %v2838
      %v2852 = vmul.f32 %v2586, %v2838
      %v2853 = vmul.f32 %v2587, %v2838
      %v2854 = vmul.f32 %v2588, %v2838
      %v2855 = vmul.f32 %v2589, %v2838
      %v2856 = vmul.f32 %v2590, %v2838
      %v2857 = vmul.f32 %v2591, %v2838
      %v2858 = vmul.f32 %v2592, %v2838
      %v2859 = vmul.f32 %v2593, %v2838
      %v2860 = vmul.f32 %v2594, %v2838
      %v2861 = vmul.f32 %v2595, %v2838
      %v2862 = vmul.f32 %v2596, %v2838
      %v2863 = vmul.f32 %v2597, %v2838
      %v2864 = vmul.f32 %v2598, %v2838
      %v2865 = vmul.f32 %v2599, %v2838
      %v2866 = vmul.f32 %v2600, %v2838
      %v2867 = vmul.f32 %v2601, %v2838
      %v2868 = vmul.f32 %v2602, %v2838
      %v2869 = vmul.f32 %v2603, %v2838
      %v2870 = vmul.f32 %v2604, %v2838
      %v2871 = vld [vmem:[%s9] sm:$0xff]
      %v2872 = vld [vmem:[%s9 + $0x8] sm:$0xff]
      %v2873 = vld [vmem:[%s9 + $0x10] sm:$0xff]
      %v2874 = vld [vmem:[%s9 + $0x18] sm:$0xff]
      %v2875 = vld [vmem:[%s10] sm:$0x1]
      %v2877 = vlaneseq
      %v2878 = vshrl.u32 %v2877, 7
      %v2879 = vsub.s32 0, %v2878
      %v2880 = vrot.slane %v2875, %v2879
      %v2883 = vsel %vm1407, %v2839, 0
      %v2886 = vsel %vm1407, %v2840, 0
      %v2889 = vsel %vm1407, %v2841, 0
      %v2892 = vsel %vm1407, %v2842, 0
      %v2895 = vsel %vm1407, %v2843, 0
      %v2898 = vsel %vm1407, %v2844, 0
      %v2901 = vsel %vm1407, %v2845, 0
      %v2904 = vsel %vm1407, %v2846, 0
      %v2907 = vsel %vm1407, %v2847, 0
      %v2910 = vsel %vm1407, %v2848, 0
      %v2913 = vsel %vm1407, %v2849, 0
      %v2916 = vsel %vm1407, %v2850, 0
      %v2919 = vsel %vm1407, %v2851, 0
      %v2922 = vsel %vm1407, %v2852, 0
      %v2925 = vsel %vm1407, %v2853, 0
      %v2928 = vsel %vm1407, %v2854, 0
      %v2931 = vsel %vm1407, %v2855, 0
      %v2934 = vsel %vm1407, %v2856, 0
      %v2937 = vsel %vm1407, %v2857, 0
      %v2940 = vsel %vm1407, %v2858, 0
      %v2943 = vsel %vm1407, %v2859, 0
      %v2946 = vsel %vm1407, %v2860, 0
      %v2949 = vsel %vm1407, %v2861, 0
      %v2952 = vsel %vm1407, %v2862, 0
      %v2955 = vsel %vm1407, %v2863, 0
      %v2958 = vsel %vm1407, %v2864, 0
      %v2961 = vsel %vm1407, %v2865, 0
      %v2964 = vsel %vm1407, %v2866, 0
      %v2967 = vsel %vm1407, %v2867, 0
      %v2970 = vsel %vm1407, %v2868, 0
      %v2973 = vsel %vm1407, %v2869, 0
      %v2976 = vsel %vm1407, %v2870, 0
      %2978 = vmatprep.subr.mxu0 0.0
      %2979 = vmatpush1.msra.mxu0 %v2871
      %2980 = vmatprep.subr.mxu0 0.0
      %2981 = vmatpush1.msra.mxu0 %v2872
      %2982 = vmatprep.subr.mxu0 0.0
      %2983 = vmatpush1.msra.mxu0 %v2873
      %2984 = vmatprep.subr.mxu0 0.0
      %2985 = vmatpush1.msra.mxu0 %v2874
      %2986 = vmatprep.subr.mxu0 0.0
      %2987 = vmatpush1.msra.mxu0 0.0
      %2988 = vmatprep.subr.mxu0 0.0
      %2989 = vmatpush1.msra.mxu0 0.0
      %2990 = vmatprep.subr.mxu0 0.0
      %2991 = vmatpush1.msra.mxu0 0.0
      %2992 = vmatprep.subr.mxu0 0.0
      %2993 = vmatpush1.msra.mxu0 0.0
      %2994 = vmatprep.subr.mxu0 0.0
      %2995 = vmatpush1.msra.mxu0 0.0
      %2996 = vmatprep.subr.mxu0 0.0
      %2997 = vmatpush1.msra.mxu0 0.0
      %2998 = vmatprep.subr.mxu0 0.0
      %2999 = vmatpush1.msra.mxu0 0.0
      %3000 = vmatprep.subr.mxu0 0.0
      %3001 = vmatpush1.msra.mxu0 0.0
      %3002 = vmatprep.subr.mxu0 0.0
      %3003 = vmatpush1.msra.mxu0 0.0
      %3004 = vmatprep.subr.mxu0 0.0
      %3005 = vmatpush1.msra.mxu0 0.0
      %3006 = vmatprep.subr.mxu0 0.0
      %3007 = vmatpush1.msra.mxu0 0.0
      %3008 = vmatprep.subr.mxu0 0.0
      %3009 = vmatpush1.msra.mxu0 0.0
      %3010 = vmatprep.subr.mxu0 0.0
      %3011 = vmatpush1.msra.mxu0 0.0
      %3012 = vmatprep.subr.mxu0 0.0
      %3013 = vmatpush1.msra.mxu0 0.0
      %3014 = vmatprep.subr.mxu0 0.0
      %3015 = vmatpush1.msra.mxu0 0.0
      %3016 = vmatprep.subr.mxu0 0.0
      %3017 = vmatpush1.msra.mxu0 0.0
      %3018 = vmatprep.subr.mxu0 0.0
      %3019 = vmatpush1.msra.mxu0 0.0
      %3020 = vmatprep.subr.mxu0 0.0
      %3021 = vmatpush1.msra.mxu0 0.0
      %3022 = vmatprep.subr.mxu0 0.0
      %3023 = vmatpush1.msra.mxu0 0.0
      %3024 = vmatprep.subr.mxu0 0.0
      %3025 = vmatpush1.msra.mxu0 0.0
      %3026 = vmatprep.subr.mxu0 0.0
      %3027 = vmatpush1.msra.mxu0 0.0
      %3028 = vmatprep.subr.mxu0 0.0
      %3029 = vmatpush1.msra.mxu0 0.0
      %3030 = vmatprep.subr.mxu0 0.0
      %3031 = vmatpush1.msra.mxu0 0.0
      %3032 = vmatprep.subr.mxu0 0.0
      %3033 = vmatpush1.msra.mxu0 0.0
      %3034 = vmatprep.subr.mxu0 0.0
      %3035 = vmatpush1.msra.mxu0 0.0
      %3036 = vmatprep.subr.mxu0 0.0
      %3037 = vmatpush1.msra.mxu0 0.0
      %3038 = vmatprep.subr.mxu0 0.0
      %3039 = vmatpush1.msra.mxu0 0.0
      %3040 = vmatprep.subr.mxu0 0.0
      %3041 = vmatpush1.msra.mxu0 0.0
      %3042 = vmatprep.mubr.f32.mxu0 0.0
      %3043 = vmatmul.mubr.f32.gmra.mrb[0].mxu0 %v2883
      %v3044 = vpop.f32.mrb[0].mxu0
      %v3045 = vadd.f32 %v2880, %v3044
      %v3046 = vpop.f32.mrb[0].mxu0
      %3047 = vmatprep.mubr.f32.mxu0 0.0
      %3048 = vmatmul.mubr.f32.gmra.mrb[0].mxu0 %v2886
      %v3049 = vpop.f32.mrb[0].mxu0
      %v3050 = vadd.f32 %v2880, %v3049
      %v3051 = vpop.f32.mrb[0].mxu0
      %3052 = vmatprep.mubr.f32.mxu0 0.0
      %3053 = vmatmul.mubr.f32.gmra.mrb[0].mxu0 %v2889
      %v3054 = vpop.f32.mrb[0].mxu0
      %v3055 = vadd.f32 %v2880, %v3054
      %v3056 = vpop.f32.mrb[0].mxu0
      %3057 = vmatprep.mubr.f32.mxu0 0.0
      %3058 = vmatmul.mubr.f32.gmra.mrb[0].mxu0 %v2892
      %v3059 = vpop.f32.mrb[0].mxu0
      %v3060 = vadd.f32 %v2880, %v3059
      %v3061 = vpop.f32.mrb[0].mxu0
      %3062 = vmatprep.mubr.f32.mxu0 0.0
      %3063 = vmatmul.mubr.f32.gmra.mrb[0].mxu0 %v2895
      %v3064 = vpop.f32.mrb[0].mxu0
      %v3065 = vadd.f32 %v2880, %v3064
      %v3066 = vpop.f32.mrb[0].mxu0
      %3067 = vmatprep.mubr.f32.mxu0 0.0
      %3068 = vmatmul.mubr.f32.gmra.mrb[0].mxu0 %v2898
      %v3069 = vpop.f32.mrb[0].mxu0
      %v3070 = vadd.f32 %v2880, %v3069
      %v3071 = vpop.f32.mrb[0].mxu0
      %3072 = vmatprep.mubr.f32.mxu0 0.0
      %3073 = vmatmul.mubr.f32.gmra.mrb[0].mxu0 %v2901
      %v3074 = vpop.f32.mrb[0].mxu0
      %v3075 = vadd.f32 %v2880, %v3074
      %v3076 = vpop.f32.mrb[0].mxu0
      %3077 = vmatprep.mubr.f32.mxu0 0.0
      %3078 = vmatmul.mubr.f32.gmra.mrb[0].mxu0 %v2904
      %v3079 = vpop.f32.mrb[0].mxu0
      %v3080 = vadd.f32 %v2880, %v3079
      %v3081 = vpop.f32.mrb[0].mxu0
      %3082 = vmatprep.mubr.f32.mxu0 0.0
      %3083 = vmatmul.mubr.f32.gmra.mrb[0].mxu0 %v2907
      %v3084 = vpop.f32.mrb[0].mxu0
      %v3085 = vadd.f32 %v2880, %v3084
      %v3086 = vpop.f32.mrb[0].mxu0
      %3087 = vmatprep.mubr.f32.mxu0 0.0
      %3088 = vmatmul.mubr.f32.gmra.mrb[0].mxu0 %v2910
      %v3089 = vpop.f32.mrb[0].mxu0
      %v3090 = vadd.f32 %v2880, %v3089
      %v3091 = vpop.f32.mrb[0].mxu0
      %3092 = vmatprep.mubr.f32.mxu0 0.0
      %3093 = vmatmul.mubr.f32.gmra.mrb[0].mxu0 %v2913
      %v3094 = vpop.f32.mrb[0].mxu0
      %v3095 = vadd.f32 %v2880, %v3094
      %v3096 = vpop.f32.mrb[0].mxu0
      %3097 = vmatprep.mubr.f32.mxu0 0.0
      %3098 = vmatmul.mubr.f32.gmra.mrb[0].mxu0 %v2916
      %v3099 = vpop.f32.mrb[0].mxu0
      %v3100 = vadd.f32 %v2880, %v3099
      %v3101 = vpop.f32.mrb[0].mxu0
      %3102 = vmatprep.mubr.f32.mxu0 0.0
      %3103 = vmatmul.mubr.f32.gmra.mrb[0].mxu0 %v2919
      %v3104 = vpop.f32.mrb[0].mxu0
      %v3105 = vadd.f32 %v2880, %v3104
      %v3106 = vpop.f32.mrb[0].mxu0
      %3107 = vmatprep.mubr.f32.mxu0 0.0
      %3108 = vmatmul.mubr.f32.gmra.mrb[0].mxu0 %v2922
      %v3109 = vpop.f32.mrb[0].mxu0
      %v3110 = vadd.f32 %v2880, %v3109
      %v3111 = vpop.f32.mrb[0].mxu0
      %3112 = vmatprep.mubr.f32.mxu0 0.0
      %3113 = vmatmul.mubr.f32.gmra.mrb[0].mxu0 %v2925
      %v3114 = vpop.f32.mrb[0].mxu0
      %v3115 = vadd.f32 %v2880, %v3114
      %v3116 = vpop.f32.mrb[0].mxu0
      %3117 = vmatprep.mubr.f32.mxu0 0.0
      %3118 = vmatmul.mubr.f32.gmra.mrb[0].mxu0 %v2928
      %v3119 = vpop.f32.mrb[0].mxu0
      %v3120 = vadd.f32 %v2880, %v3119
      %v3121 = vpop.f32.mrb[0].mxu0
      %3122 = vmatprep.mubr.f32.mxu0 0.0
      %3123 = vmatmul.mubr.f32.gmra.mrb[0].mxu0 %v2931
      %v3124 = vpop.f32.mrb[0].mxu0
      %v3125 = vadd.f32 %v2880, %v3124
      %v3126 = vpop.f32.mrb[0].mxu0
      %3127 = vmatprep.mubr.f32.mxu0 0.0
      %3128 = vmatmul.mubr.f32.gmra.mrb[0].mxu0 %v2934
      %v3129 = vpop.f32.mrb[0].mxu0
      %v3130 = vadd.f32 %v2880, %v3129
      %v3131 = vpop.f32.mrb[0].mxu0
      %3132 = vmatprep.mubr.f32.mxu0 0.0
      %3133 = vmatmul.mubr.f32.gmra.mrb[0].mxu0 %v2937
      %v3134 = vpop.f32.mrb[0].mxu0
      %v3135 = vadd.f32 %v2880, %v3134
      %v3136 = vpop.f32.mrb[0].mxu0
      %3137 = vmatprep.mubr.f32.mxu0 0.0
      %3138 = vmatmul.mubr.f32.gmra.mrb[0].mxu0 %v2940
      %v3139 = vpop.f32.mrb[0].mxu0
      %v3140 = vadd.f32 %v2880, %v3139
      %v3141 = vpop.f32.mrb[0].mxu0
      %3142 = vmatprep.mubr.f32.mxu0 0.0
      %3143 = vmatmul.mubr.f32.gmra.mrb[0].mxu0 %v2943
      %v3144 = vpop.f32.mrb[0].mxu0
      %v3145 = vadd.f32 %v2880, %v3144
      %v3146 = vpop.f32.mrb[0].mxu0
      %3147 = vmatprep.mubr.f32.mxu0 0.0
      %3148 = vmatmul.mubr.f32.gmra.mrb[0].mxu0 %v2946
      %v3149 = vpop.f32.mrb[0].mxu0
      %v3150 = vadd.f32 %v2880, %v3149
      %v3151 = vpop.f32.mrb[0].mxu0
      %3152 = vmatprep.mubr.f32.mxu0 0.0
      %3153 = vmatmul.mubr.f32.gmra.mrb[0].mxu0 %v2949
      %v3154 = vpop.f32.mrb[0].mxu0
      %v3155 = vadd.f32 %v2880, %v3154
      %v3156 = vpop.f32.mrb[0].mxu0
      %3157 = vmatprep.mubr.f32.mxu0 0.0
      %3158 = vmatmul.mubr.f32.gmra.mrb[0].mxu0 %v2952
      %v3159 = vpop.f32.mrb[0].mxu0
      %v3160 = vadd.f32 %v2880, %v3159
      %v3161 = vpop.f32.mrb[0].mxu0
      %3162 = vmatprep.mubr.f32.mxu0 0.0
      %3163 = vmatmul.mubr.f32.gmra.mrb[0].mxu0 %v2955
      %v3164 = vpop.f32.mrb[0].mxu0
      %v3165 = vadd.f32 %v2880, %v3164
      %v3166 = vpop.f32.mrb[0].mxu0
      %3167 = vmatprep.mubr.f32.mxu0 0.0
      %3168 = vmatmul.mubr.f32.gmra.mrb[0].mxu0 %v2958
      %v3169 = vpop.f32.mrb[0].mxu0
      %v3170 = vadd.f32 %v2880, %v3169
      %v3171 = vpop.f32.mrb[0].mxu0
      %3172 = vmatprep.mubr.f32.mxu0 0.0
      %3173 = vmatmul.mubr.f32.gmra.mrb[0].mxu0 %v2961
      %v3174 = vpop.f32.mrb[0].mxu0
      %v3175 = vadd.f32 %v2880, %v3174
      %v3176 = vpop.f32.mrb[0].mxu0
      %3177 = vmatprep.mubr.f32.mxu0 0.0
      %3178 = vmatmul.mubr.f32.gmra.mrb[0].mxu0 %v2964
      %v3179 = vpop.f32.mrb[0].mxu0
      %v3180 = vadd.f32 %v2880, %v3179
      %v3181 = vpop.f32.mrb[0].mxu0
      %3182 = vmatprep.mubr.f32.mxu0 0.0
      %3183 = vmatmul.mubr.f32.gmra.mrb[0].mxu0 %v2967
      %v3184 = vpop.f32.mrb[0].mxu0
      %v3185 = vadd.f32 %v2880, %v3184
      %v3186 = vpop.f32.mrb[0].mxu0
      %3187 = vmatprep.mubr.f32.mxu0 0.0
      %3188 = vmatmul.mubr.f32.gmra.mrb[0].mxu0 %v2970
      %v3189 = vpop.f32.mrb[0].mxu0
      %v3190 = vadd.f32 %v2880, %v3189
      %v3191 = vpop.f32.mrb[0].mxu0
      %3192 = vmatprep.mubr.f32.mxu0 0.0
      %3193 = vmatmul.mubr.f32.gmra.mrb[0].mxu0 %v2973
      %v3194 = vpop.f32.mrb[0].mxu0
      %v3195 = vadd.f32 %v2880, %v3194
      %v3196 = vpop.f32.mrb[0].mxu0
      %3197 = vmatprep.mubr.f32.mxu0 0.0
      %3198 = vmatmul.mubr.f32.gmra.mrb[0].mxu0 %v2976
      %v3199 = vpop.f32.mrb[0].mxu0
      %v3200 = vadd.f32 %v2880, %v3199
      %v3201 = vpop.f32.mrb[0].mxu0
      %3202 = vdwg.mxu0
      %v3203 = vadd.f32 %v3045, %v387
      %v3204 = vadd.f32 %v3050, %v388
      %v3205 = vadd.f32 %v3055, %v389
      %v3206 = vadd.f32 %v3060, %v390
      %v3207 = vadd.f32 %v3065, %v391
      %v3208 = vadd.f32 %v3070, %v392
      %v3209 = vadd.f32 %v3075, %v393
      %v3210 = vadd.f32 %v3080, %v394
      %v3211 = vadd.f32 %v3085, %v395
      %v3212 = vadd.f32 %v3090, %v396
      %v3213 = vadd.f32 %v3095, %v397
      %v3214 = vadd.f32 %v3100, %v398
      %v3215 = vadd.f32 %v3105, %v399
      %v3216 = vadd.f32 %v3110, %v400
      %v3217 = vadd.f32 %v3115, %v401
      %v3218 = vadd.f32 %v3120, %v402
      %v3219 = vadd.f32 %v3125, %v403
      %v3220 = vadd.f32 %v3130, %v404
      %v3221 = vadd.f32 %v3135, %v405
      %v3222 = vadd.f32 %v3140, %v406
      %v3223 = vadd.f32 %v3145, %v407
      %v3224 = vadd.f32 %v3150, %v408
      %v3225 = vadd.f32 %v3155, %v409
      %v3226 = vadd.f32 %v3160, %v410
      %v3227 = vadd.f32 %v3165, %v411
      %v3228 = vadd.f32 %v3170, %v412
      %v3229 = vadd.f32 %v3175, %v413
      %v3230 = vadd.f32 %v3180, %v414
      %v3231 = vadd.f32 %v3185, %v415
      %v3232 = vadd.f32 %v3190, %v416
      %v3233 = vadd.f32 %v3195, %v417
      %v3234 = vadd.f32 %v3200, %v418
      %vm3235 = vcmask 31744
      %3236 = vst.msk [vmem:[%s386] sm:$0xff] %vm3235, %v3203
      %3237 = vst.msk [vmem:[%s386 + $0x8] sm:$0xff] %vm3235, %v3204
      %3238 = vst.msk [vmem:[%s386 + $0x10] sm:$0xff] %vm3235, %v3205
      %3239 = vst.msk [vmem:[%s386 + $0x18] sm:$0xff] %vm3235, %v3206
      %3240 = vst.msk [vmem:[%s386 + $0x20] sm:$0xff] %vm3235, %v3207
      %3241 = vst.msk [vmem:[%s386 + $0x28] sm:$0xff] %vm3235, %v3208
      %3242 = vst.msk [vmem:[%s386 + $0x30] sm:$0xff] %vm3235, %v3209
      %3243 = vst.msk [vmem:[%s386 + $0x38] sm:$0xff] %vm3235, %v3210
      %3244 = vst.msk [vmem:[%s386 + $0x40] sm:$0xff] %vm3235, %v3211
      %3245 = vst.msk [vmem:[%s386 + $0x48] sm:$0xff] %vm3235, %v3212
      %3246 = vst.msk [vmem:[%s386 + $0x50] sm:$0xff] %vm3235, %v3213
      %3247 = vst.msk [vmem:[%s386 + $0x58] sm:$0xff] %vm3235, %v3214
      %3248 = vst.msk [vmem:[%s386 + $0x60] sm:$0xff] %vm3235, %v3215
      %3249 = vst.msk [vmem:[%s386 + $0x68] sm:$0xff] %vm3235, %v3216
      %3250 = vst.msk [vmem:[%s386 + $0x70] sm:$0xff] %vm3235, %v3217
      %3251 = vst.msk [vmem:[%s386 + $0x78] sm:$0xff] %vm3235, %v3218
      %3252 = vst.msk [vmem:[%s386 + $0x80] sm:$0xff] %vm3235, %v3219
      %3253 = vst.msk [vmem:[%s386 + $0x88] sm:$0xff] %vm3235, %v3220
      %3254 = vst.msk [vmem:[%s386 + $0x90] sm:$0xff] %vm3235, %v3221
      %3255 = vst.msk [vmem:[%s386 + $0x98] sm:$0xff] %vm3235, %v3222
      %3256 = vst.msk [vmem:[%s386 + $0xa0] sm:$0xff] %vm3235, %v3223
      %3257 = vst.msk [vmem:[%s386 + $0xa8] sm:$0xff] %vm3235, %v3224
      %3258 = vst.msk [vmem:[%s386 + $0xb0] sm:$0xff] %vm3235, %v3225
      %3259 = vst.msk [vmem:[%s386 + $0xb8] sm:$0xff] %vm3235, %v3226
      %3260 = vst.msk [vmem:[%s386 + $0xc0] sm:$0xff] %vm3235, %v3227
      %3261 = vst.msk [vmem:[%s386 + $0xc8] sm:$0xff] %vm3235, %v3228
      %3262 = vst.msk [vmem:[%s386 + $0xd0] sm:$0xff] %vm3235, %v3229
      %3263 = vst.msk [vmem:[%s386 + $0xd8] sm:$0xff] %vm3235, %v3230
      %3264 = vst.msk [vmem:[%s386 + $0xe0] sm:$0xff] %vm3235, %v3231
      %3265 = vst.msk [vmem:[%s386 + $0xe8] sm:$0xff] %vm3235, %v3232
      %3266 = vst.msk [vmem:[%s386 + $0xf0] sm:$0xff] %vm3235, %v3233
      %3267 = vst.msk [vmem:[%s386 + $0xf8] sm:$0xff] %vm3235, %v3234
      %p3268 = scmp.lt.s32.totalorder %s22, 1
      %s3269 = scalar_select %p3268, %s22, 1
      %s3270 = smul.addr %s3269, 32
      %s3271 = smul.addr %s3270, 8
      %s3272 = scalar_lea.vmem %s11, %s3271
      // Predicated region
      $region65: #{inverted_residual_forward.1} parent=63 // pred_check
        %p3273 = pneg %p276
      $region66: #{inverted_residual_forward.1} parent=63 // pred_check_branch
        %3275 = sbr.rel (%p3273) target = $region68
      $region67: #{inverted_residual_forward.1} parent=63 // pred_region
        _
      $region68: #{inverted_residual_forward.1} parent=63 // pred_fallthru
        _
    $region64: #{inverted_residual_forward.1} parent=5 // pred_fallthru
      _
    %p3276 = scmp.le.s32.totalorder 2, %s17
    // Predicated region
    $region69: #{inverted_residual_forward.1} parent=5 // pred_check
      %p3277 = pneg %p3276
    $region70: #{inverted_residual_forward.1} parent=5 // pred_check_branch
      %3279 = sbr.rel (%p3277) target = $region72
    $region71: #{inverted_residual_forward.1} parent=5 // pred_region
      %s3280 = ssub.s32 %s17, 2
      // Predicated region
      $region73: #{inverted_residual_forward.1} parent=71 // pred_check
        %p3281 = pneg %p282
      $region74: #{inverted_residual_forward.1} parent=71 // pred_check_branch
        %3283 = sbr.rel (%p3281) target = $region76
      $region75: #{inverted_residual_forward.1} parent=71 // pred_region
        %p3284 = scmp.lt.s32.totalorder %s23, 1
        %s3285 = scalar_select %p3284, %s23, 1
        %s3286 = smul.addr %s3285, 32
        %s3287 = smul.addr %s3286, 8
        %s3288 = scalar_lea.vmem %s11, %s3287
      $region76: #{inverted_residual_forward.1} parent=71 // pred_fallthru
        _
    $region72: #{inverted_residual_forward.1} parent=5 // pred_fallthru
      _
  $region6: #{inverted_residual_forward.1} parent=0 // loop_footer
    %s21 = sadd.s32 1, %s17
  $region7: #{inverted_residual_forward.1} parent=0 // loop_footer_branch
    %16 = sbr.rel target = $region3
  $region8: #{inverted_residual_forward.1} parent=0 // loop_exit
    _

</llo_original>
